<compile_context>
chip_gen: v6e
topology: v6e:2x2x1
jax: 0.10.0
libtpu: 0.0.40
codegen_flags: <defaults>
</compile_context>

<pallas_src>
import jax
import jax.numpy as jnp
from jax.experimental import pallas as pl
from jax.experimental.pallas import tpu as pltpu


def make_kernel(Bt, D, H, W, C):
    DH, WC = D * H, W * C
    M = Bt * DH
    inv_n = 1.0 / float(D * H * W)

    def kernel(x_ref, w1_ref, b1_ref, w2_ref, b2_ref,
               f1_ref, f2_ref, sc_ref, cp_ref, o_ref):
        # x block: (Bt, DH, WC) lane-dense -> flatten to one (M, WC) slab so every
        # matmul sees M = Bt*DH rows (M=128 at Bt=4) instead of 32.
        x = x_ref[...].astype(jnp.float32).reshape(M, WC)

        # Exact 0/1 operators stored bf16 (half the DMA); cast back is bit exact.
        shift = sc_ref[...].astype(jnp.float32)   # (M, 2M)  [S_{h-1} | S_{h+1}]
        cp = cp_ref[...].astype(jnp.float32)      # (WC, WC) per-channel pool + broadcast

        def conv3x3(z, wl_ref, b_ref):
            # Conv3d kernel (1,3,3), pad (0,1,1), as two MXU matmuls (lane-fused taps
            # + combined H-shift/sum); zero rows of `shift` encode the H zero padding
            # and the depth-slice / batch boundaries.
            y = jnp.dot(z, wl_ref[...], preferred_element_type=jnp.float32)    # (M, 3*WC)
            yst = jnp.concatenate([y[:, :WC], y[:, 2 * WC:]], axis=0)          # (2M, WC)
            return (jnp.dot(shift, yst, preferred_element_type=jnp.float32)
                    + y[:, WC:2 * WC] + b_ref[...])

        def inorm(z):
            # InstanceNorm3d (affine=False, biased var, eps=1e-5), single pass:
            # the two sublane reductions and the two cp matmuls are independent.
            z3 = z.reshape(Bt, DH, WC)
            s1 = jnp.sum(z3, axis=1)                                           # (Bt, WC)
            s2 = jnp.sum(z3 * z3, axis=1)
            mu = jnp.dot(s1, cp, preferred_element_type=jnp.float32) * inv_n
            ex2 = jnp.dot(s2, cp, preferred_element_type=jnp.float32) * inv_n
            inv = jax.lax.rsqrt(ex2 - mu * mu + 1e-5)
            return ((z3 - mu[:, None, :]) * inv[:, None, :]).reshape(M, WC)

        out = jnp.maximum(inorm(conv3x3(x, w1_ref, b1_ref)), 0.0)   # conv1 -> in1 -> relu
        out = inorm(conv3x3(out, w2_ref, b2_ref))                   # conv2 -> in2

        # ---- SELayerS (requires D == 2; asserted in wrapper) ----
        # Per-depth-half (H,W) average pool + fused FC1/FC2 + sigmoid; lane-dense gates.
        o3 = out.reshape(Bt, DH, WC)
        r0 = jnp.sum(o3[:, :H, :], axis=1)                          # (Bt, WC) depth half 0
        r1 = jnp.sum(o3[:, H:, :], axis=1)                          # (Bt, WC) depth half 1
        r = jnp.concatenate([r0, r1], axis=1)                       # (Bt, 2*WC)
        hid = jnp.maximum(
            jnp.dot(r, f1_ref[...], preferred_element_type=jnp.float32), 0.0)
        g = jax.nn.sigmoid(
            jnp.dot(hid, f2_ref[...], preferred_element_type=jnp.float32))     # (Bt, 2*WC)
        dh_row = jax.lax.broadcasted_iota(jnp.int32, (1, DH, 1), 1)
        o3 = o3 * jnp.where(dh_row < H, g[:, None, :WC], g[:, None, WC:])

        out = inorm(o3.reshape(M, WC))                              # in3
        out = jnp.maximum(out + x, 0.0)         # identity residual (downsample=None), relu
        o_ref[...] = out.reshape(Bt, DH, WC).astype(o_ref.dtype)    # 256-lane unmasked store

    return kernel


def _pick_bt(B, DH, target_m=128):
    """Largest per-step batch count with Bt*DH <= target_m rows while (when possible)
    keeping >= 2 grid steps so both v7x TensorCores get work."""
    best = 1
    for bt in range(1, B + 1):
        if B % bt:
            continue
        if bt * DH > target_m:
            continue
        if B >= 2 and B // bt < 2:
            continue
        best = bt
    return best


def se_basic_block_lane_dense(x_ld, params, *, depth=2, bt=None):
    """SEBasicBlock forward on lane-dense activations (B, D*H, W*C), channel fastest.
    Callers that already keep a channel-last layout should use this entry point and
    skip the NCDHW transposes in `se_basic_block`."""
    conv1_w, conv1_b, conv2_w, conv2_b, fc1_w, fc2_w = params
    B, DH, WC = x_ld.shape
    C = conv1_w.shape[0]
    D = depth
    H, W = DH // D, WC // C
    HID = fc1_w.shape[0]
    assert D == 2, "SELayerS.expand_as requires depth == 2"
    assert D * H == DH and W * C == WC
    f32 = jnp.float32

    if bt is None:
        bt = _pick_bt(B, DH)
    assert B % bt == 0
    M = bt * DH

    def band_lanes(conv_w):
        # (Cout, Cin, 1, 3, 3) -> (WC, 3*WC): one banded (WC, WC) block per kh tap
        # (W taps + channel mixing), concatenated along lanes -> single matmul operand.
        taps = []
        for kh in range(3):
            wb = sum(jnp.kron(jnp.eye(W, W, 1 - kw, dtype=f32),
                              jnp.transpose(conv_w[:, :, 0, kh, kw]).astype(f32))
                     for kw in range(3))
            taps.append(wb)
        return jnp.concatenate(taps, axis=1)

    def hshift(kh):
        # (DH, DH): output row (d, h) reads input row (d, h + kh - 1); rows that would
        # cross the H boundary are all-zero == the conv's zero padding.
        return jnp.kron(jnp.eye(D, dtype=f32), jnp.eye(H, H, kh - 1, dtype=f32))

    # Conv weights: kept f32 (bf16 would halve their fetched-once DMA but risks the
    # 1e-3 check against the f32 reference).
    w1, w2 = band_lanes(conv1_w), band_lanes(conv2_w)
    b1 = jnp.tile(conv1_b.astype(f32), W).reshape(1, WC)
    b2 = jnp.tile(conv2_b.astype(f32), W).reshape(1, WC)

    # Combined H-shift operator [S_{h-1} | S_{h+1}], bt-block-diagonal; exact 0/1 -> bf16.
    scomb = jnp.concatenate(
        [jnp.kron(jnp.eye(bt, dtype=f32), hshift(0)),
         jnp.kron(jnp.eye(bt, dtype=f32), hshift(2))], axis=1).astype(jnp.bfloat16)

    # SELayerS weights: fc1 columns / fc2 rows are indexed by (c*2 + depth_half);
    # the 1/(H*W) pooling scale is folded into fc1; both FCs fused into one operand each.
    f1 = jnp.concatenate(
        [jnp.tile(jnp.transpose(fc1_w[:, 0::2]).astype(f32), (W, 1)),
         jnp.tile(jnp.transpose(fc1_w[:, 1::2]).astype(f32), (W, 1))], axis=0) / (H * W)
    f2 = jnp.concatenate(
        [jnp.tile(jnp.transpose(fc2_w[0::2, :]).astype(f32), (1, W)),
         jnp.tile(jnp.transpose(fc2_w[1::2, :]).astype(f32), (1, W))], axis=1)

    # Per-channel reduce-over-W + broadcast-back operator for InstanceNorm (the 1/N
    # scale is applied as a scalar in-kernel so this stays an exact 0/1 bf16 matrix).
    cp = jnp.kron(jnp.ones((W, W), f32), jnp.eye(C, dtype=f32)).astype(jnp.bfloat16)

    kernel = make_kernel(bt, D, H, W, C)
    const2 = lambda b: (0, 0)
    return pl.pallas_call(
        kernel,
        out_shape=jax.ShapeDtypeStruct((B, DH, WC), x_ld.dtype),
        grid_spec=pltpu.PrefetchScalarGridSpec(
            num_scalar_prefetch=0,
            grid=(B // bt,),            # >= 2 steps keeps both v7x TCs busy
            in_specs=[
                pl.BlockSpec((bt, DH, WC), lambda b: (b, 0, 0)),
                pl.BlockSpec((WC, 3 * WC), const2),
                pl.BlockSpec((1, WC), const2),
                pl.BlockSpec((WC, 3 * WC), const2),
                pl.BlockSpec((1, WC), const2),
                pl.BlockSpec((2 * WC, HID), const2),
                pl.BlockSpec((HID, 2 * WC), const2),
                pl.BlockSpec((M, 2 * M), const2),
                pl.BlockSpec((WC, WC), const2),
            ],
            out_specs=pl.BlockSpec((bt, DH, WC), lambda b: (b, 0, 0)),
        ),
        compiler_params=pltpu.CompilerParams(
            dimension_semantics=("parallel",),
            # ~4 MiB footprint today; explicit limit so future fusion of the remaining
            # MemCrompress stages fails loudly against v7x's 64 MiB instead of silently.
            vmem_limit_bytes=32 * 1024 * 1024),
    )(x_ld, w1, b1, w2, b2, f1, f2, scomb, cp)


@jax.jit
def se_basic_block(x_ncdhw, params):
    """SEBasicBlock forward. x_ncdhw: (B, C, D, H, W) float32; params PyTorch-shaped."""
    B, C, D, H, W = x_ncdhw.shape
    # NCDHW -> NDHWC -> lane-dense (B, D*H, W*C).  Channel-last callers should use
    # se_basic_block_lane_dense directly and skip this transpose pair (it is an extra
    # HBM round trip either side of a few-microsecond kernel).
    x_ld = jnp.transpose(x_ncdhw, (0, 2, 3, 4, 1)).reshape(B, D * H, W * C)
    out_ld = se_basic_block_lane_dense(x_ld, params, depth=D)
    return jnp.transpose(out_ld.reshape(B, D, H, W, C), (0, 4, 1, 2, 3))


def reference(x, params):
    """Pure-JAX reference mirroring the PyTorch forward (NCDHW)."""
    conv1_w, conv1_b, conv2_w, conv2_b, fc1_w, fc2_w = params

    def conv(z, w, b):
        y = jax.lax.conv_general_dilated(
            z, w, window_strides=(1, 1, 1),
            padding=((0, 0), (1, 1), (1, 1)),
            dimension_numbers=('NCDHW', 'OIDHW', 'NCDHW'))
        return y + b[None, :, None, None, None]

    def inorm(z):
        mu = z.mean(axis=(2, 3, 4), keepdims=True)
        var = ((z - mu) ** 2).mean(axis=(2, 3, 4), keepdims=True)
        return (z - mu) / jnp.sqrt(var + 1e-5)

    out = jnp.maximum(inorm(conv(x, conv1_w, conv1_b)), 0.0)
    out = inorm(conv(out, conv2_w, conv2_b))
    B, C, D, H, W = out.shape
    p = out.mean(axis=(3, 4))                              # (B, C, 2)  (D == 2)
    v = p.reshape(B, 2 * C)                                # index = c*2 + d
    h = jnp.maximum(v @ fc1_w.T, 0.0)
    g = jax.nn.sigmoid(h @ fc2_w.T).reshape(B, C, 2, 1, 1)
    out = out * g
    out = inorm(out)
    return jnp.maximum(out + x, 0.0)


if __name__ == "__main__":
    # inplanes == planes == 16, depth must be 2; B=8 -> Bt=4 (M=128), grid=(2,).
    B, C, D, H, W = 8, 16, 2, 16, 16
    reduction = 8
    HID = (2 * C) // reduction

    key = jax.random.PRNGKey(0)
    ks = jax.random.split(key, 7)
    conv1_w = 0.1 * jax.random.normal(ks[0], (C, C, 1, 3, 3), jnp.float32)
    conv1_b = 0.1 * jax.random.normal(ks[1], (C,), jnp.float32)
    conv2_w = 0.1 * jax.random.normal(ks[2], (C, C, 1, 3, 3), jnp.float32)
    conv2_b = 0.1 * jax.random.normal(ks[3], (C,), jnp.float32)
    fc1_w = 0.1 * jax.random.normal(ks[4], (HID, 2 * C), jnp.float32)
    fc2_w = 0.1 * jax.random.normal(ks[5], (2 * C, HID), jnp.float32)
    params = (conv1_w, conv1_b, conv2_w, conv2_b, fc1_w, fc2_w)

    x = jax.random.normal(ks[6], (B, C, D, H, W), jnp.float32)

    out = jax.block_until_ready(se_basic_block(x, params))
    ref = jax.block_until_ready(reference(x, params))

    assert out.shape == (B, C, D, H, W)
    assert jnp.allclose(out, ref, rtol=1e-3, atol=1e-3), (
        float(jnp.max(jnp.abs(out - ref))))
    print("KERNEL_OK")
</pallas_src>

<mosaic_0001>
module attributes {stable_mosaic.version = 11 : i64} {
  func.func @kernel(%arg0: i32, %arg1: memref<4x32x256xf32, #tpu.memory_space<vmem>>, %arg2: memref<256x768xf32, #tpu.memory_space<vmem>>, %arg3: memref<1x256xf32, #tpu.memory_space<vmem>>, %arg4: memref<256x768xf32, #tpu.memory_space<vmem>>, %arg5: memref<1x256xf32, #tpu.memory_space<vmem>>, %arg6: memref<512x4xf32, #tpu.memory_space<vmem>>, %arg7: memref<4x512xf32, #tpu.memory_space<vmem>>, %arg8: memref<128x256xbf16, #tpu.memory_space<vmem>>, %arg9: memref<256x256xbf16, #tpu.memory_space<vmem>>, %arg10: memref<4x32x256xf32, #tpu.memory_space<vmem>>) attributes {dimension_semantics = [#tpu.dimension_semantics<parallel>], iteration_bounds = array<i64: 2>, scalar_prefetch = 0 : i64, scratch_operands = 0 : i64, tpu.core_type = #tpu.core_type<tc>, window_params = [{transform_indices = @transform_0, window_bounds = array<i64: 4, 32, 256>}, {pipeline_mode = #tpu.pipeline_mode<synchronous>, transform_indices = @transform_1, window_bounds = array<i64: 256, 768>}, {pipeline_mode = #tpu.pipeline_mode<synchronous>, transform_indices = @transform_2, window_bounds = array<i64: 1, 256>}, {pipeline_mode = #tpu.pipeline_mode<synchronous>, transform_indices = @transform_3, window_bounds = array<i64: 256, 768>}, {pipeline_mode = #tpu.pipeline_mode<synchronous>, transform_indices = @transform_4, window_bounds = array<i64: 1, 256>}, {pipeline_mode = #tpu.pipeline_mode<synchronous>, transform_indices = @transform_5, window_bounds = array<i64: 512, 4>}, {pipeline_mode = #tpu.pipeline_mode<synchronous>, transform_indices = @transform_6, window_bounds = array<i64: 4, 512>}, {pipeline_mode = #tpu.pipeline_mode<synchronous>, transform_indices = @transform_7, window_bounds = array<i64: 128, 256>}, {pipeline_mode = #tpu.pipeline_mode<synchronous>, transform_indices = @transform_8, window_bounds = array<i64: 256, 256>}, {transform_indices = @transform_9, window_bounds = array<i64: 4, 32, 256>}]} {
    %c0 = arith.constant 0 : index
    %c0_0 = arith.constant 0 : index
    %c0_1 = arith.constant 0 : index
    %0 = vector.load %arg1[%c0, %c0_0, %c0_1] : memref<4x32x256xf32, #tpu.memory_space<vmem>>, vector<4x32x256xf32>
    %1 = vector.shape_cast %0 : vector<4x32x256xf32> to vector<128x256xf32>
    %c0_2 = arith.constant 0 : index
    %c0_3 = arith.constant 0 : index
    %2 = vector.load %arg8[%c0_2, %c0_3] : memref<128x256xbf16, #tpu.memory_space<vmem>>, vector<128x256xbf16>
    %3 = arith.extf %2 : vector<128x256xbf16> to vector<128x256xf32>
    %c0_4 = arith.constant 0 : index
    %c0_5 = arith.constant 0 : index
    %4 = vector.load %arg9[%c0_4, %c0_5] : memref<256x256xbf16, #tpu.memory_space<vmem>>, vector<256x256xbf16>
    %5 = arith.extf %4 : vector<256x256xbf16> to vector<256x256xf32>
    %c0_6 = arith.constant 0 : index
    %c0_7 = arith.constant 0 : index
    %6 = vector.load %arg2[%c0_6, %c0_7] : memref<256x768xf32, #tpu.memory_space<vmem>>, vector<256x768xf32>
    %cst = arith.constant dense<0.000000e+00> : vector<128x768xf32>
    %7 = tpu.matmul %1, %6, %cst {dimension_numbers = #tpu.dot_dimension_numbers<[1], [0], [0], [1], [0, 0, 1, 1], [], []>} : vector<128x256xf32>, vector<256x768xf32>, vector<128x768xf32> -> vector<128x768xf32>
    %8 = vector.extract_strided_slice %7 {offsets = [0, 0], sizes = [128, 256], strides = [1, 1]} : vector<128x768xf32> to vector<128x256xf32>
    %9 = vector.extract_strided_slice %7 {offsets = [0, 512], sizes = [128, 256], strides = [1, 1]} : vector<128x768xf32> to vector<128x256xf32>
    %10 = tpu.concatenate %8, %9 in 0 : vector<128x256xf32>, vector<128x256xf32> -> vector<256x256xf32>
    %cst_8 = arith.constant dense<0.000000e+00> : vector<128x256xf32>
    %11 = tpu.matmul %3, %10, %cst_8 {dimension_numbers = #tpu.dot_dimension_numbers<[1], [0], [0], [1], [0, 0, 1, 1], [], []>} : vector<128x256xf32>, vector<256x256xf32>, vector<128x256xf32> -> vector<128x256xf32>
    %12 = vector.extract_strided_slice %7 {offsets = [0, 256], sizes = [128, 256], strides = [1, 1]} : vector<128x768xf32> to vector<128x256xf32>
    %13 = arith.addf %11, %12 : vector<128x256xf32>
    %c0_9 = arith.constant 0 : index
    %c0_10 = arith.constant 0 : index
    %14 = vector.load %arg3[%c0_9, %c0_10] : memref<1x256xf32, #tpu.memory_space<vmem>>, vector<1x256xf32>
    %15 = vector.broadcast %14 : vector<1x256xf32> to vector<128x256xf32>
    %16 = arith.addf %13, %15 : vector<128x256xf32>
    %17 = vector.shape_cast %16 : vector<128x256xf32> to vector<4x32x256xf32>
    %cst_11 = arith.constant dense<0.000000e+00> : vector<4x256xf32>
    %18 = vector.multi_reduction <add>, %17, %cst_11 [1] : vector<4x32x256xf32> to vector<4x256xf32>
    %19 = arith.mulf %17, %17 : vector<4x32x256xf32>
    %cst_12 = arith.constant dense<0.000000e+00> : vector<4x256xf32>
    %20 = vector.multi_reduction <add>, %19, %cst_12 [1] : vector<4x32x256xf32> to vector<4x256xf32>
    %cst_13 = arith.constant dense<0.000000e+00> : vector<4x256xf32>
    %21 = tpu.matmul %18, %5, %cst_13 {dimension_numbers = #tpu.dot_dimension_numbers<[1], [0], [0], [1], [0, 0, 1, 1], [], []>} : vector<4x256xf32>, vector<256x256xf32>, vector<4x256xf32> -> vector<4x256xf32>
    %cst_14 = arith.constant 0.001953125 : f32
    %22 = vector.broadcast %cst_14 : f32 to vector<4x256xf32>
    %23 = arith.mulf %21, %22 : vector<4x256xf32>
    %cst_15 = arith.constant dense<0.000000e+00> : vector<4x256xf32>
    %24 = tpu.matmul %20, %5, %cst_15 {dimension_numbers = #tpu.dot_dimension_numbers<[1], [0], [0], [1], [0, 0, 1, 1], [], []>} : vector<4x256xf32>, vector<256x256xf32>, vector<4x256xf32> -> vector<4x256xf32>
    %cst_16 = arith.constant 0.001953125 : f32
    %25 = vector.broadcast %cst_16 : f32 to vector<4x256xf32>
    %26 = arith.mulf %24, %25 : vector<4x256xf32>
    %27 = arith.mulf %23, %23 : vector<4x256xf32>
    %28 = arith.subf %26, %27 : vector<4x256xf32>
    %cst_17 = arith.constant 9.99999974E-6 : f32
    %29 = vector.broadcast %cst_17 : f32 to vector<4x256xf32>
    %30 = arith.addf %28, %29 : vector<4x256xf32>
    %31 = math.rsqrt %30 : vector<4x256xf32>
    %32 = vector.shape_cast %23 : vector<4x256xf32> to vector<4x1x256xf32>
    %33 = vector.broadcast %32 : vector<4x1x256xf32> to vector<4x32x256xf32>
    %34 = arith.subf %17, %33 : vector<4x32x256xf32>
    %35 = vector.shape_cast %31 : vector<4x256xf32> to vector<4x1x256xf32>
    %36 = vector.broadcast %35 : vector<4x1x256xf32> to vector<4x32x256xf32>
    %37 = arith.mulf %34, %36 : vector<4x32x256xf32>
    %38 = vector.shape_cast %37 : vector<4x32x256xf32> to vector<128x256xf32>
    %cst_18 = arith.constant 0.000000e+00 : f32
    %39 = vector.broadcast %cst_18 : f32 to vector<128x256xf32>
    %40 = arith.maximumf %38, %39 : vector<128x256xf32>
    %c0_19 = arith.constant 0 : index
    %c0_20 = arith.constant 0 : index
    %41 = vector.load %arg4[%c0_19, %c0_20] : memref<256x768xf32, #tpu.memory_space<vmem>>, vector<256x768xf32>
    %cst_21 = arith.constant dense<0.000000e+00> : vector<128x768xf32>
    %42 = tpu.matmul %40, %41, %cst_21 {dimension_numbers = #tpu.dot_dimension_numbers<[1], [0], [0], [1], [0, 0, 1, 1], [], []>} : vector<128x256xf32>, vector<256x768xf32>, vector<128x768xf32> -> vector<128x768xf32>
    %43 = vector.extract_strided_slice %42 {offsets = [0, 0], sizes = [128, 256], strides = [1, 1]} : vector<128x768xf32> to vector<128x256xf32>
    %44 = vector.extract_strided_slice %42 {offsets = [0, 512], sizes = [128, 256], strides = [1, 1]} : vector<128x768xf32> to vector<128x256xf32>
    %45 = tpu.concatenate %43, %44 in 0 : vector<128x256xf32>, vector<128x256xf32> -> vector<256x256xf32>
    %cst_22 = arith.constant dense<0.000000e+00> : vector<128x256xf32>
    %46 = tpu.matmul %3, %45, %cst_22 {dimension_numbers = #tpu.dot_dimension_numbers<[1], [0], [0], [1], [0, 0, 1, 1], [], []>} : vector<128x256xf32>, vector<256x256xf32>, vector<128x256xf32> -> vector<128x256xf32>
    %47 = vector.extract_strided_slice %42 {offsets = [0, 256], sizes = [128, 256], strides = [1, 1]} : vector<128x768xf32> to vector<128x256xf32>
    %48 = arith.addf %46, %47 : vector<128x256xf32>
    %c0_23 = arith.constant 0 : index
    %c0_24 = arith.constant 0 : index
    %49 = vector.load %arg5[%c0_23, %c0_24] : memref<1x256xf32, #tpu.memory_space<vmem>>, vector<1x256xf32>
    %50 = vector.broadcast %49 : vector<1x256xf32> to vector<128x256xf32>
    %51 = arith.addf %48, %50 : vector<128x256xf32>
    %52 = vector.shape_cast %51 : vector<128x256xf32> to vector<4x32x256xf32>
    %cst_25 = arith.constant dense<0.000000e+00> : vector<4x256xf32>
    %53 = vector.multi_reduction <add>, %52, %cst_25 [1] : vector<4x32x256xf32> to vector<4x256xf32>
    %54 = arith.mulf %52, %52 : vector<4x32x256xf32>
    %cst_26 = arith.constant dense<0.000000e+00> : vector<4x256xf32>
    %55 = vector.multi_reduction <add>, %54, %cst_26 [1] : vector<4x32x256xf32> to vector<4x256xf32>
    %cst_27 = arith.constant dense<0.000000e+00> : vector<4x256xf32>
    %56 = tpu.matmul %53, %5, %cst_27 {dimension_numbers = #tpu.dot_dimension_numbers<[1], [0], [0], [1], [0, 0, 1, 1], [], []>} : vector<4x256xf32>, vector<256x256xf32>, vector<4x256xf32> -> vector<4x256xf32>
    %cst_28 = arith.constant 0.001953125 : f32
    %57 = vector.broadcast %cst_28 : f32 to vector<4x256xf32>
    %58 = arith.mulf %56, %57 : vector<4x256xf32>
    %cst_29 = arith.constant dense<0.000000e+00> : vector<4x256xf32>
    %59 = tpu.matmul %55, %5, %cst_29 {dimension_numbers = #tpu.dot_dimension_numbers<[1], [0], [0], [1], [0, 0, 1, 1], [], []>} : vector<4x256xf32>, vector<256x256xf32>, vector<4x256xf32> -> vector<4x256xf32>
    %cst_30 = arith.constant 0.001953125 : f32
    %60 = vector.broadcast %cst_30 : f32 to vector<4x256xf32>
    %61 = arith.mulf %59, %60 : vector<4x256xf32>
    %62 = arith.mulf %58, %58 : vector<4x256xf32>
    %63 = arith.subf %61, %62 : vector<4x256xf32>
    %cst_31 = arith.constant 9.99999974E-6 : f32
    %64 = vector.broadcast %cst_31 : f32 to vector<4x256xf32>
    %65 = arith.addf %63, %64 : vector<4x256xf32>
    %66 = math.rsqrt %65 : vector<4x256xf32>
    %67 = vector.shape_cast %58 : vector<4x256xf32> to vector<4x1x256xf32>
    %68 = vector.broadcast %67 : vector<4x1x256xf32> to vector<4x32x256xf32>
    %69 = arith.subf %52, %68 : vector<4x32x256xf32>
    %70 = vector.shape_cast %66 : vector<4x256xf32> to vector<4x1x256xf32>
    %71 = vector.broadcast %70 : vector<4x1x256xf32> to vector<4x32x256xf32>
    %72 = arith.mulf %69, %71 : vector<4x32x256xf32>
    %73 = vector.shape_cast %72 : vector<4x32x256xf32> to vector<128x256xf32>
    %74 = vector.shape_cast %73 : vector<128x256xf32> to vector<4x32x256xf32>
    %75 = vector.extract_strided_slice %74 {offsets = [0, 0, 0], sizes = [4, 16, 256], strides = [1, 1, 1]} : vector<4x32x256xf32> to vector<4x16x256xf32>
    %cst_32 = arith.constant dense<0.000000e+00> : vector<4x256xf32>
    %76 = vector.multi_reduction <add>, %75, %cst_32 [1] : vector<4x16x256xf32> to vector<4x256xf32>
    %77 = vector.extract_strided_slice %74 {offsets = [0, 16, 0], sizes = [4, 16, 256], strides = [1, 1, 1]} : vector<4x32x256xf32> to vector<4x16x256xf32>
    %cst_33 = arith.constant dense<0.000000e+00> : vector<4x256xf32>
    %78 = vector.multi_reduction <add>, %77, %cst_33 [1] : vector<4x16x256xf32> to vector<4x256xf32>
    %79 = tpu.concatenate %76, %78 in 1 : vector<4x256xf32>, vector<4x256xf32> -> vector<4x512xf32>
    %c0_34 = arith.constant 0 : index
    %c0_35 = arith.constant 0 : index
    %80 = vector.load %arg6[%c0_34, %c0_35] : memref<512x4xf32, #tpu.memory_space<vmem>>, vector<512x4xf32>
    %cst_36 = arith.constant dense<0.000000e+00> : vector<4x4xf32>
    %81 = tpu.matmul %79, %80, %cst_36 {dimension_numbers = #tpu.dot_dimension_numbers<[1], [0], [0], [1], [0, 0, 1, 1], [], []>} : vector<4x512xf32>, vector<512x4xf32>, vector<4x4xf32> -> vector<4x4xf32>
    %cst_37 = arith.constant 0.000000e+00 : f32
    %82 = vector.broadcast %cst_37 : f32 to vector<4x4xf32>
    %83 = arith.maximumf %81, %82 : vector<4x4xf32>
    %c0_38 = arith.constant 0 : index
    %c0_39 = arith.constant 0 : index
    %84 = vector.load %arg7[%c0_38, %c0_39] : memref<4x512xf32, #tpu.memory_space<vmem>>, vector<4x512xf32>
    %cst_40 = arith.constant dense<0.000000e+00> : vector<4x512xf32>
    %85 = tpu.matmul %83, %84, %cst_40 {dimension_numbers = #tpu.dot_dimension_numbers<[1], [0], [0], [1], [0, 0, 1, 1], [], []>} : vector<4x4xf32>, vector<4x512xf32>, vector<4x512xf32> -> vector<4x512xf32>
    %86 = arith.negf %85 : vector<4x512xf32>
    %87 = math.exp %86 : vector<4x512xf32>
    %cst_41 = arith.constant 1.000000e+00 : f32
    %88 = vector.broadcast %cst_41 : f32 to vector<4x512xf32>
    %89 = arith.addf %88, %87 : vector<4x512xf32>
    %90 = arith.divf %88, %89 : vector<4x512xf32>
    %91 = tpu.iota {dimensions = array<i32: 1>} : vector<1x32x1xi32>
    %c16_i32 = arith.constant 16 : i32
    %92 = vector.broadcast %c16_i32 : i32 to vector<1x32x1xi32>
    %93 = arith.cmpi slt, %91, %92 : vector<1x32x1xi32>
    %94 = vector.extract_strided_slice %90 {offsets = [0, 0], sizes = [4, 256], strides = [1, 1]} : vector<4x512xf32> to vector<4x256xf32>
    %95 = vector.shape_cast %94 : vector<4x256xf32> to vector<4x1x256xf32>
    %96 = vector.extract_strided_slice %90 {offsets = [0, 256], sizes = [4, 256], strides = [1, 1]} : vector<4x512xf32> to vector<4x256xf32>
    %97 = vector.shape_cast %96 : vector<4x256xf32> to vector<4x1x256xf32>
    %98 = vector.shape_cast %93 : vector<1x32x1xi1> to vector<1x32x1xi1>
    %99 = vector.broadcast %98 : vector<1x32x1xi1> to vector<4x32x256xi1>
    %100 = vector.shape_cast %95 : vector<4x1x256xf32> to vector<4x1x256xf32>
    %101 = vector.broadcast %100 : vector<4x1x256xf32> to vector<4x32x256xf32>
    %102 = vector.shape_cast %97 : vector<4x1x256xf32> to vector<4x1x256xf32>
    %103 = vector.broadcast %102 : vector<4x1x256xf32> to vector<4x32x256xf32>
    %104 = arith.select %99, %101, %103 : vector<4x32x256xi1>, vector<4x32x256xf32>
    %105 = arith.mulf %74, %104 : vector<4x32x256xf32>
    %106 = vector.shape_cast %105 : vector<4x32x256xf32> to vector<128x256xf32>
    %107 = vector.shape_cast %106 : vector<128x256xf32> to vector<4x32x256xf32>
    %cst_42 = arith.constant dense<0.000000e+00> : vector<4x256xf32>
    %108 = vector.multi_reduction <add>, %107, %cst_42 [1] : vector<4x32x256xf32> to vector<4x256xf32>
    %109 = arith.mulf %107, %107 : vector<4x32x256xf32>
    %cst_43 = arith.constant dense<0.000000e+00> : vector<4x256xf32>
    %110 = vector.multi_reduction <add>, %109, %cst_43 [1] : vector<4x32x256xf32> to vector<4x256xf32>
    %cst_44 = arith.constant dense<0.000000e+00> : vector<4x256xf32>
    %111 = tpu.matmul %108, %5, %cst_44 {dimension_numbers = #tpu.dot_dimension_numbers<[1], [0], [0], [1], [0, 0, 1, 1], [], []>} : vector<4x256xf32>, vector<256x256xf32>, vector<4x256xf32> -> vector<4x256xf32>
    %cst_45 = arith.constant 0.001953125 : f32
    %112 = vector.broadcast %cst_45 : f32 to vector<4x256xf32>
    %113 = arith.mulf %111, %112 : vector<4x256xf32>
    %cst_46 = arith.constant dense<0.000000e+00> : vector<4x256xf32>
    %114 = tpu.matmul %110, %5, %cst_46 {dimension_numbers = #tpu.dot_dimension_numbers<[1], [0], [0], [1], [0, 0, 1, 1], [], []>} : vector<4x256xf32>, vector<256x256xf32>, vector<4x256xf32> -> vector<4x256xf32>
    %cst_47 = arith.constant 0.001953125 : f32
    %115 = vector.broadcast %cst_47 : f32 to vector<4x256xf32>
    %116 = arith.mulf %114, %115 : vector<4x256xf32>
    %117 = arith.mulf %113, %113 : vector<4x256xf32>
    %118 = arith.subf %116, %117 : vector<4x256xf32>
    %cst_48 = arith.constant 9.99999974E-6 : f32
    %119 = vector.broadcast %cst_48 : f32 to vector<4x256xf32>
    %120 = arith.addf %118, %119 : vector<4x256xf32>
    %121 = math.rsqrt %120 : vector<4x256xf32>
    %122 = vector.shape_cast %113 : vector<4x256xf32> to vector<4x1x256xf32>
    %123 = vector.broadcast %122 : vector<4x1x256xf32> to vector<4x32x256xf32>
    %124 = arith.subf %107, %123 : vector<4x32x256xf32>
    %125 = vector.shape_cast %121 : vector<4x256xf32> to vector<4x1x256xf32>
    %126 = vector.broadcast %125 : vector<4x1x256xf32> to vector<4x32x256xf32>
    %127 = arith.mulf %124, %126 : vector<4x32x256xf32>
    %128 = vector.shape_cast %127 : vector<4x32x256xf32> to vector<128x256xf32>
    %129 = arith.addf %128, %1 : vector<128x256xf32>
    %cst_49 = arith.constant 0.000000e+00 : f32
    %130 = vector.broadcast %cst_49 : f32 to vector<128x256xf32>
    %131 = arith.maximumf %129, %130 : vector<128x256xf32>
    %132 = vector.shape_cast %131 : vector<128x256xf32> to vector<4x32x256xf32>
    %c0_50 = arith.constant 0 : index
    %c0_51 = arith.constant 0 : index
    %c0_52 = arith.constant 0 : index
    %133 = vector.load %arg10[%c0_50, %c0_51, %c0_52] : memref<4x32x256xf32, #tpu.memory_space<vmem>>, vector<4x32x256xf32>
    tpu.vector_store %arg10[%c0_50, %c0_51, %c0_52], %132 {strides = array<i32>} : memref<4x32x256xf32, #tpu.memory_space<vmem>>, vector<4x32x256xf32>,
    return
  }
  func.func @transform_0(%arg0: i32) -> (i32, i32, i32) {
    %c0_i32 = arith.constant 0 : i32
    %c0_i32_0 = arith.constant 0 : i32
    %c0_i32_1 = arith.constant 0 : i32
    return %arg0, %c0_i32, %c0_i32_0 : i32, i32, i32
  }
  func.func @transform_1(%arg0: i32) -> (i32, i32) {
    %c0_i32 = arith.constant 0 : i32
    %c0_i32_0 = arith.constant 0 : i32
    %c0_i32_1 = arith.constant 0 : i32
    return %c0_i32, %c0_i32_0 : i32, i32
  }
  func.func @transform_2(%arg0: i32) -> (i32, i32) {
    %c0_i32 = arith.constant 0 : i32
    %c0_i32_0 = arith.constant 0 : i32
    %c0_i32_1 = arith.constant 0 : i32
    return %c0_i32, %c0_i32_0 : i32, i32
  }
  func.func @transform_3(%arg0: i32) -> (i32, i32) {
    %c0_i32 = arith.constant 0 : i32
    %c0_i32_0 = arith.constant 0 : i32
    %c0_i32_1 = arith.constant 0 : i32
    return %c0_i32, %c0_i32_0 : i32, i32
  }
  func.func @transform_4(%arg0: i32) -> (i32, i32) {
    %c0_i32 = arith.constant 0 : i32
    %c0_i32_0 = arith.constant 0 : i32
    %c0_i32_1 = arith.constant 0 : i32
    return %c0_i32, %c0_i32_0 : i32, i32
  }
  func.func @transform_5(%arg0: i32) -> (i32, i32) {
    %c0_i32 = arith.constant 0 : i32
    %c0_i32_0 = arith.constant 0 : i32
    %c0_i32_1 = arith.constant 0 : i32
    return %c0_i32, %c0_i32_0 : i32, i32
  }
  func.func @transform_6(%arg0: i32) -> (i32, i32) {
    %c0_i32 = arith.constant 0 : i32
    %c0_i32_0 = arith.constant 0 : i32
    %c0_i32_1 = arith.constant 0 : i32
    return %c0_i32, %c0_i32_0 : i32, i32
  }
  func.func @transform_7(%arg0: i32) -> (i32, i32) {
    %c0_i32 = arith.constant 0 : i32
    %c0_i32_0 = arith.constant 0 : i32
    %c0_i32_1 = arith.constant 0 : i32
    return %c0_i32, %c0_i32_0 : i32, i32
  }
  func.func @transform_8(%arg0: i32) -> (i32, i32) {
    %c0_i32 = arith.constant 0 : i32
    %c0_i32_0 = arith.constant 0 : i32
    %c0_i32_1 = arith.constant 0 : i32
    return %c0_i32, %c0_i32_0 : i32, i32
  }
  func.func @transform_9(%arg0: i32) -> (i32, i32, i32) {
    %c0_i32 = arith.constant 0 : i32
    %c0_i32_0 = arith.constant 0 : i32
    %c0_i32_1 = arith.constant 0 : i32
    return %arg0, %c0_i32, %c0_i32_0 : i32, i32, i32
  }
}

</mosaic_0001>

<llo_original>
// kernel: tile.44
$region0: #{tile.44}
  %s0 = inlined_call_operand.vmem [shape: f32[16,16,4], index: 0, kind: input, shape index: {}]
  %s1 = inlined_call_operand.vmem [shape: f32[256,4], index: 1, kind: output, shape index: {}]
  $region1: #{tile.44} parent=0
    #allocation0 [shape = 'u8[8192]{0}', space=vmem, size = 0x2000, scoped, tag = 'scoped mem for output reshape']
    %v2 = vld [vmem:[%s0] ss:$8 sm:$0xf]
    %v3 = vld [vmem:[%s0] ss:$8 sm:$0xf0]
    %vm4 = vcmask 1047556
    %v5 = vsel %vm4, %v3, %v2
    %vm6 = vcmask 130048
    %7 = vst.msk [vmem:[#allocation0] ss:$8 sm:$0x3] %vm6, %v5
    %s8 = scalar_lea.vmem [#allocation0], 4294967281
    %9 = vst.msk [vmem:[%s8] ss:$8 sm:$0xc] %vm6, %v5
    %s10 = scalar_lea.vmem [#allocation0], 4294967266
    %11 = vst.msk [vmem:[%s10] ss:$8 sm:$0x30] %vm6, %v5
    %s12 = scalar_lea.vmem [#allocation0], 4294967251
    %13 = vst.msk [vmem:[%s12] ss:$8 sm:$0xc0] %vm6, %v5
    %s14 = scalar_lea.vmem %s0, 7
    %s15 = smov 3
    %v16 = vld [vmem:[%s14] ss:$16 sm:%s15]
    %s17 = scalar_lea.vmem %s0, 7
    %s18 = smov 12
    %v19 = vld [vmem:[%s17] ss:$16 sm:%s18]
    %vm20 = vcmask 1043458
    %v21 = vsel %vm20, %v19, %v16
    %s22 = scalar_lea.vmem %s0, 4294967247
    %s23 = smov 48
    %v24 = vld [vmem:[%s22] ss:$16 sm:%s23]
    %vm25 = vcmask 1045508
    %v26 = vsel %vm25, %v24, %v21
    %s27 = scalar_lea.vmem %s0, 4294967247
    %s28 = smov 192
    %v29 = vld [vmem:[%s27] ss:$16 sm:%s28]
    %vm30 = vcmask 1047558
    %v31 = vsel %vm30, %v29, %v26
    %32 = vrot.lane.b32.xlu0 %v31, 112
    %v33 = vpop.permute.xlu0 %32
    %vm34 = vcmask 1048448
    %35 = vst.msk [vmem:[#allocation0] sm:$0xf] %vm34, %v33
    %s36 = scalar_lea.vmem [#allocation0], 4
    %37 = vst.msk [vmem:[%s36] sm:$0xf0] %vm34, %v33
    %s38 = scalar_lea.vmem %s0, 6
    %s39 = smov 3
    %v40 = vld [vmem:[%s38] ss:$16 sm:%s39]
    %s41 = scalar_lea.vmem %s0, 6
    %s42 = smov 12
    %v43 = vld [vmem:[%s41] ss:$16 sm:%s42]
    %vm44 = vcmask 1043458
    %v45 = vsel %vm44, %v43, %v40
    %s46 = scalar_lea.vmem %s0, 4294967246
    %s47 = smov 48
    %v48 = vld [vmem:[%s46] ss:$16 sm:%s47]
    %vm49 = vcmask 1045508
    %v50 = vsel %vm49, %v48, %v45
    %s51 = scalar_lea.vmem %s0, 4294967246
    %s52 = smov 192
    %v53 = vld [vmem:[%s51] ss:$16 sm:%s52]
    %vm54 = vcmask 1047558
    %v55 = vsel %vm54, %v53, %v50
    %56 = vrot.lane.b32.xlu0 %v55, 96
    %v57 = vpop.permute.xlu0 %56
    %vm58 = vcmask 917248
    %59 = vst.msk [vmem:[#allocation0] sm:$0xf] %vm58, %v57
    %s60 = scalar_lea.vmem [#allocation0], 4
    %61 = vst.msk [vmem:[%s60] sm:$0xf0] %vm58, %v57
    %s62 = scalar_lea.vmem %s0, 5
    %s63 = smov 3
    %v64 = vld [vmem:[%s62] ss:$16 sm:%s63]
    %s65 = scalar_lea.vmem %s0, 5
    %s66 = smov 12
    %v67 = vld [vmem:[%s65] ss:$16 sm:%s66]
    %vm68 = vcmask 1043458
    %v69 = vsel %vm68, %v67, %v64
    %s70 = scalar_lea.vmem %s0, 4294967245
    %s71 = smov 48
    %v72 = vld [vmem:[%s70] ss:$16 sm:%s71]
    %vm73 = vcmask 1045508
    %v74 = vsel %vm73, %v72, %v69
    %s75 = scalar_lea.vmem %s0, 4294967245
    %s76 = smov 192
    %v77 = vld [vmem:[%s75] ss:$16 sm:%s76]
    %vm78 = vcmask 1047558
    %v79 = vsel %vm78, %v77, %v74
    %80 = vrot.lane.b32.xlu0 %v79, 80
    %v81 = vpop.permute.xlu0 %80
    %vm82 = vcmask 786048
    %83 = vst.msk [vmem:[#allocation0] sm:$0xf] %vm82, %v81
    %s84 = scalar_lea.vmem [#allocation0], 4
    %85 = vst.msk [vmem:[%s84] sm:$0xf0] %vm82, %v81
    %s86 = scalar_lea.vmem %s0, 4
    %s87 = smov 3
    %v88 = vld [vmem:[%s86] ss:$16 sm:%s87]
    %s89 = scalar_lea.vmem %s0, 4
    %s90 = smov 12
    %v91 = vld [vmem:[%s89] ss:$16 sm:%s90]
    %vm92 = vcmask 1043458
    %v93 = vsel %vm92, %v91, %v88
    %s94 = scalar_lea.vmem %s0, 4294967244
    %s95 = smov 48
    %v96 = vld [vmem:[%s94] ss:$16 sm:%s95]
    %vm97 = vcmask 1045508
    %v98 = vsel %vm97, %v96, %v93
    %s99 = scalar_lea.vmem %s0, 4294967244
    %s100 = smov 192
    %v101 = vld [vmem:[%s99] ss:$16 sm:%s100]
    %vm102 = vcmask 1047558
    %v103 = vsel %vm102, %v101, %v98
    %104 = vrot.lane.b32.xlu0 %v103, 64
    %v105 = vpop.permute.xlu0 %104
    %vm106 = vcmask 654848
    %107 = vst.msk [vmem:[#allocation0] sm:$0xf] %vm106, %v105
    %s108 = scalar_lea.vmem [#allocation0], 4
    %109 = vst.msk [vmem:[%s108] sm:$0xf0] %vm106, %v105
    %s110 = scalar_lea.vmem %s0, 3
    %s111 = smov 3
    %v112 = vld [vmem:[%s110] ss:$16 sm:%s111]
    %s113 = scalar_lea.vmem %s0, 3
    %s114 = smov 12
    %v115 = vld [vmem:[%s113] ss:$16 sm:%s114]
    %vm116 = vcmask 1043458
    %v117 = vsel %vm116, %v115, %v112
    %s118 = scalar_lea.vmem %s0, 4294967243
    %s119 = smov 48
    %v120 = vld [vmem:[%s118] ss:$16 sm:%s119]
    %vm121 = vcmask 1045508
    %v122 = vsel %vm121, %v120, %v117
    %s123 = scalar_lea.vmem %s0, 4294967243
    %s124 = smov 192
    %v125 = vld [vmem:[%s123] ss:$16 sm:%s124]
    %vm126 = vcmask 1047558
    %v127 = vsel %vm126, %v125, %v122
    %128 = vrot.lane.b32.xlu0 %v127, 48
    %v129 = vpop.permute.xlu0 %128
    %vm130 = vcmask 523648
    %131 = vst.msk [vmem:[#allocation0] sm:$0xf] %vm130, %v129
    %s132 = scalar_lea.vmem [#allocation0], 4
    %133 = vst.msk [vmem:[%s132] sm:$0xf0] %vm130, %v129
    %s134 = scalar_lea.vmem %s0, 2
    %s135 = smov 3
    %v136 = vld [vmem:[%s134] ss:$16 sm:%s135]
    %s137 = scalar_lea.vmem %s0, 2
    %s138 = smov 12
    %v139 = vld [vmem:[%s137] ss:$16 sm:%s138]
    %vm140 = vcmask 1043458
    %v141 = vsel %vm140, %v139, %v136
    %s142 = scalar_lea.vmem %s0, 4294967242
    %s143 = smov 48
    %v144 = vld [vmem:[%s142] ss:$16 sm:%s143]
    %vm145 = vcmask 1045508
    %v146 = vsel %vm145, %v144, %v141
    %s147 = scalar_lea.vmem %s0, 4294967242
    %s148 = smov 192
    %v149 = vld [vmem:[%s147] ss:$16 sm:%s148]
    %vm150 = vcmask 1047558
    %v151 = vsel %vm150, %v149, %v146
    %152 = vrot.lane.b32.xlu0 %v151, 32
    %v153 = vpop.permute.xlu0 %152
    %vm154 = vcmask 392448
    %155 = vst.msk [vmem:[#allocation0] sm:$0xf] %vm154, %v153
    %s156 = scalar_lea.vmem [#allocation0], 4
    %157 = vst.msk [vmem:[%s156] sm:$0xf0] %vm154, %v153
    %s158 = scalar_lea.vmem %s0, 1
    %s159 = smov 3
    %v160 = vld [vmem:[%s158] ss:$16 sm:%s159]
    %s161 = scalar_lea.vmem %s0, 1
    %s162 = smov 12
    %v163 = vld [vmem:[%s161] ss:$16 sm:%s162]
    %vm164 = vcmask 1043458
    %v165 = vsel %vm164, %v163, %v160
    %s166 = scalar_lea.vmem %s0, 4294967241
    %s167 = smov 48
    %v168 = vld [vmem:[%s166] ss:$16 sm:%s167]
    %vm169 = vcmask 1045508
    %v170 = vsel %vm169, %v168, %v165
    %s171 = scalar_lea.vmem %s0, 4294967241
    %s172 = smov 192
    %v173 = vld [vmem:[%s171] ss:$16 sm:%s172]
    %vm174 = vcmask 1047558
    %v175 = vsel %vm174, %v173, %v170
    %176 = vrot.lane.b32.xlu0 %v175, 16
    %v177 = vpop.permute.xlu0 %176
    %vm178 = vcmask 261248
    %179 = vst.msk [vmem:[#allocation0] sm:$0xf] %vm178, %v177
    %s180 = scalar_lea.vmem [#allocation0], 4
    %181 = vst.msk [vmem:[%s180] sm:$0xf0] %vm178, %v177
    %s183 = sshll.u32 1, 4
    %s184 = ssub.s32 %s183, 1
    %v186 = vld [vmem:[#allocation0] sm:%s184]
    %s187 = sshll.u32 1, 4
    %s188 = ssub.s32 %s187, 1
    %189 = vst [vmem:[%s1] sm:%s188] %v186
    %s190 = scalar_lea.vmem [#allocation0], 8
    %v191 = vld [vmem:[%s190] sm:%s184]
    %s192 = sshll.u32 1, 4
    %s193 = ssub.s32 %s192, 1
    %s194 = scalar_lea.vmem %s1, 4
    %195 = vst [vmem:[%s194] sm:%s193] %v191

// kernel: tile.54
$region0: #{tile.54}
  %s0 = inlined_call_operand.vmem [shape: f32[4,16,16], index: 0, kind: input, shape index: {}]
  %s1 = inlined_call_operand.vmem [shape: f32[4,256], index: 1, kind: output, shape index: {}]
  $region1: #{tile.54} parent=0
    #allocation0 [shape = 'u8[8192]{0}', space=vmem, size = 0x2000, scoped, tag = 'scoped mem for output reshape']
    %v2 = vld [vmem:[%s0] ss:$8 sm:$0xf]
    %v3 = vld [vmem:[%s0] ss:$8 sm:$0xf0]
    %vm4 = vcmask 1047556
    %v5 = vsel %vm4, %v3, %v2
    %vm6 = vcmask 130048
    %7 = vst.msk [vmem:[#allocation0] ss:$8 sm:$0x3] %vm6, %v5
    %s8 = scalar_lea.vmem [#allocation0], 4294967281
    %9 = vst.msk [vmem:[%s8] ss:$8 sm:$0xc] %vm6, %v5
    %s10 = scalar_lea.vmem [#allocation0], 4294967266
    %11 = vst.msk [vmem:[%s10] ss:$8 sm:$0x30] %vm6, %v5
    %s12 = scalar_lea.vmem [#allocation0], 4294967251
    %13 = vst.msk [vmem:[%s12] ss:$8 sm:$0xc0] %vm6, %v5
    %s14 = scalar_lea.vmem %s0, 7
    %s15 = smov 3
    %v16 = vld [vmem:[%s14] ss:$16 sm:%s15]
    %s17 = scalar_lea.vmem %s0, 7
    %s18 = smov 12
    %v19 = vld [vmem:[%s17] ss:$16 sm:%s18]
    %vm20 = vcmask 1043458
    %v21 = vsel %vm20, %v19, %v16
    %s22 = scalar_lea.vmem %s0, 4294967247
    %s23 = smov 48
    %v24 = vld [vmem:[%s22] ss:$16 sm:%s23]
    %vm25 = vcmask 1045508
    %v26 = vsel %vm25, %v24, %v21
    %s27 = scalar_lea.vmem %s0, 4294967247
    %s28 = smov 192
    %v29 = vld [vmem:[%s27] ss:$16 sm:%s28]
    %vm30 = vcmask 1047558
    %v31 = vsel %vm30, %v29, %v26
    %32 = vrot.lane.b32.xlu0 %v31, 112
    %v33 = vpop.permute.xlu0 %32
    %vm34 = vcmask 1048448
    %35 = vst.msk [vmem:[#allocation0] sm:$0xf] %vm34, %v33
    %s36 = scalar_lea.vmem [#allocation0], 4
    %37 = vst.msk [vmem:[%s36] sm:$0xf0] %vm34, %v33
    %s38 = scalar_lea.vmem %s0, 6
    %s39 = smov 3
    %v40 = vld [vmem:[%s38] ss:$16 sm:%s39]
    %s41 = scalar_lea.vmem %s0, 6
    %s42 = smov 12
    %v43 = vld [vmem:[%s41] ss:$16 sm:%s42]
    %vm44 = vcmask 1043458
    %v45 = vsel %vm44, %v43, %v40
    %s46 = scalar_lea.vmem %s0, 4294967246
    %s47 = smov 48
    %v48 = vld [vmem:[%s46] ss:$16 sm:%s47]
    %vm49 = vcmask 1045508
    %v50 = vsel %vm49, %v48, %v45
    %s51 = scalar_lea.vmem %s0, 4294967246
    %s52 = smov 192
    %v53 = vld [vmem:[%s51] ss:$16 sm:%s52]
    %vm54 = vcmask 1047558
    %v55 = vsel %vm54, %v53, %v50
    %56 = vrot.lane.b32.xlu0 %v55, 96
    %v57 = vpop.permute.xlu0 %56
    %vm58 = vcmask 917248
    %59 = vst.msk [vmem:[#allocation0] sm:$0xf] %vm58, %v57
    %s60 = scalar_lea.vmem [#allocation0], 4
    %61 = vst.msk [vmem:[%s60] sm:$0xf0] %vm58, %v57
    %s62 = scalar_lea.vmem %s0, 5
    %s63 = smov 3
    %v64 = vld [vmem:[%s62] ss:$16 sm:%s63]
    %s65 = scalar_lea.vmem %s0, 5
    %s66 = smov 12
    %v67 = vld [vmem:[%s65] ss:$16 sm:%s66]
    %vm68 = vcmask 1043458
    %v69 = vsel %vm68, %v67, %v64
    %s70 = scalar_lea.vmem %s0, 4294967245
    %s71 = smov 48
    %v72 = vld [vmem:[%s70] ss:$16 sm:%s71]
    %vm73 = vcmask 1045508
    %v74 = vsel %vm73, %v72, %v69
    %s75 = scalar_lea.vmem %s0, 4294967245
    %s76 = smov 192
    %v77 = vld [vmem:[%s75] ss:$16 sm:%s76]
    %vm78 = vcmask 1047558
    %v79 = vsel %vm78, %v77, %v74
    %80 = vrot.lane.b32.xlu0 %v79, 80
    %v81 = vpop.permute.xlu0 %80
    %vm82 = vcmask 786048
    %83 = vst.msk [vmem:[#allocation0] sm:$0xf] %vm82, %v81
    %s84 = scalar_lea.vmem [#allocation0], 4
    %85 = vst.msk [vmem:[%s84] sm:$0xf0] %vm82, %v81
    %s86 = scalar_lea.vmem %s0, 4
    %s87 = smov 3
    %v88 = vld [vmem:[%s86] ss:$16 sm:%s87]
    %s89 = scalar_lea.vmem %s0, 4
    %s90 = smov 12
    %v91 = vld [vmem:[%s89] ss:$16 sm:%s90]
    %vm92 = vcmask 1043458
    %v93 = vsel %vm92, %v91, %v88
    %s94 = scalar_lea.vmem %s0, 4294967244
    %s95 = smov 48
    %v96 = vld [vmem:[%s94] ss:$16 sm:%s95]
    %vm97 = vcmask 1045508
    %v98 = vsel %vm97, %v96, %v93
    %s99 = scalar_lea.vmem %s0, 4294967244
    %s100 = smov 192
    %v101 = vld [vmem:[%s99] ss:$16 sm:%s100]
    %vm102 = vcmask 1047558
    %v103 = vsel %vm102, %v101, %v98
    %104 = vrot.lane.b32.xlu0 %v103, 64
    %v105 = vpop.permute.xlu0 %104
    %vm106 = vcmask 654848
    %107 = vst.msk [vmem:[#allocation0] sm:$0xf] %vm106, %v105
    %s108 = scalar_lea.vmem [#allocation0], 4
    %109 = vst.msk [vmem:[%s108] sm:$0xf0] %vm106, %v105
    %s110 = scalar_lea.vmem %s0, 3
    %s111 = smov 3
    %v112 = vld [vmem:[%s110] ss:$16 sm:%s111]
    %s113 = scalar_lea.vmem %s0, 3
    %s114 = smov 12
    %v115 = vld [vmem:[%s113] ss:$16 sm:%s114]
    %vm116 = vcmask 1043458
    %v117 = vsel %vm116, %v115, %v112
    %s118 = scalar_lea.vmem %s0, 4294967243
    %s119 = smov 48
    %v120 = vld [vmem:[%s118] ss:$16 sm:%s119]
    %vm121 = vcmask 1045508
    %v122 = vsel %vm121, %v120, %v117
    %s123 = scalar_lea.vmem %s0, 4294967243
    %s124 = smov 192
    %v125 = vld [vmem:[%s123] ss:$16 sm:%s124]
    %vm126 = vcmask 1047558
    %v127 = vsel %vm126, %v125, %v122
    %128 = vrot.lane.b32.xlu0 %v127, 48
    %v129 = vpop.permute.xlu0 %128
    %vm130 = vcmask 523648
    %131 = vst.msk [vmem:[#allocation0] sm:$0xf] %vm130, %v129
    %s132 = scalar_lea.vmem [#allocation0], 4
    %133 = vst.msk [vmem:[%s132] sm:$0xf0] %vm130, %v129
    %s134 = scalar_lea.vmem %s0, 2
    %s135 = smov 3
    %v136 = vld [vmem:[%s134] ss:$16 sm:%s135]
    %s137 = scalar_lea.vmem %s0, 2
    %s138 = smov 12
    %v139 = vld [vmem:[%s137] ss:$16 sm:%s138]
    %vm140 = vcmask 1043458
    %v141 = vsel %vm140, %v139, %v136
    %s142 = scalar_lea.vmem %s0, 4294967242
    %s143 = smov 48
    %v144 = vld [vmem:[%s142] ss:$16 sm:%s143]
    %vm145 = vcmask 1045508
    %v146 = vsel %vm145, %v144, %v141
    %s147 = scalar_lea.vmem %s0, 4294967242
    %s148 = smov 192
    %v149 = vld [vmem:[%s147] ss:$16 sm:%s148]
    %vm150 = vcmask 1047558
    %v151 = vsel %vm150, %v149, %v146
    %152 = vrot.lane.b32.xlu0 %v151, 32
    %v153 = vpop.permute.xlu0 %152
    %vm154 = vcmask 392448
    %155 = vst.msk [vmem:[#allocation0] sm:$0xf] %vm154, %v153
    %s156 = scalar_lea.vmem [#allocation0], 4
    %157 = vst.msk [vmem:[%s156] sm:$0xf0] %vm154, %v153
    %s158 = scalar_lea.vmem %s0, 1
    %s159 = smov 3
    %v160 = vld [vmem:[%s158] ss:$16 sm:%s159]
    %s161 = scalar_lea.vmem %s0, 1
    %s162 = smov 12
    %v163 = vld [vmem:[%s161] ss:$16 sm:%s162]
    %vm164 = vcmask 1043458
    %v165 = vsel %vm164, %v163, %v160
    %s166 = scalar_lea.vmem %s0, 4294967241
    %s167 = smov 48
    %v168 = vld [vmem:[%s166] ss:$16 sm:%s167]
    %vm169 = vcmask 1045508
    %v170 = vsel %vm169, %v168, %v165
    %s171 = scalar_lea.vmem %s0, 4294967241
    %s172 = smov 192
    %v173 = vld [vmem:[%s171] ss:$16 sm:%s172]
    %vm174 = vcmask 1047558
    %v175 = vsel %vm174, %v173, %v170
    %176 = vrot.lane.b32.xlu0 %v175, 16
    %v177 = vpop.permute.xlu0 %176
    %vm178 = vcmask 261248
    %179 = vst.msk [vmem:[#allocation0] sm:$0xf] %vm178, %v177
    %s180 = scalar_lea.vmem [#allocation0], 4
    %181 = vst.msk [vmem:[%s180] sm:$0xf0] %vm178, %v177
    %s183 = sshll.u32 1, 4
    %s184 = ssub.s32 %s183, 1
    %v186 = vld [vmem:[#allocation0] sm:%s184]
    %s187 = sshll.u32 1, 4
    %s188 = ssub.s32 %s187, 1
    %189 = vst [vmem:[%s1] sm:%s188] %v186
    %s190 = scalar_lea.vmem [#allocation0], 8
    %v191 = vld [vmem:[%s190] sm:%s184]
    %s192 = sshll.u32 1, 4
    %s193 = ssub.s32 %s192, 1
    %s194 = scalar_lea.vmem %s1, 4
    %195 = vst [vmem:[%s194] sm:%s193] %v191

// kernel: tile.33
$region0: #{tile.33}
  #allocation0 [shape = 's32[1]{0}', space=sflag, size = 0x4, scoped, tag = 'scoped memory for tile.33']
  %s0 = inlined_call_operand.vmem [shape: f32[16], index: 0, kind: input, shape index: {}]
  %s1 = inlined_call_operand.vmem [shape: f32[16,16], index: 1, kind: output, shape index: {}]
  // Predicated region
  $region2: #{tile.33} parent=0 // pred_check
    _
  $region3: #{tile.33} parent=0 // pred_check_branch
    %3 = sbr.rel (0) target = $region5
  $region4: #{tile.33} parent=0 // pred_region
    _
  $region5: #{tile.33} parent=0 // pred_fallthru
    _
  %v4 = vld [vmem:[%s0] ss:$0 sm:$0xff]
  %5 = vst [vmem:[%s1] sm:$0xff] %v4
  %s6 = scalar_lea.vmem %s1, 8
  %7 = vst [vmem:[%s6] sm:$0xff] %v4

// kernel: tile.34
$region0: #{tile.34}
  %s0 = inlined_call_operand.vmem [shape: f32[16,16], index: 0, kind: input, shape index: {}]
  %s1 = inlined_call_operand.vmem [shape: f32[1,256], index: 1, kind: output, shape index: {}]
  $region1: #{tile.34} parent=0
    #allocation0 [shape = 'u8[8192]{0}', space=vmem, size = 0x2000, scoped, tag = 'scoped mem for output reshape']
    %s2 = smov 3
    %v3 = vld [vmem:[%s0] ss:$8 sm:%s2]
    %vm4 = vcmask 130048
    %5 = vst.msk [vmem:[#allocation0] ss:$8 sm:$0x3] %vm4, %v3
    %s6 = scalar_lea.vmem %s0, 7
    %s7 = smov 3
    %v8 = vld [vmem:[%s6] ss:$8 sm:%s7]
    %9 = vrot.lane.b32.xlu0 %v8, 112
    %v10 = vpop.permute.xlu0 %9
    %vm11 = vcmask 1048448
    %12 = vst.msk [vmem:[#allocation0] ss:$8 sm:$0x3] %vm11, %v10
    %s13 = scalar_lea.vmem %s0, 6
    %s14 = smov 3
    %v15 = vld [vmem:[%s13] ss:$8 sm:%s14]
    %16 = vrot.lane.b32.xlu0 %v15, 96
    %v17 = vpop.permute.xlu0 %16
    %vm18 = vcmask 917248
    %19 = vst.msk [vmem:[#allocation0] ss:$8 sm:$0x3] %vm18, %v17
    %s20 = scalar_lea.vmem %s0, 5
    %s21 = smov 3
    %v22 = vld [vmem:[%s20] ss:$8 sm:%s21]
    %23 = vrot.lane.b32.xlu0 %v22, 80
    %v24 = vpop.permute.xlu0 %23
    %vm25 = vcmask 786048
    %26 = vst.msk [vmem:[#allocation0] ss:$8 sm:$0x3] %vm25, %v24
    %s27 = scalar_lea.vmem %s0, 4
    %s28 = smov 3
    %v29 = vld [vmem:[%s27] ss:$8 sm:%s28]
    %30 = vrot.lane.b32.xlu0 %v29, 64
    %v31 = vpop.permute.xlu0 %30
    %vm32 = vcmask 654848
    %33 = vst.msk [vmem:[#allocation0] ss:$8 sm:$0x3] %vm32, %v31
    %s34 = scalar_lea.vmem %s0, 3
    %s35 = smov 3
    %v36 = vld [vmem:[%s34] ss:$8 sm:%s35]
    %37 = vrot.lane.b32.xlu0 %v36, 48
    %v38 = vpop.permute.xlu0 %37
    %vm39 = vcmask 523648
    %40 = vst.msk [vmem:[#allocation0] ss:$8 sm:$0x3] %vm39, %v38
    %s41 = scalar_lea.vmem %s0, 2
    %s42 = smov 3
    %v43 = vld [vmem:[%s41] ss:$8 sm:%s42]
    %44 = vrot.lane.b32.xlu0 %v43, 32
    %v45 = vpop.permute.xlu0 %44
    %vm46 = vcmask 392448
    %47 = vst.msk [vmem:[#allocation0] ss:$8 sm:$0x3] %vm46, %v45
    %s48 = scalar_lea.vmem %s0, 1
    %s49 = smov 3
    %v50 = vld [vmem:[%s48] ss:$8 sm:%s49]
    %51 = vrot.lane.b32.xlu0 %v50, 16
    %v52 = vpop.permute.xlu0 %51
    %vm53 = vcmask 261248
    %54 = vst.msk [vmem:[#allocation0] ss:$8 sm:$0x3] %vm53, %v52
    %s56 = sshll.u32 1, 1
    %s57 = ssub.s32 %s56, 1
    %v59 = vld [vmem:[#allocation0] sm:%s57]
    %s60 = sshll.u32 1, 1
    %s61 = ssub.s32 %s60, 1
    %62 = vst [vmem:[%s1] sm:%s61] %v59
    %s63 = scalar_lea.vmem [#allocation0], 8
    %v64 = vld [vmem:[%s63] sm:%s57]
    %s65 = sshll.u32 1, 1
    %s66 = ssub.s32 %s65, 1
    %s67 = scalar_lea.vmem %s1, 1
    %68 = vst [vmem:[%s67] sm:%s66] %v64

// kernel: se_basic_block.1
$region0: #{se_basic_block.1}
  #allocation0 [shape = 'u32[]', space=smem, size = 0x4, offset = 0x4, fixed_abs, tag = 'smem constant byte address 0x4 - core index']
  #allocation1 [shape = 'u32[144,128]{1,0:T(1,128)}', space=vmem, size = 0x12000, scoped, tag = 'internal scratch']
  %s0 = inlined_call_operand.vmem [shape: f32[8,32,256], index: 0, kind: input, shape index: {}]
  %s1 = inlined_call_operand.vmem [shape: f32[256,768], index: 1, kind: input, shape index: {}]
  %s2 = inlined_call_operand.vmem [shape: f32[1,256], index: 2, kind: input, shape index: {}]
  %s3 = inlined_call_operand.vmem [shape: f32[256,768], index: 3, kind: input, shape index: {}]
  %s4 = inlined_call_operand.vmem [shape: f32[1,256], index: 4, kind: input, shape index: {}]
  %s5 = inlined_call_operand.vmem [shape: f32[512,4], index: 5, kind: input, shape index: {}]
  %s6 = inlined_call_operand.vmem [shape: f32[4,512], index: 6, kind: input, shape index: {}]
  %s7 = inlined_call_operand.vmem [shape: bf16[128,256], index: 7, kind: input, shape index: {}]
  %s8 = inlined_call_operand.vmem [shape: bf16[256,256], index: 8, kind: input, shape index: {}]
  %s9 = inlined_call_operand.vmem [shape: f32[8,32,256], index: 9, kind: output, shape index: {}]
  %s10 = sld [smem:[#allocation0]]
  $region69: #{se_basic_block.1} parent=0
    _
  %s12 = ssub.s32 1, %s10
  %s13 = scalar_select 0, %s12, %s10
  loop: start=0, step=1, limit=4
  $region2: #{se_basic_block.1} parent=0 // loop_pre_header
    _
  $region3: #{se_basic_block.1} parent=0 // loop_header
    %s15 = sphi 0, %s19
    %p16 = scmp.ge.s32.totalorder %s15, 4
    %s25 = sphi 0, %s27
    %s28 = sphi 0, %s25
    %s29 = sphi 0, %s28
    %s45 = sphi 0, %s29
    %s49 = sphi 0, %s49
    %s51 = sphi 0, %s49
    %s52 = sphi 0, %s51
    %s66 = sphi 0, %s52
    %s70 = sphi 0, %s70
    %s72 = sphi 0, %s70
    %s73 = sphi 0, %s72
    %s87 = sphi 0, %s73
    %s91 = sphi 0, %s91
    %s93 = sphi 0, %s91
    %s94 = sphi 0, %s93
    %s108 = sphi 0, %s94
    %s112 = sphi 0, %s112
    %s114 = sphi 0, %s112
    %s115 = sphi 0, %s114
    %s129 = sphi 0, %s115
    %s133 = sphi 0, %s133
    %s135 = sphi 0, %s133
    %s136 = sphi 0, %s135
    %s150 = sphi 0, %s136
    %s154 = sphi 0, %s154
    %s156 = sphi 0, %s154
    %s157 = sphi 0, %s156
    %s171 = sphi 0, %s157
    %s175 = sphi 0, %s175
    %s177 = sphi 0, %s175
    %s178 = sphi 0, %s177
    %s192 = sphi 0, %s178
    %s196 = sphi 0, %s196
    %s198 = sphi 0, %s196
    %s199 = sphi 0, %s198
    %s213 = sphi 0, %s199
    %s219 = sphi 0, %s221
    %s222 = sphi 0, %s219
    %s223 = sphi 0, %s222
    %s239 = sphi 0, %s223
  $region4: #{se_basic_block.1} parent=0 // loop_header_branch
    %18 = sbr.rel (%p16) target = $region8
  $region5: #{se_basic_block.1} parent=0 // loop_body
    %s20 = ssub.s32 %s15, 1
    %s21 = ssub.s32 %s15, 2
    %s22 = sadd.s32 %s15, 1
    %s23 = ssub.s32 %s15, %s22
    %p24 = scmp.eq.s32.totalorder %s23, 0
    %s26 = sadd.s32 %s25, 1
    %s27 = scalar_select %p24, %s25, %s26
    %p30 = pneg %p24
    %p31 = scmp.eq.s32.totalorder %s15, 1
    %p32 = por %p30, %p31
    %p33 = scmp.ne.s32.totalorder %s25, %s28
    %p34 = scmp.eq.s32.totalorder %s15, 0
    %p35 = por %p33, %p34
    %p36 = scmp.ne.s32.totalorder %s25, %s28
    %p37 = scmp.eq.s32.totalorder %s20, 1
    %p38 = por %p36, %p37
    %p39 = scmp.ne.s32.totalorder %s28, %s29
    %p40 = scmp.eq.s32.totalorder %s20, 0
    %p41 = por %p39, %p40
    %p42 = scmp.ne.s32.totalorder %s28, %s29
    %p43 = scmp.eq.s32.totalorder %s21, 1
    %p44 = por %p42, %p43
    %p46 = scmp.ne.s32.totalorder %s29, %s45
    %p47 = scmp.eq.s32.totalorder %s21, 0
    %p48 = por %p46, %p47
    %s50 = sadd.s32 %s49, 1
    %p53 = scmp.eq.s32.totalorder %s15, 1
    %p54 = scmp.ne.s32.totalorder %s49, %s51
    %p55 = scmp.eq.s32.totalorder %s15, 0
    %p56 = por %p54, %p55
    %p57 = scmp.ne.s32.totalorder %s49, %s51
    %p58 = scmp.eq.s32.totalorder %s20, 1
    %p59 = por %p57, %p58
    %p60 = scmp.ne.s32.totalorder %s51, %s52
    %p61 = scmp.eq.s32.totalorder %s20, 0
    %p62 = por %p60, %p61
    %p63 = scmp.ne.s32.totalorder %s51, %s52
    %p64 = scmp.eq.s32.totalorder %s21, 1
    %p65 = por %p63, %p64
    %p67 = scmp.ne.s32.totalorder %s52, %s66
    %p68 = scmp.eq.s32.totalorder %s21, 0
    %p69 = por %p67, %p68
    %s71 = sadd.s32 %s70, 1
    %p74 = scmp.eq.s32.totalorder %s15, 1
    %p75 = scmp.ne.s32.totalorder %s70, %s72
    %p76 = scmp.eq.s32.totalorder %s15, 0
    %p77 = por %p75, %p76
    %p78 = scmp.ne.s32.totalorder %s70, %s72
    %p79 = scmp.eq.s32.totalorder %s20, 1
    %p80 = por %p78, %p79
    %p81 = scmp.ne.s32.totalorder %s72, %s73
    %p82 = scmp.eq.s32.totalorder %s20, 0
    %p83 = por %p81, %p82
    %p84 = scmp.ne.s32.totalorder %s72, %s73
    %p85 = scmp.eq.s32.totalorder %s21, 1
    %p86 = por %p84, %p85
    %p88 = scmp.ne.s32.totalorder %s73, %s87
    %p89 = scmp.eq.s32.totalorder %s21, 0
    %p90 = por %p88, %p89
    %s92 = sadd.s32 %s91, 1
    %p95 = scmp.eq.s32.totalorder %s15, 1
    %p96 = scmp.ne.s32.totalorder %s91, %s93
    %p97 = scmp.eq.s32.totalorder %s15, 0
    %p98 = por %p96, %p97
    %p99 = scmp.ne.s32.totalorder %s91, %s93
    %p100 = scmp.eq.s32.totalorder %s20, 1
    %p101 = por %p99, %p100
    %p102 = scmp.ne.s32.totalorder %s93, %s94
    %p103 = scmp.eq.s32.totalorder %s20, 0
    %p104 = por %p102, %p103
    %p105 = scmp.ne.s32.totalorder %s93, %s94
    %p106 = scmp.eq.s32.totalorder %s21, 1
    %p107 = por %p105, %p106
    %p109 = scmp.ne.s32.totalorder %s94, %s108
    %p110 = scmp.eq.s32.totalorder %s21, 0
    %p111 = por %p109, %p110
    %s113 = sadd.s32 %s112, 1
    %p116 = scmp.eq.s32.totalorder %s15, 1
    %p117 = scmp.ne.s32.totalorder %s112, %s114
    %p118 = scmp.eq.s32.totalorder %s15, 0
    %p119 = por %p117, %p118
    %p120 = scmp.ne.s32.totalorder %s112, %s114
    %p121 = scmp.eq.s32.totalorder %s20, 1
    %p122 = por %p120, %p121
    %p123 = scmp.ne.s32.totalorder %s114, %s115
    %p124 = scmp.eq.s32.totalorder %s20, 0
    %p125 = por %p123, %p124
    %p126 = scmp.ne.s32.totalorder %s114, %s115
    %p127 = scmp.eq.s32.totalorder %s21, 1
    %p128 = por %p126, %p127
    %p130 = scmp.ne.s32.totalorder %s115, %s129
    %p131 = scmp.eq.s32.totalorder %s21, 0
    %p132 = por %p130, %p131
    %s134 = sadd.s32 %s133, 1
    %p137 = scmp.eq.s32.totalorder %s15, 1
    %p138 = scmp.ne.s32.totalorder %s133, %s135
    %p139 = scmp.eq.s32.totalorder %s15, 0
    %p140 = por %p138, %p139
    %p141 = scmp.ne.s32.totalorder %s133, %s135
    %p142 = scmp.eq.s32.totalorder %s20, 1
    %p143 = por %p141, %p142
    %p144 = scmp.ne.s32.totalorder %s135, %s136
    %p145 = scmp.eq.s32.totalorder %s20, 0
    %p146 = por %p144, %p145
    %p147 = scmp.ne.s32.totalorder %s135, %s136
    %p148 = scmp.eq.s32.totalorder %s21, 1
    %p149 = por %p147, %p148
    %p151 = scmp.ne.s32.totalorder %s136, %s150
    %p152 = scmp.eq.s32.totalorder %s21, 0
    %p153 = por %p151, %p152
    %s155 = sadd.s32 %s154, 1
    %p158 = scmp.eq.s32.totalorder %s15, 1
    %p159 = scmp.ne.s32.totalorder %s154, %s156
    %p160 = scmp.eq.s32.totalorder %s15, 0
    %p161 = por %p159, %p160
    %p162 = scmp.ne.s32.totalorder %s154, %s156
    %p163 = scmp.eq.s32.totalorder %s20, 1
    %p164 = por %p162, %p163
    %p165 = scmp.ne.s32.totalorder %s156, %s157
    %p166 = scmp.eq.s32.totalorder %s20, 0
    %p167 = por %p165, %p166
    %p168 = scmp.ne.s32.totalorder %s156, %s157
    %p169 = scmp.eq.s32.totalorder %s21, 1
    %p170 = por %p168, %p169
    %p172 = scmp.ne.s32.totalorder %s157, %s171
    %p173 = scmp.eq.s32.totalorder %s21, 0
    %p174 = por %p172, %p173
    %s176 = sadd.s32 %s175, 1
    %p179 = scmp.eq.s32.totalorder %s15, 1
    %p180 = scmp.ne.s32.totalorder %s175, %s177
    %p181 = scmp.eq.s32.totalorder %s15, 0
    %p182 = por %p180, %p181
    %p183 = scmp.ne.s32.totalorder %s175, %s177
    %p184 = scmp.eq.s32.totalorder %s20, 1
    %p185 = por %p183, %p184
    %p186 = scmp.ne.s32.totalorder %s177, %s178
    %p187 = scmp.eq.s32.totalorder %s20, 0
    %p188 = por %p186, %p187
    %p189 = scmp.ne.s32.totalorder %s177, %s178
    %p190 = scmp.eq.s32.totalorder %s21, 1
    %p191 = por %p189, %p190
    %p193 = scmp.ne.s32.totalorder %s178, %s192
    %p194 = scmp.eq.s32.totalorder %s21, 0
    %p195 = por %p193, %p194
    %s197 = sadd.s32 %s196, 1
    %p200 = scmp.eq.s32.totalorder %s15, 1
    %p201 = scmp.ne.s32.totalorder %s196, %s198
    %p202 = scmp.eq.s32.totalorder %s15, 0
    %p203 = por %p201, %p202
    %p204 = scmp.ne.s32.totalorder %s196, %s198
    %p205 = scmp.eq.s32.totalorder %s20, 1
    %p206 = por %p204, %p205
    %p207 = scmp.ne.s32.totalorder %s198, %s199
    %p208 = scmp.eq.s32.totalorder %s20, 0
    %p209 = por %p207, %p208
    %p210 = scmp.ne.s32.totalorder %s198, %s199
    %p211 = scmp.eq.s32.totalorder %s21, 1
    %p212 = por %p210, %p211
    %p214 = scmp.ne.s32.totalorder %s199, %s213
    %p215 = scmp.eq.s32.totalorder %s21, 0
    %p216 = por %p214, %p215
    %s217 = ssub.s32 %s15, %s22
    %p218 = scmp.eq.s32.totalorder %s217, 0
    %s220 = sadd.s32 %s219, 1
    %s221 = scalar_select %p218, %s219, %s220
    %p224 = pneg %p218
    %p225 = scmp.eq.s32.totalorder %s15, 1
    %p226 = por %p224, %p225
    %p227 = scmp.ne.s32.totalorder %s219, %s222
    %p228 = scmp.eq.s32.totalorder %s15, 0
    %p229 = por %p227, %p228
    %p230 = scmp.ne.s32.totalorder %s219, %s222
    %p231 = scmp.eq.s32.totalorder %s20, 1
    %p232 = por %p230, %p231
    %p233 = scmp.ne.s32.totalorder %s222, %s223
    %p234 = scmp.eq.s32.totalorder %s20, 0
    %p235 = por %p233, %p234
    %p236 = scmp.ne.s32.totalorder %s222, %s223
    %p237 = scmp.eq.s32.totalorder %s21, 1
    %p238 = por %p236, %p237
    %p240 = scmp.ne.s32.totalorder %s223, %s239
    %p241 = scmp.eq.s32.totalorder %s21, 0
    %p242 = por %p240, %p241
    %p243 = scmp.le.s32.totalorder 1, %s15
    %p244 = scmp.lt.s32.totalorder %s15, 3
    %p245 = pnand %p243, %p244
    %p246 = pneg %p245
    // Predicated region
    $region9: #{se_basic_block.1} parent=5 // pred_check
      _
    $region10: #{se_basic_block.1} parent=5 // pred_check_branch
      %248 = sbr.rel (%p245) target = $region12
    $region11: #{se_basic_block.1} parent=5 // pred_region
      %s249 = ssub.s32 %s15, 1
      // Predicated region
      $region13: #{se_basic_block.1} parent=11 // pred_check
        %p250 = pneg %p62
      $region14: #{se_basic_block.1} parent=11 // pred_check_branch
        %252 = sbr.rel (%p250) target = $region16
      $region15: #{se_basic_block.1} parent=11 // pred_region
        _
      $region16: #{se_basic_block.1} parent=11 // pred_fallthru
        _
      // Predicated region
      $region17: #{se_basic_block.1} parent=11 // pred_check
        %p253 = pneg %p83
      $region18: #{se_basic_block.1} parent=11 // pred_check_branch
        %255 = sbr.rel (%p253) target = $region20
      $region19: #{se_basic_block.1} parent=11 // pred_region
        _
      $region20: #{se_basic_block.1} parent=11 // pred_fallthru
        _
      // Predicated region
      $region21: #{se_basic_block.1} parent=11 // pred_check
        %p256 = pneg %p104
      $region22: #{se_basic_block.1} parent=11 // pred_check_branch
        %258 = sbr.rel (%p256) target = $region24
      $region23: #{se_basic_block.1} parent=11 // pred_region
        _
      $region24: #{se_basic_block.1} parent=11 // pred_fallthru
        _
      // Predicated region
      $region25: #{se_basic_block.1} parent=11 // pred_check
        %p259 = pneg %p125
      $region26: #{se_basic_block.1} parent=11 // pred_check_branch
        %261 = sbr.rel (%p259) target = $region28
      $region27: #{se_basic_block.1} parent=11 // pred_region
        _
      $region28: #{se_basic_block.1} parent=11 // pred_fallthru
        _
      // Predicated region
      $region29: #{se_basic_block.1} parent=11 // pred_check
        %p262 = pneg %p146
      $region30: #{se_basic_block.1} parent=11 // pred_check_branch
        %264 = sbr.rel (%p262) target = $region32
      $region31: #{se_basic_block.1} parent=11 // pred_region
        _
      $region32: #{se_basic_block.1} parent=11 // pred_fallthru
        _
      // Predicated region
      $region33: #{se_basic_block.1} parent=11 // pred_check
        %p265 = pneg %p167
      $region34: #{se_basic_block.1} parent=11 // pred_check_branch
        %267 = sbr.rel (%p265) target = $region36
      $region35: #{se_basic_block.1} parent=11 // pred_region
        _
      $region36: #{se_basic_block.1} parent=11 // pred_fallthru
        _
      // Predicated region
      $region37: #{se_basic_block.1} parent=11 // pred_check
        %p268 = pneg %p188
      $region38: #{se_basic_block.1} parent=11 // pred_check_branch
        %270 = sbr.rel (%p268) target = $region40
      $region39: #{se_basic_block.1} parent=11 // pred_region
        _
      $region40: #{se_basic_block.1} parent=11 // pred_fallthru
        _
      // Predicated region
      $region41: #{se_basic_block.1} parent=11 // pred_check
        %p271 = pneg %p209
      $region42: #{se_basic_block.1} parent=11 // pred_check_branch
        %273 = sbr.rel (%p271) target = $region44
      $region43: #{se_basic_block.1} parent=11 // pred_region
        _
      $region44: #{se_basic_block.1} parent=11 // pred_fallthru
        _
    $region12: #{se_basic_block.1} parent=5 // pred_fallthru
      _
    %p274 = scmp.lt.s32.totalorder %s15, 2
    // Predicated region
    $region45: #{se_basic_block.1} parent=5 // pred_check
      %p275 = pneg %p274
    $region46: #{se_basic_block.1} parent=5 // pred_check_branch
      %277 = sbr.rel (%p275) target = $region48
    $region47: #{se_basic_block.1} parent=5 // pred_region
      // Predicated region
      $region49: #{se_basic_block.1} parent=47 // pred_check
        %p278 = pneg %p35
      $region50: #{se_basic_block.1} parent=47 // pred_check_branch
        %280 = sbr.rel (%p278) target = $region52
      $region51: #{se_basic_block.1} parent=47 // pred_region
        %s281 = smul.u32 4, %s15
        %p282 = scmp.lt.s32.totalorder %s281, 7
        %s283 = scalar_select %p282, %s281, 7
        %s284 = smul.addr %s283, 8
        %s285 = smul.addr %s284, 8
        %s286 = scalar_lea.vmem %s0, %s285
        %s287 = smul.u32 4, %s15
      $region52: #{se_basic_block.1} parent=47 // pred_fallthru
        _
    $region48: #{se_basic_block.1} parent=5 // pred_fallthru
      _
    %p288 = scmp.le.s32.totalorder 1, %s15
    %p289 = scmp.lt.s32.totalorder %s15, 3
    %p290 = pnand %p288, %p289
    %p291 = pneg %p290
    // Predicated region
    $region53: #{se_basic_block.1} parent=5 // pred_check
      _
    $region54: #{se_basic_block.1} parent=5 // pred_check_branch
      %293 = sbr.rel (%p290) target = $region56
    $region55: #{se_basic_block.1} parent=5 // pred_region
      %s294 = ssub.s32 %s15, 1
      %s295 = smul.u32 4, %s20
      %p296 = scmp.lt.s32.totalorder %s295, 7
      %s297 = scalar_select %p296, %s295, 7
      %s298 = smul.addr %s297, 8
      %s299 = smul.addr %s298, 8
      %s300 = scalar_lea.vmem %s0, %s299
      %p301 = pneg %p41
      %p302 = pneg %p38
      %p303 = pneg %p62
      %p304 = pneg %p59
      %p305 = pneg %p83
      %p306 = pneg %p80
      %p307 = pneg %p104
      %p308 = pneg %p101
      %p309 = pneg %p125
      %p310 = pneg %p122
      %p311 = pneg %p146
      %p312 = pneg %p143
      %p313 = pneg %p167
      %p314 = pneg %p164
      %p315 = pneg %p188
      %p316 = pneg %p185
      %p317 = pneg %p209
      %p318 = pneg %p206
      %p319 = pneg %p235
      %p320 = pneg %p232
      %s321 = smul.u32 4, %s20
      %p322 = scmp.lt.s32.totalorder %s321, 7
      %s323 = scalar_select %p322, %s321, 7
      %s324 = smul.addr %s323, 8
      %s325 = smul.addr %s324, 8
      %s326 = scalar_lea.vmem %s9, %s325
      %s327 = smul.u32 4, %s20
      %p328 = scmp.lt.s32.totalorder %s327, 7
      %s329 = scalar_select %p328, %s327, 7
      %s330 = smul.addr %s329, 8
      %s331 = smul.addr %s330, 8
      %s332 = scalar_lea.vmem %s0, %s331
      %s333 = smul.u32 4, %s20
      %s334 = smul.u32 4, %s20
      %p335 = scmp.lt.s32.totalorder %s334, 7
      %s336 = scalar_select %p335, %s334, 7
      %s337 = smul.addr %s336, 8
      %s338 = smul.addr %s337, 8
      %s339 = scalar_lea.vmem %s9, %s338
      %s340 = smul.u32 4, %s20
      %v341 = vld [vmem:[%s332] sm:$0xff]
      %v342 = vld [vmem:[%s332 + $0x8] sm:$0xff]
      %v343 = vld [vmem:[%s332 + $0x10] sm:$0xff]
      %v344 = vld [vmem:[%s332 + $0x18] sm:$0xff]
      %v345 = vld [vmem:[%s332 + $0x20] sm:$0xff]
      %v346 = vld [vmem:[%s332 + $0x28] sm:$0xff]
      %v347 = vld [vmem:[%s332 + $0x30] sm:$0xff]
      %v348 = vld [vmem:[%s332 + $0x38] sm:$0xff]
      %v349 = vld [vmem:[%s332 + $0x40] sm:$0xff]
      %v350 = vld [vmem:[%s332 + $0x48] sm:$0xff]
      %v351 = vld [vmem:[%s332 + $0x50] sm:$0xff]
      %v352 = vld [vmem:[%s332 + $0x58] sm:$0xff]
      %v353 = vld [vmem:[%s332 + $0x60] sm:$0xff]
      %v354 = vld [vmem:[%s332 + $0x68] sm:$0xff]
      %v355 = vld [vmem:[%s332 + $0x70] sm:$0xff]
      %v356 = vld [vmem:[%s332 + $0x78] sm:$0xff]
      %v357 = vld [vmem:[%s332 + $0x80] sm:$0xff]
      %v358 = vld [vmem:[%s332 + $0x88] sm:$0xff]
      %v359 = vld [vmem:[%s332 + $0x90] sm:$0xff]
      %v360 = vld [vmem:[%s332 + $0x98] sm:$0xff]
      %v361 = vld [vmem:[%s332 + $0xa0] sm:$0xff]
      %v362 = vld [vmem:[%s332 + $0xa8] sm:$0xff]
      %v363 = vld [vmem:[%s332 + $0xb0] sm:$0xff]
      %v364 = vld [vmem:[%s332 + $0xb8] sm:$0xff]
      %v365 = vld [vmem:[%s332 + $0xc0] sm:$0xff]
      %v366 = vld [vmem:[%s332 + $0xc8] sm:$0xff]
      %v367 = vld [vmem:[%s332 + $0xd0] sm:$0xff]
      %v368 = vld [vmem:[%s332 + $0xd8] sm:$0xff]
      %v369 = vld [vmem:[%s332 + $0xe0] sm:$0xff]
      %v370 = vld [vmem:[%s332 + $0xe8] sm:$0xff]
      %v371 = vld [vmem:[%s332 + $0xf0] sm:$0xff]
      %v372 = vld [vmem:[%s332 + $0xf8] sm:$0xff]
      %v373 = vld [vmem:[%s7] sm:$0xff]
      %v374 = vld [vmem:[%s7 + $0x8] sm:$0xff]
      %v375 = vld [vmem:[%s7 + $0x10] sm:$0xff]
      %v376 = vld [vmem:[%s7 + $0x18] sm:$0xff]
      %v377 = vld [vmem:[%s7 + $0x20] sm:$0xff]
      %v378 = vld [vmem:[%s7 + $0x28] sm:$0xff]
      %v379 = vld [vmem:[%s7 + $0x30] sm:$0xff]
      %v380 = vld [vmem:[%s7 + $0x38] sm:$0xff]
      %v381 = vld [vmem:[%s7 + $0x40] sm:$0xff]
      %v382 = vld [vmem:[%s7 + $0x48] sm:$0xff]
      %v383 = vld [vmem:[%s7 + $0x50] sm:$0xff]
      %v384 = vld [vmem:[%s7 + $0x58] sm:$0xff]
      %v385 = vld [vmem:[%s7 + $0x60] sm:$0xff]
      %v386 = vld [vmem:[%s7 + $0x68] sm:$0xff]
      %v387 = vld [vmem:[%s7 + $0x70] sm:$0xff]
      %v388 = vld [vmem:[%s7 + $0x78] sm:$0xff]
      %v389 = vunpack.c.l.bf16 %v373
      %v390 = vunpack.c.h.bf16 %v373
      %v391 = vunpack.c.l.bf16 %v374
      %v392 = vunpack.c.h.bf16 %v374
      %v393 = vunpack.c.l.bf16 %v375
      %v394 = vunpack.c.h.bf16 %v375
      %v395 = vunpack.c.l.bf16 %v376
      %v396 = vunpack.c.h.bf16 %v376
      %v397 = vunpack.c.l.bf16 %v377
      %v398 = vunpack.c.h.bf16 %v377
      %v399 = vunpack.c.l.bf16 %v378
      %v400 = vunpack.c.h.bf16 %v378
      %v401 = vunpack.c.l.bf16 %v379
      %v402 = vunpack.c.h.bf16 %v379
      %v403 = vunpack.c.l.bf16 %v380
      %v404 = vunpack.c.h.bf16 %v380
      %v405 = vunpack.c.l.bf16 %v381
      %v406 = vunpack.c.h.bf16 %v381
      %v407 = vunpack.c.l.bf16 %v382
      %v408 = vunpack.c.h.bf16 %v382
      %v409 = vunpack.c.l.bf16 %v383
      %v410 = vunpack.c.h.bf16 %v383
      %v411 = vunpack.c.l.bf16 %v384
      %v412 = vunpack.c.h.bf16 %v384
      %v413 = vunpack.c.l.bf16 %v385
      %v414 = vunpack.c.h.bf16 %v385
      %v415 = vunpack.c.l.bf16 %v386
      %v416 = vunpack.c.h.bf16 %v386
      %v417 = vunpack.c.l.bf16 %v387
      %v418 = vunpack.c.h.bf16 %v387
      %v419 = vunpack.c.l.bf16 %v388
      %v420 = vunpack.c.h.bf16 %v388
      %v421 = vld [vmem:[%s8] sm:$0xff]
      %v422 = vld [vmem:[%s8 + $0x8] sm:$0xff]
      %v423 = vld [vmem:[%s8 + $0x10] sm:$0xff]
      %v424 = vld [vmem:[%s8 + $0x18] sm:$0xff]
      %v425 = vld [vmem:[%s8 + $0x20] sm:$0xff]
      %v426 = vld [vmem:[%s8 + $0x28] sm:$0xff]
      %v427 = vld [vmem:[%s8 + $0x30] sm:$0xff]
      %v428 = vld [vmem:[%s8 + $0x38] sm:$0xff]
      %v429 = vld [vmem:[%s8 + $0x40] sm:$0xff]
      %v430 = vld [vmem:[%s8 + $0x48] sm:$0xff]
      %v431 = vld [vmem:[%s8 + $0x50] sm:$0xff]
      %v432 = vld [vmem:[%s8 + $0x58] sm:$0xff]
      %v433 = vld [vmem:[%s8 + $0x60] sm:$0xff]
      %v434 = vld [vmem:[%s8 + $0x68] sm:$0xff]
      %v435 = vld [vmem:[%s8 + $0x70] sm:$0xff]
      %v436 = vld [vmem:[%s8 + $0x78] sm:$0xff]
      %v437 = vld [vmem:[%s8 + $0x80] sm:$0xff]
      %v438 = vld [vmem:[%s8 + $0x88] sm:$0xff]
      %v439 = vld [vmem:[%s8 + $0x90] sm:$0xff]
      %v440 = vld [vmem:[%s8 + $0x98] sm:$0xff]
      %v441 = vld [vmem:[%s8 + $0xa0] sm:$0xff]
      %v442 = vld [vmem:[%s8 + $0xa8] sm:$0xff]
      %v443 = vld [vmem:[%s8 + $0xb0] sm:$0xff]
      %v444 = vld [vmem:[%s8 + $0xb8] sm:$0xff]
      %v445 = vld [vmem:[%s8 + $0xc0] sm:$0xff]
      %v446 = vld [vmem:[%s8 + $0xc8] sm:$0xff]
      %v447 = vld [vmem:[%s8 + $0xd0] sm:$0xff]
      %v448 = vld [vmem:[%s8 + $0xd8] sm:$0xff]
      %v449 = vld [vmem:[%s8 + $0xe0] sm:$0xff]
      %v450 = vld [vmem:[%s8 + $0xe8] sm:$0xff]
      %v451 = vld [vmem:[%s8 + $0xf0] sm:$0xff]
      %v452 = vld [vmem:[%s8 + $0xf8] sm:$0xff]
      %v453 = vunpack.c.l.bf16 %v421
      %v454 = vunpack.c.h.bf16 %v421
      %v455 = vunpack.c.l.bf16 %v422
      %v456 = vunpack.c.h.bf16 %v422
      %v457 = vunpack.c.l.bf16 %v423
      %v458 = vunpack.c.h.bf16 %v423
      %v459 = vunpack.c.l.bf16 %v424
      %v460 = vunpack.c.h.bf16 %v424
      %v461 = vunpack.c.l.bf16 %v425
      %v462 = vunpack.c.h.bf16 %v425
      %v463 = vunpack.c.l.bf16 %v426
      %v464 = vunpack.c.h.bf16 %v426
      %v465 = vunpack.c.l.bf16 %v427
      %v466 = vunpack.c.h.bf16 %v427
      %v467 = vunpack.c.l.bf16 %v428
      %v468 = vunpack.c.h.bf16 %v428
      %v469 = vunpack.c.l.bf16 %v429
      %v470 = vunpack.c.h.bf16 %v429
      %v471 = vunpack.c.l.bf16 %v430
      %v472 = vunpack.c.h.bf16 %v430
      %v473 = vunpack.c.l.bf16 %v431
      %v474 = vunpack.c.h.bf16 %v431
      %v475 = vunpack.c.l.bf16 %v432
      %v476 = vunpack.c.h.bf16 %v432
      %v477 = vunpack.c.l.bf16 %v433
      %v478 = vunpack.c.h.bf16 %v433
      %v479 = vunpack.c.l.bf16 %v434
      %v480 = vunpack.c.h.bf16 %v434
      %v481 = vunpack.c.l.bf16 %v435
      %v482 = vunpack.c.h.bf16 %v435
      %v483 = vunpack.c.l.bf16 %v436
      %v484 = vunpack.c.h.bf16 %v436
      %v485 = vunpack.c.l.bf16 %v437
      %v486 = vunpack.c.h.bf16 %v437
      %v487 = vunpack.c.l.bf16 %v438
      %v488 = vunpack.c.h.bf16 %v438
      %v489 = vunpack.c.l.bf16 %v439
      %v490 = vunpack.c.h.bf16 %v439
      %v491 = vunpack.c.l.bf16 %v440
      %v492 = vunpack.c.h.bf16 %v440
      %v493 = vunpack.c.l.bf16 %v441
      %v494 = vunpack.c.h.bf16 %v441
      %v495 = vunpack.c.l.bf16 %v442
      %v496 = vunpack.c.h.bf16 %v442
      %v497 = vunpack.c.l.bf16 %v443
      %v498 = vunpack.c.h.bf16 %v443
      %v499 = vunpack.c.l.bf16 %v444
      %v500 = vunpack.c.h.bf16 %v444
      %v501 = vunpack.c.l.bf16 %v445
      %v502 = vunpack.c.h.bf16 %v445
      %v503 = vunpack.c.l.bf16 %v446
      %v504 = vunpack.c.h.bf16 %v446
      %v505 = vunpack.c.l.bf16 %v447
      %v506 = vunpack.c.h.bf16 %v447
      %v507 = vunpack.c.l.bf16 %v448
      %v508 = vunpack.c.h.bf16 %v448
      %v509 = vunpack.c.l.bf16 %v449
      %v510 = vunpack.c.h.bf16 %v449
      %v511 = vunpack.c.l.bf16 %v450
      %v512 = vunpack.c.h.bf16 %v450
      %v513 = vunpack.c.l.bf16 %v451
      %v514 = vunpack.c.h.bf16 %v451
      %v515 = vunpack.c.l.bf16 %v452
      %v516 = vunpack.c.h.bf16 %v452
      %v517 = vld [vmem:[%s1] sm:$0xff]
      %v518 = vld [vmem:[%s1 + $0x8] sm:$0xff]
      %v519 = vld [vmem:[%s1 + $0x10] sm:$0xff]
      %v520 = vld [vmem:[%s1 + $0x18] sm:$0xff]
      %v521 = vld [vmem:[%s1 + $0x20] sm:$0xff]
      %v522 = vld [vmem:[%s1 + $0x28] sm:$0xff]
      %v523 = vld [vmem:[%s1 + $0x30] sm:$0xff]
      %v524 = vld [vmem:[%s1 + $0x38] sm:$0xff]
      %v525 = vld [vmem:[%s1 + $0x40] sm:$0xff]
      %v526 = vld [vmem:[%s1 + $0x48] sm:$0xff]
      %v527 = vld [vmem:[%s1 + $0x50] sm:$0xff]
      %v528 = vld [vmem:[%s1 + $0x58] sm:$0xff]
      %v529 = vld [vmem:[%s1 + $0x60] sm:$0xff]
      %v530 = vld [vmem:[%s1 + $0x68] sm:$0xff]
      %v531 = vld [vmem:[%s1 + $0x70] sm:$0xff]
      %v532 = vld [vmem:[%s1 + $0x78] sm:$0xff]
      %v533 = vld [vmem:[%s1 + $0x80] sm:$0xff]
      %v534 = vld [vmem:[%s1 + $0x88] sm:$0xff]
      %v535 = vld [vmem:[%s1 + $0x90] sm:$0xff]
      %v536 = vld [vmem:[%s1 + $0x98] sm:$0xff]
      %v537 = vld [vmem:[%s1 + $0xa0] sm:$0xff]
      %v538 = vld [vmem:[%s1 + $0xa8] sm:$0xff]
      %v539 = vld [vmem:[%s1 + $0xb0] sm:$0xff]
      %v540 = vld [vmem:[%s1 + $0xb8] sm:$0xff]
      %v541 = vld [vmem:[%s1 + $0xc0] sm:$0xff]
      %v542 = vld [vmem:[%s1 + $0xc8] sm:$0xff]
      %v543 = vld [vmem:[%s1 + $0xd0] sm:$0xff]
      %v544 = vld [vmem:[%s1 + $0xd8] sm:$0xff]
      %v545 = vld [vmem:[%s1 + $0xe0] sm:$0xff]
      %v546 = vld [vmem:[%s1 + $0xe8] sm:$0xff]
      %v547 = vld [vmem:[%s1 + $0xf0] sm:$0xff]
      %v548 = vld [vmem:[%s1 + $0xf8] sm:$0xff]
      %v549 = vld [vmem:[%s1 + $0x100] sm:$0xff]
      %v550 = vld [vmem:[%s1 + $0x108] sm:$0xff]
      %v551 = vld [vmem:[%s1 + $0x110] sm:$0xff]
      %v552 = vld [vmem:[%s1 + $0x118] sm:$0xff]
      %v553 = vld [vmem:[%s1 + $0x120] sm:$0xff]
      %v554 = vld [vmem:[%s1 + $0x128] sm:$0xff]
      %v555 = vld [vmem:[%s1 + $0x130] sm:$0xff]
      %v556 = vld [vmem:[%s1 + $0x138] sm:$0xff]
      %v557 = vld [vmem:[%s1 + $0x140] sm:$0xff]
      %v558 = vld [vmem:[%s1 + $0x148] sm:$0xff]
      %v559 = vld [vmem:[%s1 + $0x150] sm:$0xff]
      %v560 = vld [vmem:[%s1 + $0x158] sm:$0xff]
      %v561 = vld [vmem:[%s1 + $0x160] sm:$0xff]
      %v562 = vld [vmem:[%s1 + $0x168] sm:$0xff]
      %v563 = vld [vmem:[%s1 + $0x170] sm:$0xff]
      %v564 = vld [vmem:[%s1 + $0x178] sm:$0xff]
      %v565 = vld [vmem:[%s1 + $0x180] sm:$0xff]
      %v566 = vld [vmem:[%s1 + $0x188] sm:$0xff]
      %v567 = vld [vmem:[%s1 + $0x190] sm:$0xff]
      %v568 = vld [vmem:[%s1 + $0x198] sm:$0xff]
      %v569 = vld [vmem:[%s1 + $0x1a0] sm:$0xff]
      %v570 = vld [vmem:[%s1 + $0x1a8] sm:$0xff]
      %v571 = vld [vmem:[%s1 + $0x1b0] sm:$0xff]
      %v572 = vld [vmem:[%s1 + $0x1b8] sm:$0xff]
      %v573 = vld [vmem:[%s1 + $0x1c0] sm:$0xff]
      %v574 = vld [vmem:[%s1 + $0x1c8] sm:$0xff]
      %v575 = vld [vmem:[%s1 + $0x1d0] sm:$0xff]
      %v576 = vld [vmem:[%s1 + $0x1d8] sm:$0xff]
      %v577 = vld [vmem:[%s1 + $0x1e0] sm:$0xff]
      %v578 = vld [vmem:[%s1 + $0x1e8] sm:$0xff]
      %v579 = vld [vmem:[%s1 + $0x1f0] sm:$0xff]
      %v580 = vld [vmem:[%s1 + $0x1f8] sm:$0xff]
      %v581 = vld [vmem:[%s1 + $0x200] sm:$0xff]
      %v582 = vld [vmem:[%s1 + $0x208] sm:$0xff]
      %v583 = vld [vmem:[%s1 + $0x210] sm:$0xff]
      %v584 = vld [vmem:[%s1 + $0x218] sm:$0xff]
      %v585 = vld [vmem:[%s1 + $0x220] sm:$0xff]
      %v586 = vld [vmem:[%s1 + $0x228] sm:$0xff]
      %v587 = vld [vmem:[%s1 + $0x230] sm:$0xff]
      %v588 = vld [vmem:[%s1 + $0x238] sm:$0xff]
      %v589 = vld [vmem:[%s1 + $0x240] sm:$0xff]
      %v590 = vld [vmem:[%s1 + $0x248] sm:$0xff]
      %v591 = vld [vmem:[%s1 + $0x250] sm:$0xff]
      %v592 = vld [vmem:[%s1 + $0x258] sm:$0xff]
      %v593 = vld [vmem:[%s1 + $0x260] sm:$0xff]
      %v594 = vld [vmem:[%s1 + $0x268] sm:$0xff]
      %v595 = vld [vmem:[%s1 + $0x270] sm:$0xff]
      %v596 = vld [vmem:[%s1 + $0x278] sm:$0xff]
      %v597 = vld [vmem:[%s1 + $0x280] sm:$0xff]
      %v598 = vld [vmem:[%s1 + $0x288] sm:$0xff]
      %v599 = vld [vmem:[%s1 + $0x290] sm:$0xff]
      %v600 = vld [vmem:[%s1 + $0x298] sm:$0xff]
      %v601 = vld [vmem:[%s1 + $0x2a0] sm:$0xff]
      %v602 = vld [vmem:[%s1 + $0x2a8] sm:$0xff]
      %v603 = vld [vmem:[%s1 + $0x2b0] sm:$0xff]
      %v604 = vld [vmem:[%s1 + $0x2b8] sm:$0xff]
      %v605 = vld [vmem:[%s1 + $0x2c0] sm:$0xff]
      %v606 = vld [vmem:[%s1 + $0x2c8] sm:$0xff]
      %v607 = vld [vmem:[%s1 + $0x2d0] sm:$0xff]
      %v608 = vld [vmem:[%s1 + $0x2d8] sm:$0xff]
      %v609 = vld [vmem:[%s1 + $0x2e0] sm:$0xff]
      %v610 = vld [vmem:[%s1 + $0x2e8] sm:$0xff]
      %v611 = vld [vmem:[%s1 + $0x2f0] sm:$0xff]
      %v612 = vld [vmem:[%s1 + $0x2f8] sm:$0xff]
      %v613 = vld [vmem:[%s1 + $0x300] sm:$0xff]
      %v614 = vld [vmem:[%s1 + $0x308] sm:$0xff]
      %v615 = vld [vmem:[%s1 + $0x310] sm:$0xff]
      %v616 = vld [vmem:[%s1 + $0x318] sm:$0xff]
      %v617 = vld [vmem:[%s1 + $0x320] sm:$0xff]
      %v618 = vld [vmem:[%s1 + $0x328] sm:$0xff]
      %v619 = vld [vmem:[%s1 + $0x330] sm:$0xff]
      %v620 = vld [vmem:[%s1 + $0x338] sm:$0xff]
      %v621 = vld [vmem:[%s1 + $0x340] sm:$0xff]
      %v622 = vld [vmem:[%s1 + $0x348] sm:$0xff]
      %v623 = vld [vmem:[%s1 + $0x350] sm:$0xff]
      %v624 = vld [vmem:[%s1 + $0x358] sm:$0xff]
      %v625 = vld [vmem:[%s1 + $0x360] sm:$0xff]
      %v626 = vld [vmem:[%s1 + $0x368] sm:$0xff]
      %v627 = vld [vmem:[%s1 + $0x370] sm:$0xff]
      %v628 = vld [vmem:[%s1 + $0x378] sm:$0xff]
      %v629 = vld [vmem:[%s1 + $0x380] sm:$0xff]
      %v630 = vld [vmem:[%s1 + $0x388] sm:$0xff]
      %v631 = vld [vmem:[%s1 + $0x390] sm:$0xff]
      %v632 = vld [vmem:[%s1 + $0x398] sm:$0xff]
      %v633 = vld [vmem:[%s1 + $0x3a0] sm:$0xff]
      %v634 = vld [vmem:[%s1 + $0x3a8] sm:$0xff]
      %v635 = vld [vmem:[%s1 + $0x3b0] sm:$0xff]
      %v636 = vld [vmem:[%s1 + $0x3b8] sm:$0xff]
      %v637 = vld [vmem:[%s1 + $0x3c0] sm:$0xff]
      %v638 = vld [vmem:[%s1 + $0x3c8] sm:$0xff]
      %v639 = vld [vmem:[%s1 + $0x3d0] sm:$0xff]
      %v640 = vld [vmem:[%s1 + $0x3d8] sm:$0xff]
      %v641 = vld [vmem:[%s1 + $0x3e0] sm:$0xff]
      %v642 = vld [vmem:[%s1 + $0x3e8] sm:$0xff]
      %v643 = vld [vmem:[%s1 + $0x3f0] sm:$0xff]
      %v644 = vld [vmem:[%s1 + $0x3f8] sm:$0xff]
      %v645 = vld [vmem:[%s1 + $0x400] sm:$0xff]
      %v646 = vld [vmem:[%s1 + $0x408] sm:$0xff]
      %v647 = vld [vmem:[%s1 + $0x410] sm:$0xff]
      %v648 = vld [vmem:[%s1 + $0x418] sm:$0xff]
      %v649 = vld [vmem:[%s1 + $0x420] sm:$0xff]
      %v650 = vld [vmem:[%s1 + $0x428] sm:$0xff]
      %v651 = vld [vmem:[%s1 + $0x430] sm:$0xff]
      %v652 = vld [vmem:[%s1 + $0x438] sm:$0xff]
      %v653 = vld [vmem:[%s1 + $0x440] sm:$0xff]
      %v654 = vld [vmem:[%s1 + $0x448] sm:$0xff]
      %v655 = vld [vmem:[%s1 + $0x450] sm:$0xff]
      %v656 = vld [vmem:[%s1 + $0x458] sm:$0xff]
      %v657 = vld [vmem:[%s1 + $0x460] sm:$0xff]
      %v658 = vld [vmem:[%s1 + $0x468] sm:$0xff]
      %v659 = vld [vmem:[%s1 + $0x470] sm:$0xff]
      %v660 = vld [vmem:[%s1 + $0x478] sm:$0xff]
      %v661 = vld [vmem:[%s1 + $0x480] sm:$0xff]
      %v662 = vld [vmem:[%s1 + $0x488] sm:$0xff]
      %v663 = vld [vmem:[%s1 + $0x490] sm:$0xff]
      %v664 = vld [vmem:[%s1 + $0x498] sm:$0xff]
      %v665 = vld [vmem:[%s1 + $0x4a0] sm:$0xff]
      %v666 = vld [vmem:[%s1 + $0x4a8] sm:$0xff]
      %v667 = vld [vmem:[%s1 + $0x4b0] sm:$0xff]
      %v668 = vld [vmem:[%s1 + $0x4b8] sm:$0xff]
      %v669 = vld [vmem:[%s1 + $0x4c0] sm:$0xff]
      %v670 = vld [vmem:[%s1 + $0x4c8] sm:$0xff]
      %v671 = vld [vmem:[%s1 + $0x4d0] sm:$0xff]
      %v672 = vld [vmem:[%s1 + $0x4d8] sm:$0xff]
      %v673 = vld [vmem:[%s1 + $0x4e0] sm:$0xff]
      %v674 = vld [vmem:[%s1 + $0x4e8] sm:$0xff]
      %v675 = vld [vmem:[%s1 + $0x4f0] sm:$0xff]
      %v676 = vld [vmem:[%s1 + $0x4f8] sm:$0xff]
      %v677 = vld [vmem:[%s1 + $0x500] sm:$0xff]
      %v678 = vld [vmem:[%s1 + $0x508] sm:$0xff]
      %v679 = vld [vmem:[%s1 + $0x510] sm:$0xff]
      %v680 = vld [vmem:[%s1 + $0x518] sm:$0xff]
      %v681 = vld [vmem:[%s1 + $0x520] sm:$0xff]
      %v682 = vld [vmem:[%s1 + $0x528] sm:$0xff]
      %v683 = vld [vmem:[%s1 + $0x530] sm:$0xff]
      %v684 = vld [vmem:[%s1 + $0x538] sm:$0xff]
      %v685 = vld [vmem:[%s1 + $0x540] sm:$0xff]
      %v686 = vld [vmem:[%s1 + $0x548] sm:$0xff]
      %v687 = vld [vmem:[%s1 + $0x550] sm:$0xff]
      %v688 = vld [vmem:[%s1 + $0x558] sm:$0xff]
      %v689 = vld [vmem:[%s1 + $0x560] sm:$0xff]
      %v690 = vld [vmem:[%s1 + $0x568] sm:$0xff]
      %v691 = vld [vmem:[%s1 + $0x570] sm:$0xff]
      %v692 = vld [vmem:[%s1 + $0x578] sm:$0xff]
      %v693 = vld [vmem:[%s1 + $0x580] sm:$0xff]
      %v694 = vld [vmem:[%s1 + $0x588] sm:$0xff]
      %v695 = vld [vmem:[%s1 + $0x590] sm:$0xff]
      %v696 = vld [vmem:[%s1 + $0x598] sm:$0xff]
      %v697 = vld [vmem:[%s1 + $0x5a0] sm:$0xff]
      %v698 = vld [vmem:[%s1 + $0x5a8] sm:$0xff]
      %v699 = vld [vmem:[%s1 + $0x5b0] sm:$0xff]
      %v700 = vld [vmem:[%s1 + $0x5b8] sm:$0xff]
      %v701 = vld [vmem:[%s1 + $0x5c0] sm:$0xff]
      %v702 = vld [vmem:[%s1 + $0x5c8] sm:$0xff]
      %v703 = vld [vmem:[%s1 + $0x5d0] sm:$0xff]
      %v704 = vld [vmem:[%s1 + $0x5d8] sm:$0xff]
      %v705 = vld [vmem:[%s1 + $0x5e0] sm:$0xff]
      %v706 = vld [vmem:[%s1 + $0x5e8] sm:$0xff]
      %v707 = vld [vmem:[%s1 + $0x5f0] sm:$0xff]
      %v708 = vld [vmem:[%s1 + $0x5f8] sm:$0xff]
      %709 = vmatprep.subr.mxu0 %v608
      %710 = vmatpush1.msra.mxu0 %v607
      %711 = vmatprep.subr.mxu0 %v602
      %712 = vmatpush1.msra.mxu0 %v601
      %713 = vmatprep.subr.mxu0 %v596
      %714 = vmatpush1.msra.mxu0 %v595
      %715 = vmatprep.subr.mxu0 %v590
      %716 = vmatpush1.msra.mxu0 %v589
      %717 = vmatprep.subr.mxu0 %v584
      %718 = vmatpush1.msra.mxu0 %v583
      %719 = vmatprep.subr.mxu0 %v578
      %720 = vmatpush1.msra.mxu0 %v577
      %721 = vmatprep.subr.mxu0 %v572
      %722 = vmatpush1.msra.mxu0 %v571
      %723 = vmatprep.subr.mxu0 %v566
      %724 = vmatpush1.msra.mxu0 %v565
      %725 = vmatprep.subr.mxu0 %v560
      %726 = vmatpush1.msra.mxu0 %v559
      %727 = vmatprep.subr.mxu0 %v554
      %728 = vmatpush1.msra.mxu0 %v553
      %729 = vmatprep.subr.mxu0 %v548
      %730 = vmatpush1.msra.mxu0 %v547
      %731 = vmatprep.subr.mxu0 %v542
      %732 = vmatpush1.msra.mxu0 %v541
      %733 = vmatprep.subr.mxu0 %v536
      %734 = vmatpush1.msra.mxu0 %v535
      %735 = vmatprep.subr.mxu0 %v530
      %736 = vmatpush1.msra.mxu0 %v529
      %737 = vmatprep.subr.mxu0 %v524
      %738 = vmatpush1.msra.mxu0 %v523
      %739 = vmatprep.subr.mxu0 %v518
      %740 = vmatpush1.msra.mxu0 %v517
      %741 = vmatprep.subr.mxu0 %v704
      %742 = vmatpush2.msra.mxu0 %v703
      %743 = vmatprep.subr.mxu0 %v698
      %744 = vmatpush2.msra.mxu0 %v697
      %745 = vmatprep.subr.mxu0 %v692
      %746 = vmatpush2.msra.mxu0 %v691
      %747 = vmatprep.subr.mxu0 %v686
      %748 = vmatpush2.msra.mxu0 %v685
      %749 = vmatprep.subr.mxu0 %v680
      %750 = vmatpush2.msra.mxu0 %v679
      %751 = vmatprep.subr.mxu0 %v674
      %752 = vmatpush2.msra.mxu0 %v673
      %753 = vmatprep.subr.mxu0 %v668
      %754 = vmatpush2.msra.mxu0 %v667
      %755 = vmatprep.subr.mxu0 %v662
      %756 = vmatpush2.msra.mxu0 %v661
      %757 = vmatprep.subr.mxu0 %v656
      %758 = vmatpush2.msra.mxu0 %v655
      %759 = vmatprep.subr.mxu0 %v650
      %760 = vmatpush2.msra.mxu0 %v649
      %761 = vmatprep.subr.mxu0 %v644
      %762 = vmatpush2.msra.mxu0 %v643
      %763 = vmatprep.subr.mxu0 %v638
      %764 = vmatpush2.msra.mxu0 %v637
      %765 = vmatprep.subr.mxu0 %v632
      %766 = vmatpush2.msra.mxu0 %v631
      %767 = vmatprep.subr.mxu0 %v626
      %768 = vmatpush2.msra.mxu0 %v625
      %769 = vmatprep.subr.mxu0 %v620
      %770 = vmatpush2.msra.mxu0 %v619
      %771 = vmatprep.subr.mxu0 %v614
      %772 = vmatpush2.msra.mxu0 %v613
      %773 = vmatprep.mubr.f32.mxu0 %v342
      %774 = vmatmul.mubr.f32.gmra.mxu0 %v341
      %v775 = vpop.f32.mrf.mxu0
      %v776 = vadd.f32 0.0, %v775
      %v777 = vpop.f32.mrf.mxu0
      %v778 = vadd.f32 0.0, %v777
      %779 = vmatprep.mubr.f32.mxu0 %v344
      %780 = vmatmul.mubr.f32.gmra.mxu0 %v343
      %v781 = vpop.f32.mrf.mxu0
      %v782 = vadd.f32 0.0, %v781
      %v783 = vpop.f32.mrf.mxu0
      %v784 = vadd.f32 0.0, %v783
      %785 = vmatprep.mubr.f32.mxu0 %v346
      %786 = vmatmul.mubr.f32.gmra.mxu0 %v345
      %v787 = vpop.f32.mrf.mxu0
      %v788 = vadd.f32 0.0, %v787
      %v789 = vpop.f32.mrf.mxu0
      %v790 = vadd.f32 0.0, %v789
      %791 = vmatprep.mubr.f32.mxu0 %v348
      %792 = vmatmul.mubr.f32.gmra.mxu0 %v347
      %v793 = vpop.f32.mrf.mxu0
      %v794 = vadd.f32 0.0, %v793
      %v795 = vpop.f32.mrf.mxu0
      %v796 = vadd.f32 0.0, %v795
      %797 = vmatprep.mubr.f32.mxu0 %v350
      %798 = vmatmul.mubr.f32.gmra.mxu0 %v349
      %v799 = vpop.f32.mrf.mxu0
      %v800 = vadd.f32 0.0, %v799
      %v801 = vpop.f32.mrf.mxu0
      %v802 = vadd.f32 0.0, %v801
      %803 = vmatprep.mubr.f32.mxu0 %v352
      %804 = vmatmul.mubr.f32.gmra.mxu0 %v351
      %v805 = vpop.f32.mrf.mxu0
      %v806 = vadd.f32 0.0, %v805
      %v807 = vpop.f32.mrf.mxu0
      %v808 = vadd.f32 0.0, %v807
      %809 = vmatprep.mubr.f32.mxu0 %v354
      %810 = vmatmul.mubr.f32.gmra.mxu0 %v353
      %v811 = vpop.f32.mrf.mxu0
      %v812 = vadd.f32 0.0, %v811
      %v813 = vpop.f32.mrf.mxu0
      %v814 = vadd.f32 0.0, %v813
      %815 = vmatprep.mubr.f32.mxu0 %v356
      %816 = vmatmul.mubr.f32.gmra.mxu0 %v355
      %v817 = vpop.f32.mrf.mxu0
      %v818 = vadd.f32 0.0, %v817
      %v819 = vpop.f32.mrf.mxu0
      %v820 = vadd.f32 0.0, %v819
      %821 = vmatprep.mubr.f32.mxu0 %v358
      %822 = vmatmul.mubr.f32.gmra.mxu0 %v357
      %v823 = vpop.f32.mrf.mxu0
      %v824 = vadd.f32 0.0, %v823
      %v825 = vpop.f32.mrf.mxu0
      %v826 = vadd.f32 0.0, %v825
      %827 = vmatprep.mubr.f32.mxu0 %v360
      %828 = vmatmul.mubr.f32.gmra.mxu0 %v359
      %v829 = vpop.f32.mrf.mxu0
      %v830 = vadd.f32 0.0, %v829
      %v831 = vpop.f32.mrf.mxu0
      %v832 = vadd.f32 0.0, %v831
      %833 = vmatprep.mubr.f32.mxu0 %v362
      %834 = vmatmul.mubr.f32.gmra.mxu0 %v361
      %v835 = vpop.f32.mrf.mxu0
      %v836 = vadd.f32 0.0, %v835
      %v837 = vpop.f32.mrf.mxu0
      %v838 = vadd.f32 0.0, %v837
      %839 = vmatprep.mubr.f32.mxu0 %v364
      %840 = vmatmul.mubr.f32.gmra.mxu0 %v363
      %v841 = vpop.f32.mrf.mxu0
      %v842 = vadd.f32 0.0, %v841
      %v843 = vpop.f32.mrf.mxu0
      %v844 = vadd.f32 0.0, %v843
      %845 = vmatprep.mubr.f32.mxu0 %v366
      %846 = vmatmul.mubr.f32.gmra.mxu0 %v365
      %v847 = vpop.f32.mrf.mxu0
      %v848 = vadd.f32 0.0, %v847
      %v849 = vpop.f32.mrf.mxu0
      %v850 = vadd.f32 0.0, %v849
      %851 = vmatprep.mubr.f32.mxu0 %v368
      %852 = vmatmul.mubr.f32.gmra.mxu0 %v367
      %v853 = vpop.f32.mrf.mxu0
      %v854 = vadd.f32 0.0, %v853
      %v855 = vpop.f32.mrf.mxu0
      %v856 = vadd.f32 0.0, %v855
      %857 = vmatprep.mubr.f32.mxu0 %v370
      %858 = vmatmul.mubr.f32.gmra.mxu0 %v369
      %v859 = vpop.f32.mrf.mxu0
      %v860 = vadd.f32 0.0, %v859
      %v861 = vpop.f32.mrf.mxu0
      %v862 = vadd.f32 0.0, %v861
      %863 = vmatprep.mubr.f32.mxu0 %v372
      %864 = vmatmul.mubr.f32.gmra.mxu0 %v371
      %v865 = vpop.f32.mrf.mxu0
      %v866 = vadd.f32 0.0, %v865
      %v867 = vpop.f32.mrf.mxu0
      %v868 = vadd.f32 0.0, %v867
      %869 = vdwg.mxu0
      %870 = vmatprep.subr.mxu0 %v610
      %871 = vmatpush1.msra.mxu0 %v609
      %872 = vmatprep.subr.mxu0 %v604
      %873 = vmatpush1.msra.mxu0 %v603
      %874 = vmatprep.subr.mxu0 %v598
      %875 = vmatpush1.msra.mxu0 %v597
      %876 = vmatprep.subr.mxu0 %v592
      %877 = vmatpush1.msra.mxu0 %v591
      %878 = vmatprep.subr.mxu0 %v586
      %879 = vmatpush1.msra.mxu0 %v585
      %880 = vmatprep.subr.mxu0 %v580
      %881 = vmatpush1.msra.mxu0 %v579
      %882 = vmatprep.subr.mxu0 %v574
      %883 = vmatpush1.msra.mxu0 %v573
      %884 = vmatprep.subr.mxu0 %v568
      %885 = vmatpush1.msra.mxu0 %v567
      %886 = vmatprep.subr.mxu0 %v562
      %887 = vmatpush1.msra.mxu0 %v561
      %888 = vmatprep.subr.mxu0 %v556
      %889 = vmatpush1.msra.mxu0 %v555
      %890 = vmatprep.subr.mxu0 %v550
      %891 = vmatpush1.msra.mxu0 %v549
      %892 = vmatprep.subr.mxu0 %v544
      %893 = vmatpush1.msra.mxu0 %v543
      %894 = vmatprep.subr.mxu0 %v538
      %895 = vmatpush1.msra.mxu0 %v537
      %896 = vmatprep.subr.mxu0 %v532
      %897 = vmatpush1.msra.mxu0 %v531
      %898 = vmatprep.subr.mxu0 %v526
      %899 = vmatpush1.msra.mxu0 %v525
      %900 = vmatprep.subr.mxu0 %v520
      %901 = vmatpush1.msra.mxu0 %v519
      %902 = vmatprep.subr.mxu0 %v706
      %903 = vmatpush2.msra.mxu0 %v705
      %904 = vmatprep.subr.mxu0 %v700
      %905 = vmatpush2.msra.mxu0 %v699
      %906 = vmatprep.subr.mxu0 %v694
      %907 = vmatpush2.msra.mxu0 %v693
      %908 = vmatprep.subr.mxu0 %v688
      %909 = vmatpush2.msra.mxu0 %v687
      %910 = vmatprep.subr.mxu0 %v682
      %911 = vmatpush2.msra.mxu0 %v681
      %912 = vmatprep.subr.mxu0 %v676
      %913 = vmatpush2.msra.mxu0 %v675
      %914 = vmatprep.subr.mxu0 %v670
      %915 = vmatpush2.msra.mxu0 %v669
      %916 = vmatprep.subr.mxu0 %v664
      %917 = vmatpush2.msra.mxu0 %v663
      %918 = vmatprep.subr.mxu0 %v658
      %919 = vmatpush2.msra.mxu0 %v657
      %920 = vmatprep.subr.mxu0 %v652
      %921 = vmatpush2.msra.mxu0 %v651
      %922 = vmatprep.subr.mxu0 %v646
      %923 = vmatpush2.msra.mxu0 %v645
      %924 = vmatprep.subr.mxu0 %v640
      %925 = vmatpush2.msra.mxu0 %v639
      %926 = vmatprep.subr.mxu0 %v634
      %927 = vmatpush2.msra.mxu0 %v633
      %928 = vmatprep.subr.mxu0 %v628
      %929 = vmatpush2.msra.mxu0 %v627
      %930 = vmatprep.subr.mxu0 %v622
      %931 = vmatpush2.msra.mxu0 %v621
      %932 = vmatprep.subr.mxu0 %v616
      %933 = vmatpush2.msra.mxu0 %v615
      %934 = vmatprep.mubr.f32.mxu0 %v342
      %935 = vmatmul.mubr.f32.gmra.mxu0 %v341
      %v936 = vpop.f32.mrf.mxu0
      %v937 = vadd.f32 0.0, %v936
      %v938 = vpop.f32.mrf.mxu0
      %v939 = vadd.f32 0.0, %v938
      %940 = vmatprep.mubr.f32.mxu0 %v344
      %941 = vmatmul.mubr.f32.gmra.mxu0 %v343
      %v942 = vpop.f32.mrf.mxu0
      %v943 = vadd.f32 0.0, %v942
      %v944 = vpop.f32.mrf.mxu0
      %v945 = vadd.f32 0.0, %v944
      %946 = vmatprep.mubr.f32.mxu0 %v346
      %947 = vmatmul.mubr.f32.gmra.mxu0 %v345
      %v948 = vpop.f32.mrf.mxu0
      %v949 = vadd.f32 0.0, %v948
      %v950 = vpop.f32.mrf.mxu0
      %v951 = vadd.f32 0.0, %v950
      %952 = vmatprep.mubr.f32.mxu0 %v348
      %953 = vmatmul.mubr.f32.gmra.mxu0 %v347
      %v954 = vpop.f32.mrf.mxu0
      %v955 = vadd.f32 0.0, %v954
      %v956 = vpop.f32.mrf.mxu0
      %v957 = vadd.f32 0.0, %v956
      %958 = vmatprep.mubr.f32.mxu0 %v350
      %959 = vmatmul.mubr.f32.gmra.mxu0 %v349
      %v960 = vpop.f32.mrf.mxu0
      %v961 = vadd.f32 0.0, %v960
      %v962 = vpop.f32.mrf.mxu0
      %v963 = vadd.f32 0.0, %v962
      %964 = vmatprep.mubr.f32.mxu0 %v352
      %965 = vmatmul.mubr.f32.gmra.mxu0 %v351
      %v966 = vpop.f32.mrf.mxu0
      %v967 = vadd.f32 0.0, %v966
      %v968 = vpop.f32.mrf.mxu0
      %v969 = vadd.f32 0.0, %v968
      %970 = vmatprep.mubr.f32.mxu0 %v354
      %971 = vmatmul.mubr.f32.gmra.mxu0 %v353
      %v972 = vpop.f32.mrf.mxu0
      %v973 = vadd.f32 0.0, %v972
      %v974 = vpop.f32.mrf.mxu0
      %v975 = vadd.f32 0.0, %v974
      %976 = vmatprep.mubr.f32.mxu0 %v356
      %977 = vmatmul.mubr.f32.gmra.mxu0 %v355
      %v978 = vpop.f32.mrf.mxu0
      %v979 = vadd.f32 0.0, %v978
      %v980 = vpop.f32.mrf.mxu0
      %v981 = vadd.f32 0.0, %v980
      %982 = vmatprep.mubr.f32.mxu0 %v358
      %983 = vmatmul.mubr.f32.gmra.mxu0 %v357
      %v984 = vpop.f32.mrf.mxu0
      %v985 = vadd.f32 0.0, %v984
      %v986 = vpop.f32.mrf.mxu0
      %v987 = vadd.f32 0.0, %v986
      %988 = vmatprep.mubr.f32.mxu0 %v360
      %989 = vmatmul.mubr.f32.gmra.mxu0 %v359
      %v990 = vpop.f32.mrf.mxu0
      %v991 = vadd.f32 0.0, %v990
      %v992 = vpop.f32.mrf.mxu0
      %v993 = vadd.f32 0.0, %v992
      %994 = vmatprep.mubr.f32.mxu0 %v362
      %995 = vmatmul.mubr.f32.gmra.mxu0 %v361
      %v996 = vpop.f32.mrf.mxu0
      %v997 = vadd.f32 0.0, %v996
      %v998 = vpop.f32.mrf.mxu0
      %v999 = vadd.f32 0.0, %v998
      %1000 = vmatprep.mubr.f32.mxu0 %v364
      %1001 = vmatmul.mubr.f32.gmra.mxu0 %v363
      %v1002 = vpop.f32.mrf.mxu0
      %v1003 = vadd.f32 0.0, %v1002
      %v1004 = vpop.f32.mrf.mxu0
      %v1005 = vadd.f32 0.0, %v1004
      %1006 = vmatprep.mubr.f32.mxu0 %v366
      %1007 = vmatmul.mubr.f32.gmra.mxu0 %v365
      %v1008 = vpop.f32.mrf.mxu0
      %v1009 = vadd.f32 0.0, %v1008
      %v1010 = vpop.f32.mrf.mxu0
      %v1011 = vadd.f32 0.0, %v1010
      %1012 = vmatprep.mubr.f32.mxu0 %v368
      %1013 = vmatmul.mubr.f32.gmra.mxu0 %v367
      %v1014 = vpop.f32.mrf.mxu0
      %v1015 = vadd.f32 0.0, %v1014
      %v1016 = vpop.f32.mrf.mxu0
      %v1017 = vadd.f32 0.0, %v1016
      %1018 = vmatprep.mubr.f32.mxu0 %v370
      %1019 = vmatmul.mubr.f32.gmra.mxu0 %v369
      %v1020 = vpop.f32.mrf.mxu0
      %v1021 = vadd.f32 0.0, %v1020
      %v1022 = vpop.f32.mrf.mxu0
      %v1023 = vadd.f32 0.0, %v1022
      %1024 = vmatprep.mubr.f32.mxu0 %v372
      %1025 = vmatmul.mubr.f32.gmra.mxu0 %v371
      %v1026 = vpop.f32.mrf.mxu0
      %v1027 = vadd.f32 0.0, %v1026
      %v1028 = vpop.f32.mrf.mxu0
      %v1029 = vadd.f32 0.0, %v1028
      %1030 = vdwg.mxu0
      %1031 = vmatprep.subr.mxu0 %v612
      %1032 = vmatpush1.msra.mxu0 %v611
      %1033 = vmatprep.subr.mxu0 %v606
      %1034 = vmatpush1.msra.mxu0 %v605
      %1035 = vmatprep.subr.mxu0 %v600
      %1036 = vmatpush1.msra.mxu0 %v599
      %1037 = vmatprep.subr.mxu0 %v594
      %1038 = vmatpush1.msra.mxu0 %v593
      %1039 = vmatprep.subr.mxu0 %v588
      %1040 = vmatpush1.msra.mxu0 %v587
      %1041 = vmatprep.subr.mxu0 %v582
      %1042 = vmatpush1.msra.mxu0 %v581
      %1043 = vmatprep.subr.mxu0 %v576
      %1044 = vmatpush1.msra.mxu0 %v575
      %1045 = vmatprep.subr.mxu0 %v570
      %1046 = vmatpush1.msra.mxu0 %v569
      %1047 = vmatprep.subr.mxu0 %v564
      %1048 = vmatpush1.msra.mxu0 %v563
      %1049 = vmatprep.subr.mxu0 %v558
      %1050 = vmatpush1.msra.mxu0 %v557
      %1051 = vmatprep.subr.mxu0 %v552
      %1052 = vmatpush1.msra.mxu0 %v551
      %1053 = vmatprep.subr.mxu0 %v546
      %1054 = vmatpush1.msra.mxu0 %v545
      %1055 = vmatprep.subr.mxu0 %v540
      %1056 = vmatpush1.msra.mxu0 %v539
      %1057 = vmatprep.subr.mxu0 %v534
      %1058 = vmatpush1.msra.mxu0 %v533
      %1059 = vmatprep.subr.mxu0 %v528
      %1060 = vmatpush1.msra.mxu0 %v527
      %1061 = vmatprep.subr.mxu0 %v522
      %1062 = vmatpush1.msra.mxu0 %v521
      %1063 = vmatprep.subr.mxu0 %v708
      %1064 = vmatpush2.msra.mxu0 %v707
      %1065 = vmatprep.subr.mxu0 %v702
      %1066 = vmatpush2.msra.mxu0 %v701
      %1067 = vmatprep.subr.mxu0 %v696
      %1068 = vmatpush2.msra.mxu0 %v695
      %1069 = vmatprep.subr.mxu0 %v690
      %1070 = vmatpush2.msra.mxu0 %v689
      %1071 = vmatprep.subr.mxu0 %v684
      %1072 = vmatpush2.msra.mxu0 %v683
      %1073 = vmatprep.subr.mxu0 %v678
      %1074 = vmatpush2.msra.mxu0 %v677
      %1075 = vmatprep.subr.mxu0 %v672
      %1076 = vmatpush2.msra.mxu0 %v671
      %1077 = vmatprep.subr.mxu0 %v666
      %1078 = vmatpush2.msra.mxu0 %v665
      %1079 = vmatprep.subr.mxu0 %v660
      %1080 = vmatpush2.msra.mxu0 %v659
      %1081 = vmatprep.subr.mxu0 %v654
      %1082 = vmatpush2.msra.mxu0 %v653
      %1083 = vmatprep.subr.mxu0 %v648
      %1084 = vmatpush2.msra.mxu0 %v647
      %1085 = vmatprep.subr.mxu0 %v642
      %1086 = vmatpush2.msra.mxu0 %v641
      %1087 = vmatprep.subr.mxu0 %v636
      %1088 = vmatpush2.msra.mxu0 %v635
      %1089 = vmatprep.subr.mxu0 %v630
      %1090 = vmatpush2.msra.mxu0 %v629
      %1091 = vmatprep.subr.mxu0 %v624
      %1092 = vmatpush2.msra.mxu0 %v623
      %1093 = vmatprep.subr.mxu0 %v618
      %1094 = vmatpush2.msra.mxu0 %v617
      %1095 = vmatprep.mubr.f32.mxu0 %v342
      %1096 = vmatmul.mubr.f32.gmra.mxu0 %v341
      %v1097 = vpop.f32.mrf.mxu0
      %v1098 = vadd.f32 0.0, %v1097
      %v1099 = vpop.f32.mrf.mxu0
      %v1100 = vadd.f32 0.0, %v1099
      %1101 = vmatprep.mubr.f32.mxu0 %v344
      %1102 = vmatmul.mubr.f32.gmra.mxu0 %v343
      %v1103 = vpop.f32.mrf.mxu0
      %v1104 = vadd.f32 0.0, %v1103
      %v1105 = vpop.f32.mrf.mxu0
      %v1106 = vadd.f32 0.0, %v1105
      %1107 = vmatprep.mubr.f32.mxu0 %v346
      %1108 = vmatmul.mubr.f32.gmra.mxu0 %v345
      %v1109 = vpop.f32.mrf.mxu0
      %v1110 = vadd.f32 0.0, %v1109
      %v1111 = vpop.f32.mrf.mxu0
      %v1112 = vadd.f32 0.0, %v1111
      %1113 = vmatprep.mubr.f32.mxu0 %v348
      %1114 = vmatmul.mubr.f32.gmra.mxu0 %v347
      %v1115 = vpop.f32.mrf.mxu0
      %v1116 = vadd.f32 0.0, %v1115
      %v1117 = vpop.f32.mrf.mxu0
      %v1118 = vadd.f32 0.0, %v1117
      %1119 = vmatprep.mubr.f32.mxu0 %v350
      %1120 = vmatmul.mubr.f32.gmra.mxu0 %v349
      %v1121 = vpop.f32.mrf.mxu0
      %v1122 = vadd.f32 0.0, %v1121
      %v1123 = vpop.f32.mrf.mxu0
      %v1124 = vadd.f32 0.0, %v1123
      %1125 = vmatprep.mubr.f32.mxu0 %v352
      %1126 = vmatmul.mubr.f32.gmra.mxu0 %v351
      %v1127 = vpop.f32.mrf.mxu0
      %v1128 = vadd.f32 0.0, %v1127
      %v1129 = vpop.f32.mrf.mxu0
      %v1130 = vadd.f32 0.0, %v1129
      %1131 = vmatprep.mubr.f32.mxu0 %v354
      %1132 = vmatmul.mubr.f32.gmra.mxu0 %v353
      %v1133 = vpop.f32.mrf.mxu0
      %v1134 = vadd.f32 0.0, %v1133
      %v1135 = vpop.f32.mrf.mxu0
      %v1136 = vadd.f32 0.0, %v1135
      %1137 = vmatprep.mubr.f32.mxu0 %v356
      %1138 = vmatmul.mubr.f32.gmra.mxu0 %v355
      %v1139 = vpop.f32.mrf.mxu0
      %v1140 = vadd.f32 0.0, %v1139
      %v1141 = vpop.f32.mrf.mxu0
      %v1142 = vadd.f32 0.0, %v1141
      %1143 = vmatprep.mubr.f32.mxu0 %v358
      %1144 = vmatmul.mubr.f32.gmra.mxu0 %v357
      %v1145 = vpop.f32.mrf.mxu0
      %v1146 = vadd.f32 0.0, %v1145
      %v1147 = vpop.f32.mrf.mxu0
      %v1148 = vadd.f32 0.0, %v1147
      %1149 = vmatprep.mubr.f32.mxu0 %v360
      %1150 = vmatmul.mubr.f32.gmra.mxu0 %v359
      %v1151 = vpop.f32.mrf.mxu0
      %v1152 = vadd.f32 0.0, %v1151
      %v1153 = vpop.f32.mrf.mxu0
      %v1154 = vadd.f32 0.0, %v1153
      %1155 = vmatprep.mubr.f32.mxu0 %v362
      %1156 = vmatmul.mubr.f32.gmra.mxu0 %v361
      %v1157 = vpop.f32.mrf.mxu0
      %v1158 = vadd.f32 0.0, %v1157
      %v1159 = vpop.f32.mrf.mxu0
      %v1160 = vadd.f32 0.0, %v1159
      %1161 = vmatprep.mubr.f32.mxu0 %v364
      %1162 = vmatmul.mubr.f32.gmra.mxu0 %v363
      %v1163 = vpop.f32.mrf.mxu0
      %v1164 = vadd.f32 0.0, %v1163
      %v1165 = vpop.f32.mrf.mxu0
      %v1166 = vadd.f32 0.0, %v1165
      %1167 = vmatprep.mubr.f32.mxu0 %v366
      %1168 = vmatmul.mubr.f32.gmra.mxu0 %v365
      %v1169 = vpop.f32.mrf.mxu0
      %v1170 = vadd.f32 0.0, %v1169
      %v1171 = vpop.f32.mrf.mxu0
      %v1172 = vadd.f32 0.0, %v1171
      %1173 = vmatprep.mubr.f32.mxu0 %v368
      %1174 = vmatmul.mubr.f32.gmra.mxu0 %v367
      %v1175 = vpop.f32.mrf.mxu0
      %v1176 = vadd.f32 0.0, %v1175
      %v1177 = vpop.f32.mrf.mxu0
      %v1178 = vadd.f32 0.0, %v1177
      %1179 = vmatprep.mubr.f32.mxu0 %v370
      %1180 = vmatmul.mubr.f32.gmra.mxu0 %v369
      %v1181 = vpop.f32.mrf.mxu0
      %v1182 = vadd.f32 0.0, %v1181
      %v1183 = vpop.f32.mrf.mxu0
      %v1184 = vadd.f32 0.0, %v1183
      %1185 = vmatprep.mubr.f32.mxu0 %v372
      %1186 = vmatmul.mubr.f32.gmra.mxu0 %v371
      %v1187 = vpop.f32.mrf.mxu0
      %v1188 = vadd.f32 0.0, %v1187
      %v1189 = vpop.f32.mrf.mxu0
      %v1190 = vadd.f32 0.0, %v1189
      %1191 = vdwg.mxu0
      %1192 = vmatprep.subr.mxu0 %v868
      %1193 = vmatpush1.msra.mxu0 %v866
      %1194 = vmatprep.subr.mxu0 %v862
      %1195 = vmatpush1.msra.mxu0 %v860
      %1196 = vmatprep.subr.mxu0 %v856
      %1197 = vmatpush1.msra.mxu0 %v854
      %1198 = vmatprep.subr.mxu0 %v850
      %1199 = vmatpush1.msra.mxu0 %v848
      %1200 = vmatprep.subr.mxu0 %v844
      %1201 = vmatpush1.msra.mxu0 %v842
      %1202 = vmatprep.subr.mxu0 %v838
      %1203 = vmatpush1.msra.mxu0 %v836
      %1204 = vmatprep.subr.mxu0 %v832
      %1205 = vmatpush1.msra.mxu0 %v830
      %1206 = vmatprep.subr.mxu0 %v826
      %1207 = vmatpush1.msra.mxu0 %v824
      %1208 = vmatprep.subr.mxu0 %v820
      %1209 = vmatpush1.msra.mxu0 %v818
      %1210 = vmatprep.subr.mxu0 %v814
      %1211 = vmatpush1.msra.mxu0 %v812
      %1212 = vmatprep.subr.mxu0 %v808
      %1213 = vmatpush1.msra.mxu0 %v806
      %1214 = vmatprep.subr.mxu0 %v802
      %1215 = vmatpush1.msra.mxu0 %v800
      %1216 = vmatprep.subr.mxu0 %v796
      %1217 = vmatpush1.msra.mxu0 %v794
      %1218 = vmatprep.subr.mxu0 %v790
      %1219 = vmatpush1.msra.mxu0 %v788
      %1220 = vmatprep.subr.mxu0 %v784
      %1221 = vmatpush1.msra.mxu0 %v782
      %1222 = vmatprep.subr.mxu0 %v778
      %1223 = vmatpush1.msra.mxu0 %v776
      %1224 = vmatprep.subr.mxu0 %v1190
      %1225 = vmatpush2.msra.mxu0 %v1188
      %1226 = vmatprep.subr.mxu0 %v1184
      %1227 = vmatpush2.msra.mxu0 %v1182
      %1228 = vmatprep.subr.mxu0 %v1178
      %1229 = vmatpush2.msra.mxu0 %v1176
      %1230 = vmatprep.subr.mxu0 %v1172
      %1231 = vmatpush2.msra.mxu0 %v1170
      %1232 = vmatprep.subr.mxu0 %v1166
      %1233 = vmatpush2.msra.mxu0 %v1164
      %1234 = vmatprep.subr.mxu0 %v1160
      %1235 = vmatpush2.msra.mxu0 %v1158
      %1236 = vmatprep.subr.mxu0 %v1154
      %1237 = vmatpush2.msra.mxu0 %v1152
      %1238 = vmatprep.subr.mxu0 %v1148
      %1239 = vmatpush2.msra.mxu0 %v1146
      %1240 = vmatprep.subr.mxu0 %v1142
      %1241 = vmatpush2.msra.mxu0 %v1140
      %1242 = vmatprep.subr.mxu0 %v1136
      %1243 = vmatpush2.msra.mxu0 %v1134
      %1244 = vmatprep.subr.mxu0 %v1130
      %1245 = vmatpush2.msra.mxu0 %v1128
      %1246 = vmatprep.subr.mxu0 %v1124
      %1247 = vmatpush2.msra.mxu0 %v1122
      %1248 = vmatprep.subr.mxu0 %v1118
      %1249 = vmatpush2.msra.mxu0 %v1116
      %1250 = vmatprep.subr.mxu0 %v1112
      %1251 = vmatpush2.msra.mxu0 %v1110
      %1252 = vmatprep.subr.mxu0 %v1106
      %1253 = vmatpush2.msra.mxu0 %v1104
      %1254 = vmatprep.subr.mxu0 %v1100
      %1255 = vmatpush2.msra.mxu0 %v1098
      %1256 = vmatprep.mubr.f32.mxu0 %v390
      %1257 = vmatmul.mubr.f32.gmra.mxu0 %v389
      %v1258 = vpop.f32.mrf.mxu0
      %v1259 = vadd.f32 %v937, %v1258
      %v1260 = vpop.f32.mrf.mxu0
      %v1261 = vadd.f32 %v939, %v1260
      %1262 = vmatprep.mubr.f32.mxu0 %v392
      %1263 = vmatmul.mubr.f32.gmra.mxu0 %v391
      %v1264 = vpop.f32.mrf.mxu0
      %v1265 = vadd.f32 %v943, %v1264
      %v1266 = vpop.f32.mrf.mxu0
      %v1267 = vadd.f32 %v945, %v1266
      %1268 = vmatprep.mubr.f32.mxu0 %v394
      %1269 = vmatmul.mubr.f32.gmra.mxu0 %v393
      %v1270 = vpop.f32.mrf.mxu0
      %v1271 = vadd.f32 %v949, %v1270
      %v1272 = vpop.f32.mrf.mxu0
      %v1273 = vadd.f32 %v951, %v1272
      %1274 = vmatprep.mubr.f32.mxu0 %v396
      %1275 = vmatmul.mubr.f32.gmra.mxu0 %v395
      %v1276 = vpop.f32.mrf.mxu0
      %v1277 = vadd.f32 %v955, %v1276
      %v1278 = vpop.f32.mrf.mxu0
      %v1279 = vadd.f32 %v957, %v1278
      %1280 = vmatprep.mubr.f32.mxu0 %v398
      %1281 = vmatmul.mubr.f32.gmra.mxu0 %v397
      %v1282 = vpop.f32.mrf.mxu0
      %v1283 = vadd.f32 %v961, %v1282
      %v1284 = vpop.f32.mrf.mxu0
      %v1285 = vadd.f32 %v963, %v1284
      %1286 = vmatprep.mubr.f32.mxu0 %v400
      %1287 = vmatmul.mubr.f32.gmra.mxu0 %v399
      %v1288 = vpop.f32.mrf.mxu0
      %v1289 = vadd.f32 %v967, %v1288
      %v1290 = vpop.f32.mrf.mxu0
      %v1291 = vadd.f32 %v969, %v1290
      %1292 = vmatprep.mubr.f32.mxu0 %v402
      %1293 = vmatmul.mubr.f32.gmra.mxu0 %v401
      %v1294 = vpop.f32.mrf.mxu0
      %v1295 = vadd.f32 %v973, %v1294
      %v1296 = vpop.f32.mrf.mxu0
      %v1297 = vadd.f32 %v975, %v1296
      %1298 = vmatprep.mubr.f32.mxu0 %v404
      %1299 = vmatmul.mubr.f32.gmra.mxu0 %v403
      %v1300 = vpop.f32.mrf.mxu0
      %v1301 = vadd.f32 %v979, %v1300
      %v1302 = vpop.f32.mrf.mxu0
      %v1303 = vadd.f32 %v981, %v1302
      %1304 = vmatprep.mubr.f32.mxu0 %v406
      %1305 = vmatmul.mubr.f32.gmra.mxu0 %v405
      %v1306 = vpop.f32.mrf.mxu0
      %v1307 = vadd.f32 %v985, %v1306
      %v1308 = vpop.f32.mrf.mxu0
      %v1309 = vadd.f32 %v987, %v1308
      %1310 = vmatprep.mubr.f32.mxu0 %v408
      %1311 = vmatmul.mubr.f32.gmra.mxu0 %v407
      %v1312 = vpop.f32.mrf.mxu0
      %v1313 = vadd.f32 %v991, %v1312
      %v1314 = vpop.f32.mrf.mxu0
      %v1315 = vadd.f32 %v993, %v1314
      %1316 = vmatprep.mubr.f32.mxu0 %v410
      %1317 = vmatmul.mubr.f32.gmra.mxu0 %v409
      %v1318 = vpop.f32.mrf.mxu0
      %v1319 = vadd.f32 %v997, %v1318
      %v1320 = vpop.f32.mrf.mxu0
      %v1321 = vadd.f32 %v999, %v1320
      %1322 = vmatprep.mubr.f32.mxu0 %v412
      %1323 = vmatmul.mubr.f32.gmra.mxu0 %v411
      %v1324 = vpop.f32.mrf.mxu0
      %v1325 = vadd.f32 %v1003, %v1324
      %v1326 = vpop.f32.mrf.mxu0
      %v1327 = vadd.f32 %v1005, %v1326
      %1328 = vmatprep.mubr.f32.mxu0 %v414
      %1329 = vmatmul.mubr.f32.gmra.mxu0 %v413
      %v1330 = vpop.f32.mrf.mxu0
      %v1331 = vadd.f32 %v1009, %v1330
      %v1332 = vpop.f32.mrf.mxu0
      %v1333 = vadd.f32 %v1011, %v1332
      %1334 = vmatprep.mubr.f32.mxu0 %v416
      %1335 = vmatmul.mubr.f32.gmra.mxu0 %v415
      %v1336 = vpop.f32.mrf.mxu0
      %v1337 = vadd.f32 %v1015, %v1336
      %v1338 = vpop.f32.mrf.mxu0
      %v1339 = vadd.f32 %v1017, %v1338
      %1340 = vmatprep.mubr.f32.mxu0 %v418
      %1341 = vmatmul.mubr.f32.gmra.mxu0 %v417
      %v1342 = vpop.f32.mrf.mxu0
      %v1343 = vadd.f32 %v1021, %v1342
      %v1344 = vpop.f32.mrf.mxu0
      %v1345 = vadd.f32 %v1023, %v1344
      %1346 = vmatprep.mubr.f32.mxu0 %v420
      %1347 = vmatmul.mubr.f32.gmra.mxu0 %v419
      %v1348 = vpop.f32.mrf.mxu0
      %v1349 = vadd.f32 %v1027, %v1348
      %v1350 = vpop.f32.mrf.mxu0
      %v1351 = vadd.f32 %v1029, %v1350
      %1352 = vdwg.mxu0
      %v1353 = vld [vmem:[%s2] sm:$0x3]
      %v1355 = vlaneseq
      %v1356 = vshrl.u32 %v1355, 7
      %v1357 = vsub.s32 0, %v1356
      %v1358 = vrot.slane %v1353, %v1357
      %v1359 = vlaneseq
      %v1360 = vshrl.u32 %v1359, 7
      %v1361 = vsub.s32 1, %v1360
      %v1362 = vrot.slane %v1353, %v1361
      %v1365 = vadd.f32 %v1259, %v1358
      %v1366 = vadd.f32 %v1261, %v1362
      %v1367 = vadd.f32 %v1265, %v1358
      %v1368 = vadd.f32 %v1267, %v1362
      %v1369 = vadd.f32 %v1271, %v1358
      %v1370 = vadd.f32 %v1273, %v1362
      %v1371 = vadd.f32 %v1277, %v1358
      %v1372 = vadd.f32 %v1279, %v1362
      %v1373 = vadd.f32 %v1283, %v1358
      %v1374 = vadd.f32 %v1285, %v1362
      %v1375 = vadd.f32 %v1289, %v1358
      %v1376 = vadd.f32 %v1291, %v1362
      %v1377 = vadd.f32 %v1295, %v1358
      %v1378 = vadd.f32 %v1297, %v1362
      %v1379 = vadd.f32 %v1301, %v1358
      %v1380 = vadd.f32 %v1303, %v1362
      %v1381 = vadd.f32 %v1307, %v1358
      %v1382 = vadd.f32 %v1309, %v1362
      %v1383 = vadd.f32 %v1313, %v1358
      %v1384 = vadd.f32 %v1315, %v1362
      %v1385 = vadd.f32 %v1319, %v1358
      %v1386 = vadd.f32 %v1321, %v1362
      %v1387 = vadd.f32 %v1325, %v1358
      %v1388 = vadd.f32 %v1327, %v1362
      %v1389 = vadd.f32 %v1331, %v1358
      %v1390 = vadd.f32 %v1333, %v1362
      %v1391 = vadd.f32 %v1337, %v1358
      %v1392 = vadd.f32 %v1339, %v1362
      %v1393 = vadd.f32 %v1343, %v1358
      %v1394 = vadd.f32 %v1345, %v1362
      %v1395 = vadd.f32 %v1349, %v1358
      %v1396 = vadd.f32 %v1351, %v1362
      %v1397 = vadd.f32 %v1365, %v1367
      %v1398 = vadd.f32 %v1397, %v1369
      %v1399 = vadd.f32 %v1398, %v1371
      %v1400 = vrot.slane %v1399, 4
      %v1401 = vadd.f32 %v1399, %v1400
      %v1402 = vrot.slane %v1401, 2
      %v1403 = vadd.f32 %v1401, %v1402
      %v1404 = vrot.slane %v1403, 1
      %v1405 = vadd.f32 %v1403, %v1404
      %v1406 = vadd.f32 %v1366, %v1368
      %v1407 = vadd.f32 %v1406, %v1370
      %v1408 = vadd.f32 %v1407, %v1372
      %v1409 = vrot.slane %v1408, 4
      %v1410 = vadd.f32 %v1408, %v1409
      %v1411 = vrot.slane %v1410, 2
      %v1412 = vadd.f32 %v1410, %v1411
      %v1413 = vrot.slane %v1412, 1
      %v1414 = vadd.f32 %v1412, %v1413
      %v1415 = vadd.f32 %v1373, %v1375
      %v1416 = vadd.f32 %v1415, %v1377
      %v1417 = vadd.f32 %v1416, %v1379
      %v1418 = vrot.slane %v1417, 4
      %v1419 = vadd.f32 %v1417, %v1418
      %v1420 = vrot.slane %v1419, 2
      %v1421 = vadd.f32 %v1419, %v1420
      %v1422 = vrot.slane %v1421, 1
      %v1423 = vadd.f32 %v1421, %v1422
      %v1424 = vadd.f32 %v1374, %v1376
      %v1425 = vadd.f32 %v1424, %v1378
      %v1426 = vadd.f32 %v1425, %v1380
      %v1427 = vrot.slane %v1426, 4
      %v1428 = vadd.f32 %v1426, %v1427
      %v1429 = vrot.slane %v1428, 2
      %v1430 = vadd.f32 %v1428, %v1429
      %v1431 = vrot.slane %v1430, 1
      %v1432 = vadd.f32 %v1430, %v1431
      %v1433 = vadd.f32 %v1381, %v1383
      %v1434 = vadd.f32 %v1433, %v1385
      %v1435 = vadd.f32 %v1434, %v1387
      %v1436 = vrot.slane %v1435, 4
      %v1437 = vadd.f32 %v1435, %v1436
      %v1438 = vrot.slane %v1437, 2
      %v1439 = vadd.f32 %v1437, %v1438
      %v1440 = vrot.slane %v1439, 1
      %v1441 = vadd.f32 %v1439, %v1440
      %v1442 = vadd.f32 %v1382, %v1384
      %v1443 = vadd.f32 %v1442, %v1386
      %v1444 = vadd.f32 %v1443, %v1388
      %v1445 = vrot.slane %v1444, 4
      %v1446 = vadd.f32 %v1444, %v1445
      %v1447 = vrot.slane %v1446, 2
      %v1448 = vadd.f32 %v1446, %v1447
      %v1449 = vrot.slane %v1448, 1
      %v1450 = vadd.f32 %v1448, %v1449
      %v1451 = vadd.f32 %v1389, %v1391
      %v1452 = vadd.f32 %v1451, %v1393
      %v1453 = vadd.f32 %v1452, %v1395
      %v1454 = vrot.slane %v1453, 4
      %v1455 = vadd.f32 %v1453, %v1454
      %v1456 = vrot.slane %v1455, 2
      %v1457 = vadd.f32 %v1455, %v1456
      %v1458 = vrot.slane %v1457, 1
      %v1459 = vadd.f32 %v1457, %v1458
      %v1460 = vadd.f32 %v1390, %v1392
      %v1461 = vadd.f32 %v1460, %v1394
      %v1462 = vadd.f32 %v1461, %v1396
      %v1463 = vrot.slane %v1462, 4
      %v1464 = vadd.f32 %v1462, %v1463
      %v1465 = vrot.slane %v1464, 2
      %v1466 = vadd.f32 %v1464, %v1465
      %v1467 = vrot.slane %v1466, 1
      %v1468 = vadd.f32 %v1466, %v1467
      %v1469 = vmul.f32 %v1365, %v1365
      %v1470 = vmul.f32 %v1366, %v1366
      %v1471 = vmul.f32 %v1367, %v1367
      %v1472 = vmul.f32 %v1368, %v1368
      %v1473 = vmul.f32 %v1369, %v1369
      %v1474 = vmul.f32 %v1370, %v1370
      %v1475 = vmul.f32 %v1371, %v1371
      %v1476 = vmul.f32 %v1372, %v1372
      %v1477 = vmul.f32 %v1373, %v1373
      %v1478 = vmul.f32 %v1374, %v1374
      %v1479 = vmul.f32 %v1375, %v1375
      %v1480 = vmul.f32 %v1376, %v1376
      %v1481 = vmul.f32 %v1377, %v1377
      %v1482 = vmul.f32 %v1378, %v1378
      %v1483 = vmul.f32 %v1379, %v1379
      %v1484 = vmul.f32 %v1380, %v1380
      %v1485 = vmul.f32 %v1381, %v1381
      %v1486 = vmul.f32 %v1382, %v1382
      %v1487 = vmul.f32 %v1383, %v1383
      %v1488 = vmul.f32 %v1384, %v1384
      %v1489 = vmul.f32 %v1385, %v1385
      %v1490 = vmul.f32 %v1386, %v1386
      %v1491 = vmul.f32 %v1387, %v1387
      %v1492 = vmul.f32 %v1388, %v1388
      %v1493 = vmul.f32 %v1389, %v1389
      %v1494 = vmul.f32 %v1390, %v1390
      %v1495 = vmul.f32 %v1391, %v1391
      %v1496 = vmul.f32 %v1392, %v1392
      %v1497 = vmul.f32 %v1393, %v1393
      %v1498 = vmul.f32 %v1394, %v1394
      %v1499 = vmul.f32 %v1395, %v1395
      %v1500 = vmul.f32 %v1396, %v1396
      %v1501 = vadd.f32 %v1469, %v1471
      %v1502 = vadd.f32 %v1501, %v1473
      %v1503 = vadd.f32 %v1502, %v1475
      %v1504 = vrot.slane %v1503, 4
      %v1505 = vadd.f32 %v1503, %v1504
      %v1506 = vrot.slane %v1505, 2
      %v1507 = vadd.f32 %v1505, %v1506
      %v1508 = vrot.slane %v1507, 1
      %v1509 = vadd.f32 %v1507, %v1508
      %v1510 = vadd.f32 %v1470, %v1472
      %v1511 = vadd.f32 %v1510, %v1474
      %v1512 = vadd.f32 %v1511, %v1476
      %v1513 = vrot.slane %v1512, 4
      %v1514 = vadd.f32 %v1512, %v1513
      %v1515 = vrot.slane %v1514, 2
      %v1516 = vadd.f32 %v1514, %v1515
      %v1517 = vrot.slane %v1516, 1
      %v1518 = vadd.f32 %v1516, %v1517
      %v1519 = vadd.f32 %v1477, %v1479
      %v1520 = vadd.f32 %v1519, %v1481
      %v1521 = vadd.f32 %v1520, %v1483
      %v1522 = vrot.slane %v1521, 4
      %v1523 = vadd.f32 %v1521, %v1522
      %v1524 = vrot.slane %v1523, 2
      %v1525 = vadd.f32 %v1523, %v1524
      %v1526 = vrot.slane %v1525, 1
      %v1527 = vadd.f32 %v1525, %v1526
      %v1528 = vadd.f32 %v1478, %v1480
      %v1529 = vadd.f32 %v1528, %v1482
      %v1530 = vadd.f32 %v1529, %v1484
      %v1531 = vrot.slane %v1530, 4
      %v1532 = vadd.f32 %v1530, %v1531
      %v1533 = vrot.slane %v1532, 2
      %v1534 = vadd.f32 %v1532, %v1533
      %v1535 = vrot.slane %v1534, 1
      %v1536 = vadd.f32 %v1534, %v1535
      %v1537 = vadd.f32 %v1485, %v1487
      %v1538 = vadd.f32 %v1537, %v1489
      %v1539 = vadd.f32 %v1538, %v1491
      %v1540 = vrot.slane %v1539, 4
      %v1541 = vadd.f32 %v1539, %v1540
      %v1542 = vrot.slane %v1541, 2
      %v1543 = vadd.f32 %v1541, %v1542
      %v1544 = vrot.slane %v1543, 1
      %v1545 = vadd.f32 %v1543, %v1544
      %v1546 = vadd.f32 %v1486, %v1488
      %v1547 = vadd.f32 %v1546, %v1490
      %v1548 = vadd.f32 %v1547, %v1492
      %v1549 = vrot.slane %v1548, 4
      %v1550 = vadd.f32 %v1548, %v1549
      %v1551 = vrot.slane %v1550, 2
      %v1552 = vadd.f32 %v1550, %v1551
      %v1553 = vrot.slane %v1552, 1
      %v1554 = vadd.f32 %v1552, %v1553
      %v1555 = vadd.f32 %v1493, %v1495
      %v1556 = vadd.f32 %v1555, %v1497
      %v1557 = vadd.f32 %v1556, %v1499
      %v1558 = vrot.slane %v1557, 4
      %v1559 = vadd.f32 %v1557, %v1558
      %v1560 = vrot.slane %v1559, 2
      %v1561 = vadd.f32 %v1559, %v1560
      %v1562 = vrot.slane %v1561, 1
      %v1563 = vadd.f32 %v1561, %v1562
      %v1564 = vadd.f32 %v1494, %v1496
      %v1565 = vadd.f32 %v1564, %v1498
      %v1566 = vadd.f32 %v1565, %v1500
      %v1567 = vrot.slane %v1566, 4
      %v1568 = vadd.f32 %v1566, %v1567
      %v1569 = vrot.slane %v1568, 2
      %v1570 = vadd.f32 %v1568, %v1569
      %v1571 = vrot.slane %v1570, 1
      %v1572 = vadd.f32 %v1570, %v1571
      %vm1581 = vcmask 1041409
      %v1582 = vsel %vm1581, %v1423, %v1405
      %vm1583 = vcmask 1042434
      %v1584 = vsel %vm1583, %v1441, %v1582
      %vm1585 = vcmask 1043459
      %v1586 = vsel %vm1585, %v1459, %v1584
      %v1587 = vsel %vm1581, %v1432, %v1414
      %v1588 = vsel %vm1583, %v1450, %v1587
      %v1589 = vsel %vm1585, %v1468, %v1588
      %1592 = vmatprep.subr.mxu0 %v484
      %1593 = vmatpush1.msra.mxu0 %v483
      %1594 = vmatprep.subr.mxu0 %v482
      %1595 = vmatpush1.msra.mxu0 %v481
      %1596 = vmatprep.subr.mxu0 %v480
      %1597 = vmatpush1.msra.mxu0 %v479
      %1598 = vmatprep.subr.mxu0 %v478
      %1599 = vmatpush1.msra.mxu0 %v477
      %1600 = vmatprep.subr.mxu0 %v476
      %1601 = vmatpush1.msra.mxu0 %v475
      %1602 = vmatprep.subr.mxu0 %v474
      %1603 = vmatpush1.msra.mxu0 %v473
      %1604 = vmatprep.subr.mxu0 %v472
      %1605 = vmatpush1.msra.mxu0 %v471
      %1606 = vmatprep.subr.mxu0 %v470
      %1607 = vmatpush1.msra.mxu0 %v469
      %1608 = vmatprep.subr.mxu0 %v468
      %1609 = vmatpush1.msra.mxu0 %v467
      %1610 = vmatprep.subr.mxu0 %v466
      %1611 = vmatpush1.msra.mxu0 %v465
      %1612 = vmatprep.subr.mxu0 %v464
      %1613 = vmatpush1.msra.mxu0 %v463
      %1614 = vmatprep.subr.mxu0 %v462
      %1615 = vmatpush1.msra.mxu0 %v461
      %1616 = vmatprep.subr.mxu0 %v460
      %1617 = vmatpush1.msra.mxu0 %v459
      %1618 = vmatprep.subr.mxu0 %v458
      %1619 = vmatpush1.msra.mxu0 %v457
      %1620 = vmatprep.subr.mxu0 %v456
      %1621 = vmatpush1.msra.mxu0 %v455
      %1622 = vmatprep.subr.mxu0 %v454
      %1623 = vmatpush1.msra.mxu0 %v453
      %1624 = vmatprep.subr.mxu0 %v516
      %1625 = vmatpush2.msra.mxu0 %v515
      %1626 = vmatprep.subr.mxu0 %v514
      %1627 = vmatpush2.msra.mxu0 %v513
      %1628 = vmatprep.subr.mxu0 %v512
      %1629 = vmatpush2.msra.mxu0 %v511
      %1630 = vmatprep.subr.mxu0 %v510
      %1631 = vmatpush2.msra.mxu0 %v509
      %1632 = vmatprep.subr.mxu0 %v508
      %1633 = vmatpush2.msra.mxu0 %v507
      %1634 = vmatprep.subr.mxu0 %v506
      %1635 = vmatpush2.msra.mxu0 %v505
      %1636 = vmatprep.subr.mxu0 %v504
      %1637 = vmatpush2.msra.mxu0 %v503
      %1638 = vmatprep.subr.mxu0 %v502
      %1639 = vmatpush2.msra.mxu0 %v501
      %1640 = vmatprep.subr.mxu0 %v500
      %1641 = vmatpush2.msra.mxu0 %v499
      %1642 = vmatprep.subr.mxu0 %v498
      %1643 = vmatpush2.msra.mxu0 %v497
      %1644 = vmatprep.subr.mxu0 %v496
      %1645 = vmatpush2.msra.mxu0 %v495
      %1646 = vmatprep.subr.mxu0 %v494
      %1647 = vmatpush2.msra.mxu0 %v493
      %1648 = vmatprep.subr.mxu0 %v492
      %1649 = vmatpush2.msra.mxu0 %v491
      %1650 = vmatprep.subr.mxu0 %v490
      %1651 = vmatpush2.msra.mxu0 %v489
      %1652 = vmatprep.subr.mxu0 %v488
      %1653 = vmatpush2.msra.mxu0 %v487
      %1654 = vmatprep.subr.mxu0 %v486
      %1655 = vmatpush2.msra.mxu0 %v485
      %1656 = vmatprep.mubr.f32.mxu0 %v1589
      %1657 = vmatmul.mubr.f32.gmra.mxu0 %v1586
      %v1658 = vpop.f32.mrf.mxu0
      %v1659 = vadd.f32 0.0, %v1658
      %v1660 = vpop.f32.mrf.mxu0
      %v1661 = vadd.f32 0.0, %v1660
      %1662 = vdwg.mxu0
      %v1663 = vmul.f32 %v1659, 0.001953125
      %v1664 = vmul.f32 %v1661, 0.001953125
      %v1673 = vsel %vm1581, %v1527, %v1509
      %v1674 = vsel %vm1583, %v1545, %v1673
      %v1675 = vsel %vm1585, %v1563, %v1674
      %v1676 = vsel %vm1581, %v1536, %v1518
      %v1677 = vsel %vm1583, %v1554, %v1676
      %v1678 = vsel %vm1585, %v1572, %v1677
      %1681 = vmatprep.subr.mxu0 %v484
      %1682 = vmatpush1.msra.mxu0 %v483
      %1683 = vmatprep.subr.mxu0 %v482
      %1684 = vmatpush1.msra.mxu0 %v481
      %1685 = vmatprep.subr.mxu0 %v480
      %1686 = vmatpush1.msra.mxu0 %v479
      %1687 = vmatprep.subr.mxu0 %v478
      %1688 = vmatpush1.msra.mxu0 %v477
      %1689 = vmatprep.subr.mxu0 %v476
      %1690 = vmatpush1.msra.mxu0 %v475
      %1691 = vmatprep.subr.mxu0 %v474
      %1692 = vmatpush1.msra.mxu0 %v473
      %1693 = vmatprep.subr.mxu0 %v472
      %1694 = vmatpush1.msra.mxu0 %v471
      %1695 = vmatprep.subr.mxu0 %v470
      %1696 = vmatpush1.msra.mxu0 %v469
      %1697 = vmatprep.subr.mxu0 %v468
      %1698 = vmatpush1.msra.mxu0 %v467
      %1699 = vmatprep.subr.mxu0 %v466
      %1700 = vmatpush1.msra.mxu0 %v465
      %1701 = vmatprep.subr.mxu0 %v464
      %1702 = vmatpush1.msra.mxu0 %v463
      %1703 = vmatprep.subr.mxu0 %v462
      %1704 = vmatpush1.msra.mxu0 %v461
      %1705 = vmatprep.subr.mxu0 %v460
      %1706 = vmatpush1.msra.mxu0 %v459
      %1707 = vmatprep.subr.mxu0 %v458
      %1708 = vmatpush1.msra.mxu0 %v457
      %1709 = vmatprep.subr.mxu0 %v456
      %1710 = vmatpush1.msra.mxu0 %v455
      %1711 = vmatprep.subr.mxu0 %v454
      %1712 = vmatpush1.msra.mxu0 %v453
      %1713 = vmatprep.subr.mxu0 %v516
      %1714 = vmatpush2.msra.mxu0 %v515
      %1715 = vmatprep.subr.mxu0 %v514
      %1716 = vmatpush2.msra.mxu0 %v513
      %1717 = vmatprep.subr.mxu0 %v512
      %1718 = vmatpush2.msra.mxu0 %v511
      %1719 = vmatprep.subr.mxu0 %v510
      %1720 = vmatpush2.msra.mxu0 %v509
      %1721 = vmatprep.subr.mxu0 %v508
      %1722 = vmatpush2.msra.mxu0 %v507
      %1723 = vmatprep.subr.mxu0 %v506
      %1724 = vmatpush2.msra.mxu0 %v505
      %1725 = vmatprep.subr.mxu0 %v504
      %1726 = vmatpush2.msra.mxu0 %v503
      %1727 = vmatprep.subr.mxu0 %v502
      %1728 = vmatpush2.msra.mxu0 %v501
      %1729 = vmatprep.subr.mxu0 %v500
      %1730 = vmatpush2.msra.mxu0 %v499
      %1731 = vmatprep.subr.mxu0 %v498
      %1732 = vmatpush2.msra.mxu0 %v497
      %1733 = vmatprep.subr.mxu0 %v496
      %1734 = vmatpush2.msra.mxu0 %v495
      %1735 = vmatprep.subr.mxu0 %v494
      %1736 = vmatpush2.msra.mxu0 %v493
      %1737 = vmatprep.subr.mxu0 %v492
      %1738 = vmatpush2.msra.mxu0 %v491
      %1739 = vmatprep.subr.mxu0 %v490
      %1740 = vmatpush2.msra.mxu0 %v489
      %1741 = vmatprep.subr.mxu0 %v488
      %1742 = vmatpush2.msra.mxu0 %v487
      %1743 = vmatprep.subr.mxu0 %v486
      %1744 = vmatpush2.msra.mxu0 %v485
      %1745 = vmatprep.mubr.f32.mxu0 %v1678
      %1746 = vmatmul.mubr.f32.gmra.mxu0 %v1675
      %v1747 = vpop.f32.mrf.mxu0
      %v1748 = vadd.f32 0.0, %v1747
      %v1749 = vpop.f32.mrf.mxu0
      %v1750 = vadd.f32 0.0, %v1749
      %1751 = vdwg.mxu0
      %v1752 = vmul.f32 %v1748, 0.001953125
      %v1753 = vmul.f32 %v1750, 0.001953125
      %v1754 = vmul.f32 %v1663, %v1663
      %v1755 = vmul.f32 %v1664, %v1664
      %v1756 = vsub.f32 %v1752, %v1754
      %v1757 = vsub.f32 %v1753, %v1755
      %v1758 = vadd.f32 %v1756, 1e-05
      %v1759 = vadd.f32 %v1757, 1e-05
      %v1760 = vrsqrt.pop %v1758
      %v1761 = vrsqrt.pop %v1759
      %v1764 = vcombine.low %v1663, %v1664
      %v1766 = vunpack.c.l.s4 1966171168
      %v1767 = vunpack.c.0.s8 %v1766
      %v1768 = vlaneseq
      %v1769 = vshrl.u32 %v1768, 7
      %v1770 = vsub.s32 %v1767, %v1769
      %v1771 = vrot.slane %v1764, %v1770
      %v1772 = vcombine.high %v1771, %v1771
      %v1774 = vunpack.c.l.s4 1966171168
      %v1775 = vunpack.c.0.s8 %v1774
      %v1776 = vlaneseq
      %v1777 = vshrl.u32 %v1776, 7
      %v1778 = vsub.s32 %v1775, %v1777
      %v1779 = vrot.slane %v1771, %v1778
      %v1781 = vunpack.c.l.s4 1966171168
      %v1782 = vunpack.c.0.s8 %v1781
      %v1783 = vlaneseq
      %v1784 = vshrl.u32 %v1783, 7
      %v1785 = vsub.s32 %v1782, %v1784
      %v1786 = vrot.slane %v1772, %v1785
      %v1787 = vcombine.high %v1779, %v1779
      %v1788 = vcombine.high %v1786, %v1786
      %v1789 = vlaneseq
      %v1790 = vshrl.u32 %v1789, 7
      %v1791 = vsub.s32 0, %v1790
      %v1792 = vrot.slane %v1779, %v1791
      %v1793 = vlaneseq
      %v1794 = vshrl.u32 %v1793, 7
      %v1795 = vsub.s32 1, %v1794
      %v1796 = vrot.slane %v1779, %v1795
      %v1797 = vlaneseq
      %v1798 = vshrl.u32 %v1797, 7
      %v1799 = vsub.s32 0, %v1798
      %v1800 = vrot.slane %v1786, %v1799
      %v1801 = vlaneseq
      %v1802 = vshrl.u32 %v1801, 7
      %v1803 = vsub.s32 1, %v1802
      %v1804 = vrot.slane %v1786, %v1803
      %v1805 = vlaneseq
      %v1806 = vshrl.u32 %v1805, 7
      %v1807 = vsub.s32 0, %v1806
      %v1808 = vrot.slane %v1787, %v1807
      %v1809 = vlaneseq
      %v1810 = vshrl.u32 %v1809, 7
      %v1811 = vsub.s32 1, %v1810
      %v1812 = vrot.slane %v1787, %v1811
      %v1813 = vlaneseq
      %v1814 = vshrl.u32 %v1813, 7
      %v1815 = vsub.s32 0, %v1814
      %v1816 = vrot.slane %v1788, %v1815
      %v1817 = vlaneseq
      %v1818 = vshrl.u32 %v1817, 7
      %v1819 = vsub.s32 1, %v1818
      %v1820 = vrot.slane %v1788, %v1819
      %v1829 = vsub.f32 %v1365, %v1792
      %v1830 = vsub.f32 %v1366, %v1796
      %v1831 = vsub.f32 %v1367, %v1792
      %v1832 = vsub.f32 %v1368, %v1796
      %v1833 = vsub.f32 %v1369, %v1792
      %v1834 = vsub.f32 %v1370, %v1796
      %v1835 = vsub.f32 %v1371, %v1792
      %v1836 = vsub.f32 %v1372, %v1796
      %v1837 = vsub.f32 %v1373, %v1800
      %v1838 = vsub.f32 %v1374, %v1804
      %v1839 = vsub.f32 %v1375, %v1800
      %v1840 = vsub.f32 %v1376, %v1804
      %v1841 = vsub.f32 %v1377, %v1800
      %v1842 = vsub.f32 %v1378, %v1804
      %v1843 = vsub.f32 %v1379, %v1800
      %v1844 = vsub.f32 %v1380, %v1804
      %v1845 = vsub.f32 %v1381, %v1808
      %v1846 = vsub.f32 %v1382, %v1812
      %v1847 = vsub.f32 %v1383, %v1808
      %v1848 = vsub.f32 %v1384, %v1812
      %v1849 = vsub.f32 %v1385, %v1808
      %v1850 = vsub.f32 %v1386, %v1812
      %v1851 = vsub.f32 %v1387, %v1808
      %v1852 = vsub.f32 %v1388, %v1812
      %v1853 = vsub.f32 %v1389, %v1816
      %v1854 = vsub.f32 %v1390, %v1820
      %v1855 = vsub.f32 %v1391, %v1816
      %v1856 = vsub.f32 %v1392, %v1820
      %v1857 = vsub.f32 %v1393, %v1816
      %v1858 = vsub.f32 %v1394, %v1820
      %v1859 = vsub.f32 %v1395, %v1816
      %v1860 = vsub.f32 %v1396, %v1820
      %v1863 = vcombine.low %v1760, %v1761
      %v1865 = vunpack.c.l.s4 1966171168
      %v1866 = vunpack.c.0.s8 %v1865
      %v1867 = vlaneseq
      %v1868 = vshrl.u32 %v1867, 7
      %v1869 = vsub.s32 %v1866, %v1868
      %v1870 = vrot.slane %v1863, %v1869
      %v1871 = vcombine.high %v1870, %v1870
      %v1873 = vunpack.c.l.s4 1966171168
      %v1874 = vunpack.c.0.s8 %v1873
      %v1875 = vlaneseq
      %v1876 = vshrl.u32 %v1875, 7
      %v1877 = vsub.s32 %v1874, %v1876
      %v1878 = vrot.slane %v1870, %v1877
      %v1880 = vunpack.c.l.s4 1966171168
      %v1881 = vunpack.c.0.s8 %v1880
      %v1882 = vlaneseq
      %v1883 = vshrl.u32 %v1882, 7
      %v1884 = vsub.s32 %v1881, %v1883
      %v1885 = vrot.slane %v1871, %v1884
      %v1886 = vcombine.high %v1878, %v1878
      %v1887 = vcombine.high %v1885, %v1885
      %v1888 = vlaneseq
      %v1889 = vshrl.u32 %v1888, 7
      %v1890 = vsub.s32 0, %v1889
      %v1891 = vrot.slane %v1878, %v1890
      %v1892 = vlaneseq
      %v1893 = vshrl.u32 %v1892, 7
      %v1894 = vsub.s32 1, %v1893
      %v1895 = vrot.slane %v1878, %v1894
      %v1896 = vlaneseq
      %v1897 = vshrl.u32 %v1896, 7
      %v1898 = vsub.s32 0, %v1897
      %v1899 = vrot.slane %v1885, %v1898
      %v1900 = vlaneseq
      %v1901 = vshrl.u32 %v1900, 7
      %v1902 = vsub.s32 1, %v1901
      %v1903 = vrot.slane %v1885, %v1902
      %v1904 = vlaneseq
      %v1905 = vshrl.u32 %v1904, 7
      %v1906 = vsub.s32 0, %v1905
      %v1907 = vrot.slane %v1886, %v1906
      %v1908 = vlaneseq
      %v1909 = vshrl.u32 %v1908, 7
      %v1910 = vsub.s32 1, %v1909
      %v1911 = vrot.slane %v1886, %v1910
      %v1912 = vlaneseq
      %v1913 = vshrl.u32 %v1912, 7
      %v1914 = vsub.s32 0, %v1913
      %v1915 = vrot.slane %v1887, %v1914
      %v1916 = vlaneseq
      %v1917 = vshrl.u32 %v1916, 7
      %v1918 = vsub.s32 1, %v1917
      %v1919 = vrot.slane %v1887, %v1918
      %v1928 = vmul.f32 %v1829, %v1891
      %v1929 = vmul.f32 %v1830, %v1895
      %v1930 = vmul.f32 %v1831, %v1891
      %v1931 = vmul.f32 %v1832, %v1895
      %v1932 = vmul.f32 %v1833, %v1891
      %v1933 = vmul.f32 %v1834, %v1895
      %v1934 = vmul.f32 %v1835, %v1891
      %v1935 = vmul.f32 %v1836, %v1895
      %v1936 = vmul.f32 %v1837, %v1899
      %v1937 = vmul.f32 %v1838, %v1903
      %v1938 = vmul.f32 %v1839, %v1899
      %v1939 = vmul.f32 %v1840, %v1903
      %v1940 = vmul.f32 %v1841, %v1899
      %v1941 = vmul.f32 %v1842, %v1903
      %v1942 = vmul.f32 %v1843, %v1899
      %v1943 = vmul.f32 %v1844, %v1903
      %v1944 = vmul.f32 %v1845, %v1907
      %v1945 = vmul.f32 %v1846, %v1911
      %v1946 = vmul.f32 %v1847, %v1907
      %v1947 = vmul.f32 %v1848, %v1911
      %v1948 = vmul.f32 %v1849, %v1907
      %v1949 = vmul.f32 %v1850, %v1911
      %v1950 = vmul.f32 %v1851, %v1907
      %v1951 = vmul.f32 %v1852, %v1911
      %v1952 = vmul.f32 %v1853, %v1915
      %v1953 = vmul.f32 %v1854, %v1919
      %v1954 = vmul.f32 %v1855, %v1915
      %v1955 = vmul.f32 %v1856, %v1919
      %v1956 = vmul.f32 %v1857, %v1915
      %v1957 = vmul.f32 %v1858, %v1919
      %v1958 = vmul.f32 %v1859, %v1915
      %v1959 = vmul.f32 %v1860, %v1919
      %v1960 = vmax.f32 %v1928, 0.0
      %v1961 = vmax.f32 %v1929, 0.0
      %v1962 = vmax.f32 %v1930, 0.0
      %v1963 = vmax.f32 %v1931, 0.0
      %v1964 = vmax.f32 %v1932, 0.0
      %v1965 = vmax.f32 %v1933, 0.0
      %v1966 = vmax.f32 %v1934, 0.0
      %v1967 = vmax.f32 %v1935, 0.0
      %v1968 = vmax.f32 %v1936, 0.0
      %v1969 = vmax.f32 %v1937, 0.0
      %v1970 = vmax.f32 %v1938, 0.0
      %v1971 = vmax.f32 %v1939, 0.0
      %v1972 = vmax.f32 %v1940, 0.0
      %v1973 = vmax.f32 %v1941, 0.0
      %v1974 = vmax.f32 %v1942, 0.0
      %v1975 = vmax.f32 %v1943, 0.0
      %v1976 = vmax.f32 %v1944, 0.0
      %v1977 = vmax.f32 %v1945, 0.0
      %v1978 = vmax.f32 %v1946, 0.0
      %v1979 = vmax.f32 %v1947, 0.0
      %v1980 = vmax.f32 %v1948, 0.0
      %v1981 = vmax.f32 %v1949, 0.0
      %v1982 = vmax.f32 %v1950, 0.0
      %v1983 = vmax.f32 %v1951, 0.0
      %v1984 = vmax.f32 %v1952, 0.0
      %v1985 = vmax.f32 %v1953, 0.0
      %v1986 = vmax.f32 %v1954, 0.0
      %v1987 = vmax.f32 %v1955, 0.0
      %v1988 = vmax.f32 %v1956, 0.0
      %v1989 = vmax.f32 %v1957, 0.0
      %v1990 = vmax.f32 %v1958, 0.0
      %v1991 = vmax.f32 %v1959, 0.0
      %v1992 = vld [vmem:[%s3] sm:$0xff]
      %v1993 = vld [vmem:[%s3 + $0x8] sm:$0xff]
      %v1994 = vld [vmem:[%s3 + $0x10] sm:$0xff]
      %v1995 = vld [vmem:[%s3 + $0x18] sm:$0xff]
      %v1996 = vld [vmem:[%s3 + $0x20] sm:$0xff]
      %v1997 = vld [vmem:[%s3 + $0x28] sm:$0xff]
      %v1998 = vld [vmem:[%s3 + $0x30] sm:$0xff]
      %v1999 = vld [vmem:[%s3 + $0x38] sm:$0xff]
      %v2000 = vld [vmem:[%s3 + $0x40] sm:$0xff]
      %v2001 = vld [vmem:[%s3 + $0x48] sm:$0xff]
      %v2002 = vld [vmem:[%s3 + $0x50] sm:$0xff]
      %v2003 = vld [vmem:[%s3 + $0x58] sm:$0xff]
      %v2004 = vld [vmem:[%s3 + $0x60] sm:$0xff]
      %v2005 = vld [vmem:[%s3 + $0x68] sm:$0xff]
      %v2006 = vld [vmem:[%s3 + $0x70] sm:$0xff]
      %v2007 = vld [vmem:[%s3 + $0x78] sm:$0xff]
      %v2008 = vld [vmem:[%s3 + $0x80] sm:$0xff]
      %v2009 = vld [vmem:[%s3 + $0x88] sm:$0xff]
      %v2010 = vld [vmem:[%s3 + $0x90] sm:$0xff]
      %v2011 = vld [vmem:[%s3 + $0x98] sm:$0xff]
      %v2012 = vld [vmem:[%s3 + $0xa0] sm:$0xff]
      %v2013 = vld [vmem:[%s3 + $0xa8] sm:$0xff]
      %v2014 = vld [vmem:[%s3 + $0xb0] sm:$0xff]
      %v2015 = vld [vmem:[%s3 + $0xb8] sm:$0xff]
      %v2016 = vld [vmem:[%s3 + $0xc0] sm:$0xff]
      %v2017 = vld [vmem:[%s3 + $0xc8] sm:$0xff]
      %v2018 = vld [vmem:[%s3 + $0xd0] sm:$0xff]
      %v2019 = vld [vmem:[%s3 + $0xd8] sm:$0xff]
      %v2020 = vld [vmem:[%s3 + $0xe0] sm:$0xff]
      %v2021 = vld [vmem:[%s3 + $0xe8] sm:$0xff]
      %v2022 = vld [vmem:[%s3 + $0xf0] sm:$0xff]
      %v2023 = vld [vmem:[%s3 + $0xf8] sm:$0xff]
      %v2024 = vld [vmem:[%s3 + $0x100] sm:$0xff]
      %v2025 = vld [vmem:[%s3 + $0x108] sm:$0xff]
      %v2026 = vld [vmem:[%s3 + $0x110] sm:$0xff]
      %v2027 = vld [vmem:[%s3 + $0x118] sm:$0xff]
      %v2028 = vld [vmem:[%s3 + $0x120] sm:$0xff]
      %v2029 = vld [vmem:[%s3 + $0x128] sm:$0xff]
      %v2030 = vld [vmem:[%s3 + $0x130] sm:$0xff]
      %v2031 = vld [vmem:[%s3 + $0x138] sm:$0xff]
      %v2032 = vld [vmem:[%s3 + $0x140] sm:$0xff]
      %v2033 = vld [vmem:[%s3 + $0x148] sm:$0xff]
      %v2034 = vld [vmem:[%s3 + $0x150] sm:$0xff]
      %v2035 = vld [vmem:[%s3 + $0x158] sm:$0xff]
      %v2036 = vld [vmem:[%s3 + $0x160] sm:$0xff]
      %v2037 = vld [vmem:[%s3 + $0x168] sm:$0xff]
      %v2038 = vld [vmem:[%s3 + $0x170] sm:$0xff]
      %v2039 = vld [vmem:[%s3 + $0x178] sm:$0xff]
      %v2040 = vld [vmem:[%s3 + $0x180] sm:$0xff]
      %v2041 = vld [vmem:[%s3 + $0x188] sm:$0xff]
      %v2042 = vld [vmem:[%s3 + $0x190] sm:$0xff]
      %v2043 = vld [vmem:[%s3 + $0x198] sm:$0xff]
      %v2044 = vld [vmem:[%s3 + $0x1a0] sm:$0xff]
      %v2045 = vld [vmem:[%s3 + $0x1a8] sm:$0xff]
      %v2046 = vld [vmem:[%s3 + $0x1b0] sm:$0xff]
      %v2047 = vld [vmem:[%s3 + $0x1b8] sm:$0xff]
      %v2048 = vld [vmem:[%s3 + $0x1c0] sm:$0xff]
      %v2049 = vld [vmem:[%s3 + $0x1c8] sm:$0xff]
      %v2050 = vld [vmem:[%s3 + $0x1d0] sm:$0xff]
      %v2051 = vld [vmem:[%s3 + $0x1d8] sm:$0xff]
      %v2052 = vld [vmem:[%s3 + $0x1e0] sm:$0xff]
      %v2053 = vld [vmem:[%s3 + $0x1e8] sm:$0xff]
      %v2054 = vld [vmem:[%s3 + $0x1f0] sm:$0xff]
      %v2055 = vld [vmem:[%s3 + $0x1f8] sm:$0xff]
      %v2056 = vld [vmem:[%s3 + $0x200] sm:$0xff]
      %v2057 = vld [vmem:[%s3 + $0x208] sm:$0xff]
      %v2058 = vld [vmem:[%s3 + $0x210] sm:$0xff]
      %v2059 = vld [vmem:[%s3 + $0x218] sm:$0xff]
      %v2060 = vld [vmem:[%s3 + $0x220] sm:$0xff]
      %v2061 = vld [vmem:[%s3 + $0x228] sm:$0xff]
      %v2062 = vld [vmem:[%s3 + $0x230] sm:$0xff]
      %v2063 = vld [vmem:[%s3 + $0x238] sm:$0xff]
      %v2064 = vld [vmem:[%s3 + $0x240] sm:$0xff]
      %v2065 = vld [vmem:[%s3 + $0x248] sm:$0xff]
      %v2066 = vld [vmem:[%s3 + $0x250] sm:$0xff]
      %v2067 = vld [vmem:[%s3 + $0x258] sm:$0xff]
      %v2068 = vld [vmem:[%s3 + $0x260] sm:$0xff]
      %v2069 = vld [vmem:[%s3 + $0x268] sm:$0xff]
      %v2070 = vld [vmem:[%s3 + $0x270] sm:$0xff]
      %v2071 = vld [vmem:[%s3 + $0x278] sm:$0xff]
      %v2072 = vld [vmem:[%s3 + $0x280] sm:$0xff]
      %v2073 = vld [vmem:[%s3 + $0x288] sm:$0xff]
      %v2074 = vld [vmem:[%s3 + $0x290] sm:$0xff]
      %v2075 = vld [vmem:[%s3 + $0x298] sm:$0xff]
      %v2076 = vld [vmem:[%s3 + $0x2a0] sm:$0xff]
      %v2077 = vld [vmem:[%s3 + $0x2a8] sm:$0xff]
      %v2078 = vld [vmem:[%s3 + $0x2b0] sm:$0xff]
      %v2079 = vld [vmem:[%s3 + $0x2b8] sm:$0xff]
      %v2080 = vld [vmem:[%s3 + $0x2c0] sm:$0xff]
      %v2081 = vld [vmem:[%s3 + $0x2c8] sm:$0xff]
      %v2082 = vld [vmem:[%s3 + $0x2d0] sm:$0xff]
      %v2083 = vld [vmem:[%s3 + $0x2d8] sm:$0xff]
      %v2084 = vld [vmem:[%s3 + $0x2e0] sm:$0xff]
      %v2085 = vld [vmem:[%s3 + $0x2e8] sm:$0xff]
      %v2086 = vld [vmem:[%s3 + $0x2f0] sm:$0xff]
      %v2087 = vld [vmem:[%s3 + $0x2f8] sm:$0xff]
      %v2088 = vld [vmem:[%s3 + $0x300] sm:$0xff]
      %v2089 = vld [vmem:[%s3 + $0x308] sm:$0xff]
      %v2090 = vld [vmem:[%s3 + $0x310] sm:$0xff]
      %v2091 = vld [vmem:[%s3 + $0x318] sm:$0xff]
      %v2092 = vld [vmem:[%s3 + $0x320] sm:$0xff]
      %v2093 = vld [vmem:[%s3 + $0x328] sm:$0xff]
      %v2094 = vld [vmem:[%s3 + $0x330] sm:$0xff]
      %v2095 = vld [vmem:[%s3 + $0x338] sm:$0xff]
      %v2096 = vld [vmem:[%s3 + $0x340] sm:$0xff]
      %v2097 = vld [vmem:[%s3 + $0x348] sm:$0xff]
      %v2098 = vld [vmem:[%s3 + $0x350] sm:$0xff]
      %v2099 = vld [vmem:[%s3 + $0x358] sm:$0xff]
      %v2100 = vld [vmem:[%s3 + $0x360] sm:$0xff]
      %v2101 = vld [vmem:[%s3 + $0x368] sm:$0xff]
      %v2102 = vld [vmem:[%s3 + $0x370] sm:$0xff]
      %v2103 = vld [vmem:[%s3 + $0x378] sm:$0xff]
      %v2104 = vld [vmem:[%s3 + $0x380] sm:$0xff]
      %v2105 = vld [vmem:[%s3 + $0x388] sm:$0xff]
      %v2106 = vld [vmem:[%s3 + $0x390] sm:$0xff]
      %v2107 = vld [vmem:[%s3 + $0x398] sm:$0xff]
      %v2108 = vld [vmem:[%s3 + $0x3a0] sm:$0xff]
      %v2109 = vld [vmem:[%s3 + $0x3a8] sm:$0xff]
      %v2110 = vld [vmem:[%s3 + $0x3b0] sm:$0xff]
      %v2111 = vld [vmem:[%s3 + $0x3b8] sm:$0xff]
      %v2112 = vld [vmem:[%s3 + $0x3c0] sm:$0xff]
      %v2113 = vld [vmem:[%s3 + $0x3c8] sm:$0xff]
      %v2114 = vld [vmem:[%s3 + $0x3d0] sm:$0xff]
      %v2115 = vld [vmem:[%s3 + $0x3d8] sm:$0xff]
      %v2116 = vld [vmem:[%s3 + $0x3e0] sm:$0xff]
      %v2117 = vld [vmem:[%s3 + $0x3e8] sm:$0xff]
      %v2118 = vld [vmem:[%s3 + $0x3f0] sm:$0xff]
      %v2119 = vld [vmem:[%s3 + $0x3f8] sm:$0xff]
      %v2120 = vld [vmem:[%s3 + $0x400] sm:$0xff]
      %v2121 = vld [vmem:[%s3 + $0x408] sm:$0xff]
      %v2122 = vld [vmem:[%s3 + $0x410] sm:$0xff]
      %v2123 = vld [vmem:[%s3 + $0x418] sm:$0xff]
      %v2124 = vld [vmem:[%s3 + $0x420] sm:$0xff]
      %v2125 = vld [vmem:[%s3 + $0x428] sm:$0xff]
      %v2126 = vld [vmem:[%s3 + $0x430] sm:$0xff]
      %v2127 = vld [vmem:[%s3 + $0x438] sm:$0xff]
      %v2128 = vld [vmem:[%s3 + $0x440] sm:$0xff]
      %v2129 = vld [vmem:[%s3 + $0x448] sm:$0xff]
      %v2130 = vld [vmem:[%s3 + $0x450] sm:$0xff]
      %v2131 = vld [vmem:[%s3 + $0x458] sm:$0xff]
      %v2132 = vld [vmem:[%s3 + $0x460] sm:$0xff]
      %v2133 = vld [vmem:[%s3 + $0x468] sm:$0xff]
      %v2134 = vld [vmem:[%s3 + $0x470] sm:$0xff]
      %v2135 = vld [vmem:[%s3 + $0x478] sm:$0xff]
      %v2136 = vld [vmem:[%s3 + $0x480] sm:$0xff]
      %v2137 = vld [vmem:[%s3 + $0x488] sm:$0xff]
      %v2138 = vld [vmem:[%s3 + $0x490] sm:$0xff]
      %v2139 = vld [vmem:[%s3 + $0x498] sm:$0xff]
      %v2140 = vld [vmem:[%s3 + $0x4a0] sm:$0xff]
      %v2141 = vld [vmem:[%s3 + $0x4a8] sm:$0xff]
      %v2142 = vld [vmem:[%s3 + $0x4b0] sm:$0xff]
      %v2143 = vld [vmem:[%s3 + $0x4b8] sm:$0xff]
      %v2144 = vld [vmem:[%s3 + $0x4c0] sm:$0xff]
      %v2145 = vld [vmem:[%s3 + $0x4c8] sm:$0xff]
      %v2146 = vld [vmem:[%s3 + $0x4d0] sm:$0xff]
      %v2147 = vld [vmem:[%s3 + $0x4d8] sm:$0xff]
      %v2148 = vld [vmem:[%s3 + $0x4e0] sm:$0xff]
      %v2149 = vld [vmem:[%s3 + $0x4e8] sm:$0xff]
      %v2150 = vld [vmem:[%s3 + $0x4f0] sm:$0xff]
      %v2151 = vld [vmem:[%s3 + $0x4f8] sm:$0xff]
      %v2152 = vld [vmem:[%s3 + $0x500] sm:$0xff]
      %v2153 = vld [vmem:[%s3 + $0x508] sm:$0xff]
      %v2154 = vld [vmem:[%s3 + $0x510] sm:$0xff]
      %v2155 = vld [vmem:[%s3 + $0x518] sm:$0xff]
      %v2156 = vld [vmem:[%s3 + $0x520] sm:$0xff]
      %v2157 = vld [vmem:[%s3 + $0x528] sm:$0xff]
      %v2158 = vld [vmem:[%s3 + $0x530] sm:$0xff]
      %v2159 = vld [vmem:[%s3 + $0x538] sm:$0xff]
      %v2160 = vld [vmem:[%s3 + $0x540] sm:$0xff]
      %v2161 = vld [vmem:[%s3 + $0x548] sm:$0xff]
      %v2162 = vld [vmem:[%s3 + $0x550] sm:$0xff]
      %v2163 = vld [vmem:[%s3 + $0x558] sm:$0xff]
      %v2164 = vld [vmem:[%s3 + $0x560] sm:$0xff]
      %v2165 = vld [vmem:[%s3 + $0x568] sm:$0xff]
      %v2166 = vld [vmem:[%s3 + $0x570] sm:$0xff]
      %v2167 = vld [vmem:[%s3 + $0x578] sm:$0xff]
      %v2168 = vld [vmem:[%s3 + $0x580] sm:$0xff]
      %v2169 = vld [vmem:[%s3 + $0x588] sm:$0xff]
      %v2170 = vld [vmem:[%s3 + $0x590] sm:$0xff]
      %v2171 = vld [vmem:[%s3 + $0x598] sm:$0xff]
      %v2172 = vld [vmem:[%s3 + $0x5a0] sm:$0xff]
      %v2173 = vld [vmem:[%s3 + $0x5a8] sm:$0xff]
      %v2174 = vld [vmem:[%s3 + $0x5b0] sm:$0xff]
      %v2175 = vld [vmem:[%s3 + $0x5b8] sm:$0xff]
      %v2176 = vld [vmem:[%s3 + $0x5c0] sm:$0xff]
      %v2177 = vld [vmem:[%s3 + $0x5c8] sm:$0xff]
      %v2178 = vld [vmem:[%s3 + $0x5d0] sm:$0xff]
      %v2179 = vld [vmem:[%s3 + $0x5d8] sm:$0xff]
      %v2180 = vld [vmem:[%s3 + $0x5e0] sm:$0xff]
      %v2181 = vld [vmem:[%s3 + $0x5e8] sm:$0xff]
      %v2182 = vld [vmem:[%s3 + $0x5f0] sm:$0xff]
      %v2183 = vld [vmem:[%s3 + $0x5f8] sm:$0xff]
      %2184 = vmatprep.subr.mxu0 %v2083
      %2185 = vmatpush1.msra.mxu0 %v2082
      %2186 = vmatprep.subr.mxu0 %v2077
      %2187 = vmatpush1.msra.mxu0 %v2076
      %2188 = vmatprep.subr.mxu0 %v2071
      %2189 = vmatpush1.msra.mxu0 %v2070
      %2190 = vmatprep.subr.mxu0 %v2065
      %2191 = vmatpush1.msra.mxu0 %v2064
      %2192 = vmatprep.subr.mxu0 %v2059
      %2193 = vmatpush1.msra.mxu0 %v2058
      %2194 = vmatprep.subr.mxu0 %v2053
      %2195 = vmatpush1.msra.mxu0 %v2052
      %2196 = vmatprep.subr.mxu0 %v2047
      %2197 = vmatpush1.msra.mxu0 %v2046
      %2198 = vmatprep.subr.mxu0 %v2041
      %2199 = vmatpush1.msra.mxu0 %v2040
      %2200 = vmatprep.subr.mxu0 %v2035
      %2201 = vmatpush1.msra.mxu0 %v2034
      %2202 = vmatprep.subr.mxu0 %v2029
      %2203 = vmatpush1.msra.mxu0 %v2028
      %2204 = vmatprep.subr.mxu0 %v2023
      %2205 = vmatpush1.msra.mxu0 %v2022
      %2206 = vmatprep.subr.mxu0 %v2017
      %2207 = vmatpush1.msra.mxu0 %v2016
      %2208 = vmatprep.subr.mxu0 %v2011
      %2209 = vmatpush1.msra.mxu0 %v2010
      %2210 = vmatprep.subr.mxu0 %v2005
      %2211 = vmatpush1.msra.mxu0 %v2004
      %2212 = vmatprep.subr.mxu0 %v1999
      %2213 = vmatpush1.msra.mxu0 %v1998
      %2214 = vmatprep.subr.mxu0 %v1993
      %2215 = vmatpush1.msra.mxu0 %v1992
      %2216 = vmatprep.subr.mxu0 %v2179
      %2217 = vmatpush2.msra.mxu0 %v2178
      %2218 = vmatprep.subr.mxu0 %v2173
      %2219 = vmatpush2.msra.mxu0 %v2172
      %2220 = vmatprep.subr.mxu0 %v2167
      %2221 = vmatpush2.msra.mxu0 %v2166
      %2222 = vmatprep.subr.mxu0 %v2161
      %2223 = vmatpush2.msra.mxu0 %v2160
      %2224 = vmatprep.subr.mxu0 %v2155
      %2225 = vmatpush2.msra.mxu0 %v2154
      %2226 = vmatprep.subr.mxu0 %v2149
      %2227 = vmatpush2.msra.mxu0 %v2148
      %2228 = vmatprep.subr.mxu0 %v2143
      %2229 = vmatpush2.msra.mxu0 %v2142
      %2230 = vmatprep.subr.mxu0 %v2137
      %2231 = vmatpush2.msra.mxu0 %v2136
      %2232 = vmatprep.subr.mxu0 %v2131
      %2233 = vmatpush2.msra.mxu0 %v2130
      %2234 = vmatprep.subr.mxu0 %v2125
      %2235 = vmatpush2.msra.mxu0 %v2124
      %2236 = vmatprep.subr.mxu0 %v2119
      %2237 = vmatpush2.msra.mxu0 %v2118
      %2238 = vmatprep.subr.mxu0 %v2113
      %2239 = vmatpush2.msra.mxu0 %v2112
      %2240 = vmatprep.subr.mxu0 %v2107
      %2241 = vmatpush2.msra.mxu0 %v2106
      %2242 = vmatprep.subr.mxu0 %v2101
      %2243 = vmatpush2.msra.mxu0 %v2100
      %2244 = vmatprep.subr.mxu0 %v2095
      %2245 = vmatpush2.msra.mxu0 %v2094
      %2246 = vmatprep.subr.mxu0 %v2089
      %2247 = vmatpush2.msra.mxu0 %v2088
      %2248 = vmatprep.mubr.f32.mxu0 %v1961
      %2249 = vmatmul.mubr.f32.gmra.mxu0 %v1960
      %v2250 = vpop.f32.mrf.mxu0
      %v2251 = vadd.f32 0.0, %v2250
      %v2252 = vpop.f32.mrf.mxu0
      %v2253 = vadd.f32 0.0, %v2252
      %2254 = vmatprep.mubr.f32.mxu0 %v1963
      %2255 = vmatmul.mubr.f32.gmra.mxu0 %v1962
      %v2256 = vpop.f32.mrf.mxu0
      %v2257 = vadd.f32 0.0, %v2256
      %v2258 = vpop.f32.mrf.mxu0
      %v2259 = vadd.f32 0.0, %v2258
      %2260 = vmatprep.mubr.f32.mxu0 %v1965
      %2261 = vmatmul.mubr.f32.gmra.mxu0 %v1964
      %v2262 = vpop.f32.mrf.mxu0
      %v2263 = vadd.f32 0.0, %v2262
      %v2264 = vpop.f32.mrf.mxu0
      %v2265 = vadd.f32 0.0, %v2264
      %2266 = vmatprep.mubr.f32.mxu0 %v1967
      %2267 = vmatmul.mubr.f32.gmra.mxu0 %v1966
      %v2268 = vpop.f32.mrf.mxu0
      %v2269 = vadd.f32 0.0, %v2268
      %v2270 = vpop.f32.mrf.mxu0
      %v2271 = vadd.f32 0.0, %v2270
      %2272 = vmatprep.mubr.f32.mxu0 %v1969
      %2273 = vmatmul.mubr.f32.gmra.mxu0 %v1968
      %v2274 = vpop.f32.mrf.mxu0
      %v2275 = vadd.f32 0.0, %v2274
      %v2276 = vpop.f32.mrf.mxu0
      %v2277 = vadd.f32 0.0, %v2276
      %2278 = vmatprep.mubr.f32.mxu0 %v1971
      %2279 = vmatmul.mubr.f32.gmra.mxu0 %v1970
      %v2280 = vpop.f32.mrf.mxu0
      %v2281 = vadd.f32 0.0, %v2280
      %v2282 = vpop.f32.mrf.mxu0
      %v2283 = vadd.f32 0.0, %v2282
      %2284 = vmatprep.mubr.f32.mxu0 %v1973
      %2285 = vmatmul.mubr.f32.gmra.mxu0 %v1972
      %v2286 = vpop.f32.mrf.mxu0
      %v2287 = vadd.f32 0.0, %v2286
      %v2288 = vpop.f32.mrf.mxu0
      %v2289 = vadd.f32 0.0, %v2288
      %2290 = vmatprep.mubr.f32.mxu0 %v1975
      %2291 = vmatmul.mubr.f32.gmra.mxu0 %v1974
      %v2292 = vpop.f32.mrf.mxu0
      %v2293 = vadd.f32 0.0, %v2292
      %v2294 = vpop.f32.mrf.mxu0
      %v2295 = vadd.f32 0.0, %v2294
      %2296 = vmatprep.mubr.f32.mxu0 %v1977
      %2297 = vmatmul.mubr.f32.gmra.mxu0 %v1976
      %v2298 = vpop.f32.mrf.mxu0
      %v2299 = vadd.f32 0.0, %v2298
      %v2300 = vpop.f32.mrf.mxu0
      %v2301 = vadd.f32 0.0, %v2300
      %2302 = vmatprep.mubr.f32.mxu0 %v1979
      %2303 = vmatmul.mubr.f32.gmra.mxu0 %v1978
      %v2304 = vpop.f32.mrf.mxu0
      %v2305 = vadd.f32 0.0, %v2304
      %v2306 = vpop.f32.mrf.mxu0
      %v2307 = vadd.f32 0.0, %v2306
      %2308 = vmatprep.mubr.f32.mxu0 %v1981
      %2309 = vmatmul.mubr.f32.gmra.mxu0 %v1980
      %v2310 = vpop.f32.mrf.mxu0
      %v2311 = vadd.f32 0.0, %v2310
      %v2312 = vpop.f32.mrf.mxu0
      %v2313 = vadd.f32 0.0, %v2312
      %2314 = vmatprep.mubr.f32.mxu0 %v1983
      %2315 = vmatmul.mubr.f32.gmra.mxu0 %v1982
      %v2316 = vpop.f32.mrf.mxu0
      %v2317 = vadd.f32 0.0, %v2316
      %v2318 = vpop.f32.mrf.mxu0
      %v2319 = vadd.f32 0.0, %v2318
      %2320 = vmatprep.mubr.f32.mxu0 %v1985
      %2321 = vmatmul.mubr.f32.gmra.mxu0 %v1984
      %v2322 = vpop.f32.mrf.mxu0
      %v2323 = vadd.f32 0.0, %v2322
      %v2324 = vpop.f32.mrf.mxu0
      %v2325 = vadd.f32 0.0, %v2324
      %2326 = vmatprep.mubr.f32.mxu0 %v1987
      %2327 = vmatmul.mubr.f32.gmra.mxu0 %v1986
      %v2328 = vpop.f32.mrf.mxu0
      %v2329 = vadd.f32 0.0, %v2328
      %v2330 = vpop.f32.mrf.mxu0
      %v2331 = vadd.f32 0.0, %v2330
      %2332 = vmatprep.mubr.f32.mxu0 %v1989
      %2333 = vmatmul.mubr.f32.gmra.mxu0 %v1988
      %v2334 = vpop.f32.mrf.mxu0
      %v2335 = vadd.f32 0.0, %v2334
      %v2336 = vpop.f32.mrf.mxu0
      %v2337 = vadd.f32 0.0, %v2336
      %2338 = vmatprep.mubr.f32.mxu0 %v1991
      %2339 = vmatmul.mubr.f32.gmra.mxu0 %v1990
      %v2340 = vpop.f32.mrf.mxu0
      %v2341 = vadd.f32 0.0, %v2340
      %v2342 = vpop.f32.mrf.mxu0
      %v2343 = vadd.f32 0.0, %v2342
      %2344 = vdwg.mxu0
      %2345 = vmatprep.subr.mxu0 %v2085
      %2346 = vmatpush1.msra.mxu0 %v2084
      %2347 = vmatprep.subr.mxu0 %v2079
      %2348 = vmatpush1.msra.mxu0 %v2078
      %2349 = vmatprep.subr.mxu0 %v2073
      %2350 = vmatpush1.msra.mxu0 %v2072
      %2351 = vmatprep.subr.mxu0 %v2067
      %2352 = vmatpush1.msra.mxu0 %v2066
      %2353 = vmatprep.subr.mxu0 %v2061
      %2354 = vmatpush1.msra.mxu0 %v2060
      %2355 = vmatprep.subr.mxu0 %v2055
      %2356 = vmatpush1.msra.mxu0 %v2054
      %2357 = vmatprep.subr.mxu0 %v2049
      %2358 = vmatpush1.msra.mxu0 %v2048
      %2359 = vmatprep.subr.mxu0 %v2043
      %2360 = vmatpush1.msra.mxu0 %v2042
      %2361 = vmatprep.subr.mxu0 %v2037
      %2362 = vmatpush1.msra.mxu0 %v2036
      %2363 = vmatprep.subr.mxu0 %v2031
      %2364 = vmatpush1.msra.mxu0 %v2030
      %2365 = vmatprep.subr.mxu0 %v2025
      %2366 = vmatpush1.msra.mxu0 %v2024
      %2367 = vmatprep.subr.mxu0 %v2019
      %2368 = vmatpush1.msra.mxu0 %v2018
      %2369 = vmatprep.subr.mxu0 %v2013
      %2370 = vmatpush1.msra.mxu0 %v2012
      %2371 = vmatprep.subr.mxu0 %v2007
      %2372 = vmatpush1.msra.mxu0 %v2006
      %2373 = vmatprep.subr.mxu0 %v2001
      %2374 = vmatpush1.msra.mxu0 %v2000
      %2375 = vmatprep.subr.mxu0 %v1995
      %2376 = vmatpush1.msra.mxu0 %v1994
      %2377 = vmatprep.subr.mxu0 %v2181
      %2378 = vmatpush2.msra.mxu0 %v2180
      %2379 = vmatprep.subr.mxu0 %v2175
      %2380 = vmatpush2.msra.mxu0 %v2174
      %2381 = vmatprep.subr.mxu0 %v2169
      %2382 = vmatpush2.msra.mxu0 %v2168
      %2383 = vmatprep.subr.mxu0 %v2163
      %2384 = vmatpush2.msra.mxu0 %v2162
      %2385 = vmatprep.subr.mxu0 %v2157
      %2386 = vmatpush2.msra.mxu0 %v2156
      %2387 = vmatprep.subr.mxu0 %v2151
      %2388 = vmatpush2.msra.mxu0 %v2150
      %2389 = vmatprep.subr.mxu0 %v2145
      %2390 = vmatpush2.msra.mxu0 %v2144
      %2391 = vmatprep.subr.mxu0 %v2139
      %2392 = vmatpush2.msra.mxu0 %v2138
      %2393 = vmatprep.subr.mxu0 %v2133
      %2394 = vmatpush2.msra.mxu0 %v2132
      %2395 = vmatprep.subr.mxu0 %v2127
      %2396 = vmatpush2.msra.mxu0 %v2126
      %2397 = vmatprep.subr.mxu0 %v2121
      %2398 = vmatpush2.msra.mxu0 %v2120
      %2399 = vmatprep.subr.mxu0 %v2115
      %2400 = vmatpush2.msra.mxu0 %v2114
      %2401 = vmatprep.subr.mxu0 %v2109
      %2402 = vmatpush2.msra.mxu0 %v2108
      %2403 = vmatprep.subr.mxu0 %v2103
      %2404 = vmatpush2.msra.mxu0 %v2102
      %2405 = vmatprep.subr.mxu0 %v2097
      %2406 = vmatpush2.msra.mxu0 %v2096
      %2407 = vmatprep.subr.mxu0 %v2091
      %2408 = vmatpush2.msra.mxu0 %v2090
      %2409 = vmatprep.mubr.f32.mxu0 %v1961
      %2410 = vmatmul.mubr.f32.gmra.mxu0 %v1960
      %v2411 = vpop.f32.mrf.mxu0
      %v2412 = vadd.f32 0.0, %v2411
      %v2413 = vpop.f32.mrf.mxu0
      %v2414 = vadd.f32 0.0, %v2413
      %2415 = vmatprep.mubr.f32.mxu0 %v1963
      %2416 = vmatmul.mubr.f32.gmra.mxu0 %v1962
      %v2417 = vpop.f32.mrf.mxu0
      %v2418 = vadd.f32 0.0, %v2417
      %v2419 = vpop.f32.mrf.mxu0
      %v2420 = vadd.f32 0.0, %v2419
      %2421 = vmatprep.mubr.f32.mxu0 %v1965
      %2422 = vmatmul.mubr.f32.gmra.mxu0 %v1964
      %v2423 = vpop.f32.mrf.mxu0
      %v2424 = vadd.f32 0.0, %v2423
      %v2425 = vpop.f32.mrf.mxu0
      %v2426 = vadd.f32 0.0, %v2425
      %2427 = vmatprep.mubr.f32.mxu0 %v1967
      %2428 = vmatmul.mubr.f32.gmra.mxu0 %v1966
      %v2429 = vpop.f32.mrf.mxu0
      %v2430 = vadd.f32 0.0, %v2429
      %v2431 = vpop.f32.mrf.mxu0
      %v2432 = vadd.f32 0.0, %v2431
      %2433 = vmatprep.mubr.f32.mxu0 %v1969
      %2434 = vmatmul.mubr.f32.gmra.mxu0 %v1968
      %v2435 = vpop.f32.mrf.mxu0
      %v2436 = vadd.f32 0.0, %v2435
      %v2437 = vpop.f32.mrf.mxu0
      %v2438 = vadd.f32 0.0, %v2437
      %2439 = vmatprep.mubr.f32.mxu0 %v1971
      %2440 = vmatmul.mubr.f32.gmra.mxu0 %v1970
      %v2441 = vpop.f32.mrf.mxu0
      %v2442 = vadd.f32 0.0, %v2441
      %v2443 = vpop.f32.mrf.mxu0
      %v2444 = vadd.f32 0.0, %v2443
      %2445 = vmatprep.mubr.f32.mxu0 %v1973
      %2446 = vmatmul.mubr.f32.gmra.mxu0 %v1972
      %v2447 = vpop.f32.mrf.mxu0
      %v2448 = vadd.f32 0.0, %v2447
      %v2449 = vpop.f32.mrf.mxu0
      %v2450 = vadd.f32 0.0, %v2449
      %2451 = vmatprep.mubr.f32.mxu0 %v1975
      %2452 = vmatmul.mubr.f32.gmra.mxu0 %v1974
      %v2453 = vpop.f32.mrf.mxu0
      %v2454 = vadd.f32 0.0, %v2453
      %v2455 = vpop.f32.mrf.mxu0
      %v2456 = vadd.f32 0.0, %v2455
      %2457 = vmatprep.mubr.f32.mxu0 %v1977
      %2458 = vmatmul.mubr.f32.gmra.mxu0 %v1976
      %v2459 = vpop.f32.mrf.mxu0
      %v2460 = vadd.f32 0.0, %v2459
      %v2461 = vpop.f32.mrf.mxu0
      %v2462 = vadd.f32 0.0, %v2461
      %2463 = vmatprep.mubr.f32.mxu0 %v1979
      %2464 = vmatmul.mubr.f32.gmra.mxu0 %v1978
      %v2465 = vpop.f32.mrf.mxu0
      %v2466 = vadd.f32 0.0, %v2465
      %v2467 = vpop.f32.mrf.mxu0
      %v2468 = vadd.f32 0.0, %v2467
      %2469 = vmatprep.mubr.f32.mxu0 %v1981
      %2470 = vmatmul.mubr.f32.gmra.mxu0 %v1980
      %v2471 = vpop.f32.mrf.mxu0
      %v2472 = vadd.f32 0.0, %v2471
      %v2473 = vpop.f32.mrf.mxu0
      %v2474 = vadd.f32 0.0, %v2473
      %2475 = vmatprep.mubr.f32.mxu0 %v1983
      %2476 = vmatmul.mubr.f32.gmra.mxu0 %v1982
      %v2477 = vpop.f32.mrf.mxu0
      %v2478 = vadd.f32 0.0, %v2477
      %v2479 = vpop.f32.mrf.mxu0
      %v2480 = vadd.f32 0.0, %v2479
      %2481 = vmatprep.mubr.f32.mxu0 %v1985
      %2482 = vmatmul.mubr.f32.gmra.mxu0 %v1984
      %v2483 = vpop.f32.mrf.mxu0
      %v2484 = vadd.f32 0.0, %v2483
      %v2485 = vpop.f32.mrf.mxu0
      %v2486 = vadd.f32 0.0, %v2485
      %2487 = vmatprep.mubr.f32.mxu0 %v1987
      %2488 = vmatmul.mubr.f32.gmra.mxu0 %v1986
      %v2489 = vpop.f32.mrf.mxu0
      %v2490 = vadd.f32 0.0, %v2489
      %v2491 = vpop.f32.mrf.mxu0
      %v2492 = vadd.f32 0.0, %v2491
      %2493 = vmatprep.mubr.f32.mxu0 %v1989
      %2494 = vmatmul.mubr.f32.gmra.mxu0 %v1988
      %v2495 = vpop.f32.mrf.mxu0
      %v2496 = vadd.f32 0.0, %v2495
      %v2497 = vpop.f32.mrf.mxu0
      %v2498 = vadd.f32 0.0, %v2497
      %2499 = vmatprep.mubr.f32.mxu0 %v1991
      %2500 = vmatmul.mubr.f32.gmra.mxu0 %v1990
      %v2501 = vpop.f32.mrf.mxu0
      %v2502 = vadd.f32 0.0, %v2501
      %v2503 = vpop.f32.mrf.mxu0
      %v2504 = vadd.f32 0.0, %v2503
      %2505 = vdwg.mxu0
      %2506 = vmatprep.subr.mxu0 %v2087
      %2507 = vmatpush1.msra.mxu0 %v2086
      %2508 = vmatprep.subr.mxu0 %v2081
      %2509 = vmatpush1.msra.mxu0 %v2080
      %2510 = vmatprep.subr.mxu0 %v2075
      %2511 = vmatpush1.msra.mxu0 %v2074
      %2512 = vmatprep.subr.mxu0 %v2069
      %2513 = vmatpush1.msra.mxu0 %v2068
      %2514 = vmatprep.subr.mxu0 %v2063
      %2515 = vmatpush1.msra.mxu0 %v2062
      %2516 = vmatprep.subr.mxu0 %v2057
      %2517 = vmatpush1.msra.mxu0 %v2056
      %2518 = vmatprep.subr.mxu0 %v2051
      %2519 = vmatpush1.msra.mxu0 %v2050
      %2520 = vmatprep.subr.mxu0 %v2045
      %2521 = vmatpush1.msra.mxu0 %v2044
      %2522 = vmatprep.subr.mxu0 %v2039
      %2523 = vmatpush1.msra.mxu0 %v2038
      %2524 = vmatprep.subr.mxu0 %v2033
      %2525 = vmatpush1.msra.mxu0 %v2032
      %2526 = vmatprep.subr.mxu0 %v2027
      %2527 = vmatpush1.msra.mxu0 %v2026
      %2528 = vmatprep.subr.mxu0 %v2021
      %2529 = vmatpush1.msra.mxu0 %v2020
      %2530 = vmatprep.subr.mxu0 %v2015
      %2531 = vmatpush1.msra.mxu0 %v2014
      %2532 = vmatprep.subr.mxu0 %v2009
      %2533 = vmatpush1.msra.mxu0 %v2008
      %2534 = vmatprep.subr.mxu0 %v2003
      %2535 = vmatpush1.msra.mxu0 %v2002
      %2536 = vmatprep.subr.mxu0 %v1997
      %2537 = vmatpush1.msra.mxu0 %v1996
      %2538 = vmatprep.subr.mxu0 %v2183
      %2539 = vmatpush2.msra.mxu0 %v2182
      %2540 = vmatprep.subr.mxu0 %v2177
      %2541 = vmatpush2.msra.mxu0 %v2176
      %2542 = vmatprep.subr.mxu0 %v2171
      %2543 = vmatpush2.msra.mxu0 %v2170
      %2544 = vmatprep.subr.mxu0 %v2165
      %2545 = vmatpush2.msra.mxu0 %v2164
      %2546 = vmatprep.subr.mxu0 %v2159
      %2547 = vmatpush2.msra.mxu0 %v2158
      %2548 = vmatprep.subr.mxu0 %v2153
      %2549 = vmatpush2.msra.mxu0 %v2152
      %2550 = vmatprep.subr.mxu0 %v2147
      %2551 = vmatpush2.msra.mxu0 %v2146
      %2552 = vmatprep.subr.mxu0 %v2141
      %2553 = vmatpush2.msra.mxu0 %v2140
      %2554 = vmatprep.subr.mxu0 %v2135
      %2555 = vmatpush2.msra.mxu0 %v2134
      %2556 = vmatprep.subr.mxu0 %v2129
      %2557 = vmatpush2.msra.mxu0 %v2128
      %2558 = vmatprep.subr.mxu0 %v2123
      %2559 = vmatpush2.msra.mxu0 %v2122
      %2560 = vmatprep.subr.mxu0 %v2117
      %2561 = vmatpush2.msra.mxu0 %v2116
      %2562 = vmatprep.subr.mxu0 %v2111
      %2563 = vmatpush2.msra.mxu0 %v2110
      %2564 = vmatprep.subr.mxu0 %v2105
      %2565 = vmatpush2.msra.mxu0 %v2104
      %2566 = vmatprep.subr.mxu0 %v2099
      %2567 = vmatpush2.msra.mxu0 %v2098
      %2568 = vmatprep.subr.mxu0 %v2093
      %2569 = vmatpush2.msra.mxu0 %v2092
      %2570 = vmatprep.mubr.f32.mxu0 %v1961
      %2571 = vmatmul.mubr.f32.gmra.mxu0 %v1960
      %v2572 = vpop.f32.mrf.mxu0
      %v2573 = vadd.f32 0.0, %v2572
      %v2574 = vpop.f32.mrf.mxu0
      %v2575 = vadd.f32 0.0, %v2574
      %2576 = vmatprep.mubr.f32.mxu0 %v1963
      %2577 = vmatmul.mubr.f32.gmra.mxu0 %v1962
      %v2578 = vpop.f32.mrf.mxu0
      %v2579 = vadd.f32 0.0, %v2578
      %v2580 = vpop.f32.mrf.mxu0
      %v2581 = vadd.f32 0.0, %v2580
      %2582 = vmatprep.mubr.f32.mxu0 %v1965
      %2583 = vmatmul.mubr.f32.gmra.mxu0 %v1964
      %v2584 = vpop.f32.mrf.mxu0
      %v2585 = vadd.f32 0.0, %v2584
      %v2586 = vpop.f32.mrf.mxu0
      %v2587 = vadd.f32 0.0, %v2586
      %2588 = vmatprep.mubr.f32.mxu0 %v1967
      %2589 = vmatmul.mubr.f32.gmra.mxu0 %v1966
      %v2590 = vpop.f32.mrf.mxu0
      %v2591 = vadd.f32 0.0, %v2590
      %v2592 = vpop.f32.mrf.mxu0
      %v2593 = vadd.f32 0.0, %v2592
      %2594 = vmatprep.mubr.f32.mxu0 %v1969
      %2595 = vmatmul.mubr.f32.gmra.mxu0 %v1968
      %v2596 = vpop.f32.mrf.mxu0
      %v2597 = vadd.f32 0.0, %v2596
      %v2598 = vpop.f32.mrf.mxu0
      %v2599 = vadd.f32 0.0, %v2598
      %2600 = vmatprep.mubr.f32.mxu0 %v1971
      %2601 = vmatmul.mubr.f32.gmra.mxu0 %v1970
      %v2602 = vpop.f32.mrf.mxu0
      %v2603 = vadd.f32 0.0, %v2602
      %v2604 = vpop.f32.mrf.mxu0
      %v2605 = vadd.f32 0.0, %v2604
      %2606 = vmatprep.mubr.f32.mxu0 %v1973
      %2607 = vmatmul.mubr.f32.gmra.mxu0 %v1972
      %v2608 = vpop.f32.mrf.mxu0
      %v2609 = vadd.f32 0.0, %v2608
      %v2610 = vpop.f32.mrf.mxu0
      %v2611 = vadd.f32 0.0, %v2610
      %2612 = vmatprep.mubr.f32.mxu0 %v1975
      %2613 = vmatmul.mubr.f32.gmra.mxu0 %v1974
      %v2614 = vpop.f32.mrf.mxu0
      %v2615 = vadd.f32 0.0, %v2614
      %v2616 = vpop.f32.mrf.mxu0
      %v2617 = vadd.f32 0.0, %v2616
      %2618 = vmatprep.mubr.f32.mxu0 %v1977
      %2619 = vmatmul.mubr.f32.gmra.mxu0 %v1976
      %v2620 = vpop.f32.mrf.mxu0
      %v2621 = vadd.f32 0.0, %v2620
      %v2622 = vpop.f32.mrf.mxu0
      %v2623 = vadd.f32 0.0, %v2622
      %2624 = vmatprep.mubr.f32.mxu0 %v1979
      %2625 = vmatmul.mubr.f32.gmra.mxu0 %v1978
      %v2626 = vpop.f32.mrf.mxu0
      %v2627 = vadd.f32 0.0, %v2626
      %v2628 = vpop.f32.mrf.mxu0
      %v2629 = vadd.f32 0.0, %v2628
      %2630 = vmatprep.mubr.f32.mxu0 %v1981
      %2631 = vmatmul.mubr.f32.gmra.mxu0 %v1980
      %v2632 = vpop.f32.mrf.mxu0
      %v2633 = vadd.f32 0.0, %v2632
      %v2634 = vpop.f32.mrf.mxu0
      %v2635 = vadd.f32 0.0, %v2634
      %2636 = vmatprep.mubr.f32.mxu0 %v1983
      %2637 = vmatmul.mubr.f32.gmra.mxu0 %v1982
      %v2638 = vpop.f32.mrf.mxu0
      %v2639 = vadd.f32 0.0, %v2638
      %v2640 = vpop.f32.mrf.mxu0
      %v2641 = vadd.f32 0.0, %v2640
      %2642 = vmatprep.mubr.f32.mxu0 %v1985
      %2643 = vmatmul.mubr.f32.gmra.mxu0 %v1984
      %v2644 = vpop.f32.mrf.mxu0
      %v2645 = vadd.f32 0.0, %v2644
      %v2646 = vpop.f32.mrf.mxu0
      %v2647 = vadd.f32 0.0, %v2646
      %2648 = vmatprep.mubr.f32.mxu0 %v1987
      %2649 = vmatmul.mubr.f32.gmra.mxu0 %v1986
      %v2650 = vpop.f32.mrf.mxu0
      %v2651 = vadd.f32 0.0, %v2650
      %v2652 = vpop.f32.mrf.mxu0
      %v2653 = vadd.f32 0.0, %v2652
      %2654 = vmatprep.mubr.f32.mxu0 %v1989
      %2655 = vmatmul.mubr.f32.gmra.mxu0 %v1988
      %v2656 = vpop.f32.mrf.mxu0
      %v2657 = vadd.f32 0.0, %v2656
      %v2658 = vpop.f32.mrf.mxu0
      %v2659 = vadd.f32 0.0, %v2658
      %2660 = vmatprep.mubr.f32.mxu0 %v1991
      %2661 = vmatmul.mubr.f32.gmra.mxu0 %v1990
      %v2662 = vpop.f32.mrf.mxu0
      %v2663 = vadd.f32 0.0, %v2662
      %v2664 = vpop.f32.mrf.mxu0
      %v2665 = vadd.f32 0.0, %v2664
      %2666 = vdwg.mxu0
      %2667 = vmatprep.subr.mxu0 %v2343
      %2668 = vmatpush1.msra.mxu0 %v2341
      %2669 = vmatprep.subr.mxu0 %v2337
      %2670 = vmatpush1.msra.mxu0 %v2335
      %2671 = vmatprep.subr.mxu0 %v2331
      %2672 = vmatpush1.msra.mxu0 %v2329
      %2673 = vmatprep.subr.mxu0 %v2325
      %2674 = vmatpush1.msra.mxu0 %v2323
      %2675 = vmatprep.subr.mxu0 %v2319
      %2676 = vmatpush1.msra.mxu0 %v2317
      %2677 = vmatprep.subr.mxu0 %v2313
      %2678 = vmatpush1.msra.mxu0 %v2311
      %2679 = vmatprep.subr.mxu0 %v2307
      %2680 = vmatpush1.msra.mxu0 %v2305
      %2681 = vmatprep.subr.mxu0 %v2301
      %2682 = vmatpush1.msra.mxu0 %v2299
      %2683 = vmatprep.subr.mxu0 %v2295
      %2684 = vmatpush1.msra.mxu0 %v2293
      %2685 = vmatprep.subr.mxu0 %v2289
      %2686 = vmatpush1.msra.mxu0 %v2287
      %2687 = vmatprep.subr.mxu0 %v2283
      %2688 = vmatpush1.msra.mxu0 %v2281
      %2689 = vmatprep.subr.mxu0 %v2277
      %2690 = vmatpush1.msra.mxu0 %v2275
      %2691 = vmatprep.subr.mxu0 %v2271
      %2692 = vmatpush1.msra.mxu0 %v2269
      %2693 = vmatprep.subr.mxu0 %v2265
      %2694 = vmatpush1.msra.mxu0 %v2263
      %2695 = vmatprep.subr.mxu0 %v2259
      %2696 = vmatpush1.msra.mxu0 %v2257
      %2697 = vmatprep.subr.mxu0 %v2253
      %2698 = vmatpush1.msra.mxu0 %v2251
      %2699 = vmatprep.subr.mxu0 %v2665
      %2700 = vmatpush2.msra.mxu0 %v2663
      %2701 = vmatprep.subr.mxu0 %v2659
      %2702 = vmatpush2.msra.mxu0 %v2657
      %2703 = vmatprep.subr.mxu0 %v2653
      %2704 = vmatpush2.msra.mxu0 %v2651
      %2705 = vmatprep.subr.mxu0 %v2647
      %2706 = vmatpush2.msra.mxu0 %v2645
      %2707 = vmatprep.subr.mxu0 %v2641
      %2708 = vmatpush2.msra.mxu0 %v2639
      %2709 = vmatprep.subr.mxu0 %v2635
      %2710 = vmatpush2.msra.mxu0 %v2633
      %2711 = vmatprep.subr.mxu0 %v2629
      %2712 = vmatpush2.msra.mxu0 %v2627
      %2713 = vmatprep.subr.mxu0 %v2623
      %2714 = vmatpush2.msra.mxu0 %v2621
      %2715 = vmatprep.subr.mxu0 %v2617
      %2716 = vmatpush2.msra.mxu0 %v2615
      %2717 = vmatprep.subr.mxu0 %v2611
      %2718 = vmatpush2.msra.mxu0 %v2609
      %2719 = vmatprep.subr.mxu0 %v2605
      %2720 = vmatpush2.msra.mxu0 %v2603
      %2721 = vmatprep.subr.mxu0 %v2599
      %2722 = vmatpush2.msra.mxu0 %v2597
      %2723 = vmatprep.subr.mxu0 %v2593
      %2724 = vmatpush2.msra.mxu0 %v2591
      %2725 = vmatprep.subr.mxu0 %v2587
      %2726 = vmatpush2.msra.mxu0 %v2585
      %2727 = vmatprep.subr.mxu0 %v2581
      %2728 = vmatpush2.msra.mxu0 %v2579
      %2729 = vmatprep.subr.mxu0 %v2575
      %2730 = vmatpush2.msra.mxu0 %v2573
      %2731 = vmatprep.mubr.f32.mxu0 %v390
      %2732 = vmatmul.mubr.f32.gmra.mxu0 %v389
      %v2733 = vpop.f32.mrf.mxu0
      %v2734 = vadd.f32 %v2412, %v2733
      %v2735 = vpop.f32.mrf.mxu0
      %v2736 = vadd.f32 %v2414, %v2735
      %2737 = vmatprep.mubr.f32.mxu0 %v392
      %2738 = vmatmul.mubr.f32.gmra.mxu0 %v391
      %v2739 = vpop.f32.mrf.mxu0
      %v2740 = vadd.f32 %v2418, %v2739
      %v2741 = vpop.f32.mrf.mxu0
      %v2742 = vadd.f32 %v2420, %v2741
      %2743 = vmatprep.mubr.f32.mxu0 %v394
      %2744 = vmatmul.mubr.f32.gmra.mxu0 %v393
      %v2745 = vpop.f32.mrf.mxu0
      %v2746 = vadd.f32 %v2424, %v2745
      %v2747 = vpop.f32.mrf.mxu0
      %v2748 = vadd.f32 %v2426, %v2747
      %2749 = vmatprep.mubr.f32.mxu0 %v396
      %2750 = vmatmul.mubr.f32.gmra.mxu0 %v395
      %v2751 = vpop.f32.mrf.mxu0
      %v2752 = vadd.f32 %v2430, %v2751
      %v2753 = vpop.f32.mrf.mxu0
      %v2754 = vadd.f32 %v2432, %v2753
      %2755 = vmatprep.mubr.f32.mxu0 %v398
      %2756 = vmatmul.mubr.f32.gmra.mxu0 %v397
      %v2757 = vpop.f32.mrf.mxu0
      %v2758 = vadd.f32 %v2436, %v2757
      %v2759 = vpop.f32.mrf.mxu0
      %v2760 = vadd.f32 %v2438, %v2759
      %2761 = vmatprep.mubr.f32.mxu0 %v400
      %2762 = vmatmul.mubr.f32.gmra.mxu0 %v399
      %v2763 = vpop.f32.mrf.mxu0
      %v2764 = vadd.f32 %v2442, %v2763
      %v2765 = vpop.f32.mrf.mxu0
      %v2766 = vadd.f32 %v2444, %v2765
      %2767 = vmatprep.mubr.f32.mxu0 %v402
      %2768 = vmatmul.mubr.f32.gmra.mxu0 %v401
      %v2769 = vpop.f32.mrf.mxu0
      %v2770 = vadd.f32 %v2448, %v2769
      %v2771 = vpop.f32.mrf.mxu0
      %v2772 = vadd.f32 %v2450, %v2771
      %2773 = vmatprep.mubr.f32.mxu0 %v404
      %2774 = vmatmul.mubr.f32.gmra.mxu0 %v403
      %v2775 = vpop.f32.mrf.mxu0
      %v2776 = vadd.f32 %v2454, %v2775
      %v2777 = vpop.f32.mrf.mxu0
      %v2778 = vadd.f32 %v2456, %v2777
      %2779 = vmatprep.mubr.f32.mxu0 %v406
      %2780 = vmatmul.mubr.f32.gmra.mxu0 %v405
      %v2781 = vpop.f32.mrf.mxu0
      %v2782 = vadd.f32 %v2460, %v2781
      %v2783 = vpop.f32.mrf.mxu0
      %v2784 = vadd.f32 %v2462, %v2783
      %2785 = vmatprep.mubr.f32.mxu0 %v408
      %2786 = vmatmul.mubr.f32.gmra.mxu0 %v407
      %v2787 = vpop.f32.mrf.mxu0
      %v2788 = vadd.f32 %v2466, %v2787
      %v2789 = vpop.f32.mrf.mxu0
      %v2790 = vadd.f32 %v2468, %v2789
      %2791 = vmatprep.mubr.f32.mxu0 %v410
      %2792 = vmatmul.mubr.f32.gmra.mxu0 %v409
      %v2793 = vpop.f32.mrf.mxu0
      %v2794 = vadd.f32 %v2472, %v2793
      %v2795 = vpop.f32.mrf.mxu0
      %v2796 = vadd.f32 %v2474, %v2795
      %2797 = vmatprep.mubr.f32.mxu0 %v412
      %2798 = vmatmul.mubr.f32.gmra.mxu0 %v411
      %v2799 = vpop.f32.mrf.mxu0
      %v2800 = vadd.f32 %v2478, %v2799
      %v2801 = vpop.f32.mrf.mxu0
      %v2802 = vadd.f32 %v2480, %v2801
      %2803 = vmatprep.mubr.f32.mxu0 %v414
      %2804 = vmatmul.mubr.f32.gmra.mxu0 %v413
      %v2805 = vpop.f32.mrf.mxu0
      %v2806 = vadd.f32 %v2484, %v2805
      %v2807 = vpop.f32.mrf.mxu0
      %v2808 = vadd.f32 %v2486, %v2807
      %2809 = vmatprep.mubr.f32.mxu0 %v416
      %2810 = vmatmul.mubr.f32.gmra.mxu0 %v415
      %v2811 = vpop.f32.mrf.mxu0
      %v2812 = vadd.f32 %v2490, %v2811
      %v2813 = vpop.f32.mrf.mxu0
      %v2814 = vadd.f32 %v2492, %v2813
      %2815 = vmatprep.mubr.f32.mxu0 %v418
      %2816 = vmatmul.mubr.f32.gmra.mxu0 %v417
      %v2817 = vpop.f32.mrf.mxu0
      %v2818 = vadd.f32 %v2496, %v2817
      %v2819 = vpop.f32.mrf.mxu0
      %v2820 = vadd.f32 %v2498, %v2819
      %2821 = vmatprep.mubr.f32.mxu0 %v420
      %2822 = vmatmul.mubr.f32.gmra.mxu0 %v419
      %v2823 = vpop.f32.mrf.mxu0
      %v2824 = vadd.f32 %v2502, %v2823
      %v2825 = vpop.f32.mrf.mxu0
      %v2826 = vadd.f32 %v2504, %v2825
      %2827 = vdwg.mxu0
      %v2828 = vld [vmem:[%s4] sm:$0x3]
      %v2830 = vlaneseq
      %v2831 = vshrl.u32 %v2830, 7
      %v2832 = vsub.s32 0, %v2831
      %v2833 = vrot.slane %v2828, %v2832
      %v2834 = vlaneseq
      %v2835 = vshrl.u32 %v2834, 7
      %v2836 = vsub.s32 1, %v2835
      %v2837 = vrot.slane %v2828, %v2836
      %v2840 = vadd.f32 %v2734, %v2833
      %v2841 = vadd.f32 %v2736, %v2837
      %v2842 = vadd.f32 %v2740, %v2833
      %v2843 = vadd.f32 %v2742, %v2837
      %v2844 = vadd.f32 %v2746, %v2833
      %v2845 = vadd.f32 %v2748, %v2837
      %v2846 = vadd.f32 %v2752, %v2833
      %v2847 = vadd.f32 %v2754, %v2837
      %v2848 = vadd.f32 %v2758, %v2833
      %v2849 = vadd.f32 %v2760, %v2837
      %v2850 = vadd.f32 %v2764, %v2833
      %v2851 = vadd.f32 %v2766, %v2837
      %v2852 = vadd.f32 %v2770, %v2833
      %v2853 = vadd.f32 %v2772, %v2837
      %v2854 = vadd.f32 %v2776, %v2833
      %v2855 = vadd.f32 %v2778, %v2837
      %v2856 = vadd.f32 %v2782, %v2833
      %v2857 = vadd.f32 %v2784, %v2837
      %v2858 = vadd.f32 %v2788, %v2833
      %v2859 = vadd.f32 %v2790, %v2837
      %v2860 = vadd.f32 %v2794, %v2833
      %v2861 = vadd.f32 %v2796, %v2837
      %v2862 = vadd.f32 %v2800, %v2833
      %v2863 = vadd.f32 %v2802, %v2837
      %v2864 = vadd.f32 %v2806, %v2833
      %v2865 = vadd.f32 %v2808, %v2837
      %v2866 = vadd.f32 %v2812, %v2833
      %v2867 = vadd.f32 %v2814, %v2837
      %v2868 = vadd.f32 %v2818, %v2833
      %v2869 = vadd.f32 %v2820, %v2837
      %v2870 = vadd.f32 %v2824, %v2833
      %v2871 = vadd.f32 %v2826, %v2837
      %v2872 = vadd.f32 %v2840, %v2842
      %v2873 = vadd.f32 %v2872, %v2844
      %v2874 = vadd.f32 %v2873, %v2846
      %v2875 = vrot.slane %v2874, 4
      %v2876 = vadd.f32 %v2874, %v2875
      %v2877 = vrot.slane %v2876, 2
      %v2878 = vadd.f32 %v2876, %v2877
      %v2879 = vrot.slane %v2878, 1
      %v2880 = vadd.f32 %v2878, %v2879
      %v2881 = vadd.f32 %v2841, %v2843
      %v2882 = vadd.f32 %v2881, %v2845
      %v2883 = vadd.f32 %v2882, %v2847
      %v2884 = vrot.slane %v2883, 4
      %v2885 = vadd.f32 %v2883, %v2884
      %v2886 = vrot.slane %v2885, 2
      %v2887 = vadd.f32 %v2885, %v2886
      %v2888 = vrot.slane %v2887, 1
      %v2889 = vadd.f32 %v2887, %v2888
      %v2890 = vadd.f32 %v2848, %v2850
      %v2891 = vadd.f32 %v2890, %v2852
      %v2892 = vadd.f32 %v2891, %v2854
      %v2893 = vrot.slane %v2892, 4
      %v2894 = vadd.f32 %v2892, %v2893
      %v2895 = vrot.slane %v2894, 2
      %v2896 = vadd.f32 %v2894, %v2895
      %v2897 = vrot.slane %v2896, 1
      %v2898 = vadd.f32 %v2896, %v2897
      %v2899 = vadd.f32 %v2849, %v2851
      %v2900 = vadd.f32 %v2899, %v2853
      %v2901 = vadd.f32 %v2900, %v2855
      %v2902 = vrot.slane %v2901, 4
      %v2903 = vadd.f32 %v2901, %v2902
      %v2904 = vrot.slane %v2903, 2
      %v2905 = vadd.f32 %v2903, %v2904
      %v2906 = vrot.slane %v2905, 1
      %v2907 = vadd.f32 %v2905, %v2906
      %v2908 = vadd.f32 %v2856, %v2858
      %v2909 = vadd.f32 %v2908, %v2860
      %v2910 = vadd.f32 %v2909, %v2862
      %v2911 = vrot.slane %v2910, 4
      %v2912 = vadd.f32 %v2910, %v2911
      %v2913 = vrot.slane %v2912, 2
      %v2914 = vadd.f32 %v2912, %v2913
      %v2915 = vrot.slane %v2914, 1
      %v2916 = vadd.f32 %v2914, %v2915
      %v2917 = vadd.f32 %v2857, %v2859
      %v2918 = vadd.f32 %v2917, %v2861
      %v2919 = vadd.f32 %v2918, %v2863
      %v2920 = vrot.slane %v2919, 4
      %v2921 = vadd.f32 %v2919, %v2920
      %v2922 = vrot.slane %v2921, 2
      %v2923 = vadd.f32 %v2921, %v2922
      %v2924 = vrot.slane %v2923, 1
      %v2925 = vadd.f32 %v2923, %v2924
      %v2926 = vadd.f32 %v2864, %v2866
      %v2927 = vadd.f32 %v2926, %v2868
      %v2928 = vadd.f32 %v2927, %v2870
      %v2929 = vrot.slane %v2928, 4
      %v2930 = vadd.f32 %v2928, %v2929
      %v2931 = vrot.slane %v2930, 2
      %v2932 = vadd.f32 %v2930, %v2931
      %v2933 = vrot.slane %v2932, 1
      %v2934 = vadd.f32 %v2932, %v2933
      %v2935 = vadd.f32 %v2865, %v2867
      %v2936 = vadd.f32 %v2935, %v2869
      %v2937 = vadd.f32 %v2936, %v2871
      %v2938 = vrot.slane %v2937, 4
      %v2939 = vadd.f32 %v2937, %v2938
      %v2940 = vrot.slane %v2939, 2
      %v2941 = vadd.f32 %v2939, %v2940
      %v2942 = vrot.slane %v2941, 1
      %v2943 = vadd.f32 %v2941, %v2942
      %v2944 = vmul.f32 %v2840, %v2840
      %v2945 = vmul.f32 %v2841, %v2841
      %v2946 = vmul.f32 %v2842, %v2842
      %v2947 = vmul.f32 %v2843, %v2843
      %v2948 = vmul.f32 %v2844, %v2844
      %v2949 = vmul.f32 %v2845, %v2845
      %v2950 = vmul.f32 %v2846, %v2846
      %v2951 = vmul.f32 %v2847, %v2847
      %v2952 = vmul.f32 %v2848, %v2848
      %v2953 = vmul.f32 %v2849, %v2849
      %v2954 = vmul.f32 %v2850, %v2850
      %v2955 = vmul.f32 %v2851, %v2851
      %v2956 = vmul.f32 %v2852, %v2852
      %v2957 = vmul.f32 %v2853, %v2853
      %v2958 = vmul.f32 %v2854, %v2854
      %v2959 = vmul.f32 %v2855, %v2855
      %v2960 = vmul.f32 %v2856, %v2856
      %v2961 = vmul.f32 %v2857, %v2857
      %v2962 = vmul.f32 %v2858, %v2858
      %v2963 = vmul.f32 %v2859, %v2859
      %v2964 = vmul.f32 %v2860, %v2860
      %v2965 = vmul.f32 %v2861, %v2861
      %v2966 = vmul.f32 %v2862, %v2862
      %v2967 = vmul.f32 %v2863, %v2863
      %v2968 = vmul.f32 %v2864, %v2864
      %v2969 = vmul.f32 %v2865, %v2865
      %v2970 = vmul.f32 %v2866, %v2866
      %v2971 = vmul.f32 %v2867, %v2867
      %v2972 = vmul.f32 %v2868, %v2868
      %v2973 = vmul.f32 %v2869, %v2869
      %v2974 = vmul.f32 %v2870, %v2870
      %v2975 = vmul.f32 %v2871, %v2871
      %v2976 = vadd.f32 %v2944, %v2946
      %v2977 = vadd.f32 %v2976, %v2948
      %v2978 = vadd.f32 %v2977, %v2950
      %v2979 = vrot.slane %v2978, 4
      %v2980 = vadd.f32 %v2978, %v2979
      %v2981 = vrot.slane %v2980, 2
      %v2982 = vadd.f32 %v2980, %v2981
      %v2983 = vrot.slane %v2982, 1
      %v2984 = vadd.f32 %v2982, %v2983
      %v2985 = vadd.f32 %v2945, %v2947
      %v2986 = vadd.f32 %v2985, %v2949
      %v2987 = vadd.f32 %v2986, %v2951
      %v2988 = vrot.slane %v2987, 4
      %v2989 = vadd.f32 %v2987, %v2988
      %v2990 = vrot.slane %v2989, 2
      %v2991 = vadd.f32 %v2989, %v2990
      %v2992 = vrot.slane %v2991, 1
      %v2993 = vadd.f32 %v2991, %v2992
      %v2994 = vadd.f32 %v2952, %v2954
      %v2995 = vadd.f32 %v2994, %v2956
      %v2996 = vadd.f32 %v2995, %v2958
      %v2997 = vrot.slane %v2996, 4
      %v2998 = vadd.f32 %v2996, %v2997
      %v2999 = vrot.slane %v2998, 2
      %v3000 = vadd.f32 %v2998, %v2999
      %v3001 = vrot.slane %v3000, 1
      %v3002 = vadd.f32 %v3000, %v3001
      %v3003 = vadd.f32 %v2953, %v2955
      %v3004 = vadd.f32 %v3003, %v2957
      %v3005 = vadd.f32 %v3004, %v2959
      %v3006 = vrot.slane %v3005, 4
      %v3007 = vadd.f32 %v3005, %v3006
      %v3008 = vrot.slane %v3007, 2
      %v3009 = vadd.f32 %v3007, %v3008
      %v3010 = vrot.slane %v3009, 1
      %v3011 = vadd.f32 %v3009, %v3010
      %v3012 = vadd.f32 %v2960, %v2962
      %v3013 = vadd.f32 %v3012, %v2964
      %v3014 = vadd.f32 %v3013, %v2966
      %v3015 = vrot.slane %v3014, 4
      %v3016 = vadd.f32 %v3014, %v3015
      %v3017 = vrot.slane %v3016, 2
      %v3018 = vadd.f32 %v3016, %v3017
      %v3019 = vrot.slane %v3018, 1
      %v3020 = vadd.f32 %v3018, %v3019
      %v3021 = vadd.f32 %v2961, %v2963
      %v3022 = vadd.f32 %v3021, %v2965
      %v3023 = vadd.f32 %v3022, %v2967
      %v3024 = vrot.slane %v3023, 4
      %v3025 = vadd.f32 %v3023, %v3024
      %v3026 = vrot.slane %v3025, 2
      %v3027 = vadd.f32 %v3025, %v3026
      %v3028 = vrot.slane %v3027, 1
      %v3029 = vadd.f32 %v3027, %v3028
      %v3030 = vadd.f32 %v2968, %v2970
      %v3031 = vadd.f32 %v3030, %v2972
      %v3032 = vadd.f32 %v3031, %v2974
      %v3033 = vrot.slane %v3032, 4
      %v3034 = vadd.f32 %v3032, %v3033
      %v3035 = vrot.slane %v3034, 2
      %v3036 = vadd.f32 %v3034, %v3035
      %v3037 = vrot.slane %v3036, 1
      %v3038 = vadd.f32 %v3036, %v3037
      %v3039 = vadd.f32 %v2969, %v2971
      %v3040 = vadd.f32 %v3039, %v2973
      %v3041 = vadd.f32 %v3040, %v2975
      %v3042 = vrot.slane %v3041, 4
      %v3043 = vadd.f32 %v3041, %v3042
      %v3044 = vrot.slane %v3043, 2
      %v3045 = vadd.f32 %v3043, %v3044
      %v3046 = vrot.slane %v3045, 1
      %v3047 = vadd.f32 %v3045, %v3046
      %v3056 = vsel %vm1581, %v2898, %v2880
      %v3057 = vsel %vm1583, %v2916, %v3056
      %v3058 = vsel %vm1585, %v2934, %v3057
      %v3059 = vsel %vm1581, %v2907, %v2889
      %v3060 = vsel %vm1583, %v2925, %v3059
      %v3061 = vsel %vm1585, %v2943, %v3060
      %3064 = vmatprep.subr.mxu0 %v484
      %3065 = vmatpush1.msra.mxu0 %v483
      %3066 = vmatprep.subr.mxu0 %v482
      %3067 = vmatpush1.msra.mxu0 %v481
      %3068 = vmatprep.subr.mxu0 %v480
      %3069 = vmatpush1.msra.mxu0 %v479
      %3070 = vmatprep.subr.mxu0 %v478
      %3071 = vmatpush1.msra.mxu0 %v477
      %3072 = vmatprep.subr.mxu0 %v476
      %3073 = vmatpush1.msra.mxu0 %v475
      %3074 = vmatprep.subr.mxu0 %v474
      %3075 = vmatpush1.msra.mxu0 %v473
      %3076 = vmatprep.subr.mxu0 %v472
      %3077 = vmatpush1.msra.mxu0 %v471
      %3078 = vmatprep.subr.mxu0 %v470
      %3079 = vmatpush1.msra.mxu0 %v469
      %3080 = vmatprep.subr.mxu0 %v468
      %3081 = vmatpush1.msra.mxu0 %v467
      %3082 = vmatprep.subr.mxu0 %v466
      %3083 = vmatpush1.msra.mxu0 %v465
      %3084 = vmatprep.subr.mxu0 %v464
      %3085 = vmatpush1.msra.mxu0 %v463
      %3086 = vmatprep.subr.mxu0 %v462
      %3087 = vmatpush1.msra.mxu0 %v461
      %3088 = vmatprep.subr.mxu0 %v460
      %3089 = vmatpush1.msra.mxu0 %v459
      %3090 = vmatprep.subr.mxu0 %v458
      %3091 = vmatpush1.msra.mxu0 %v457
      %3092 = vmatprep.subr.mxu0 %v456
      %3093 = vmatpush1.msra.mxu0 %v455
      %3094 = vmatprep.subr.mxu0 %v454
      %3095 = vmatpush1.msra.mxu0 %v453
      %3096 = vmatprep.subr.mxu0 %v516
      %3097 = vmatpush2.msra.mxu0 %v515
      %3098 = vmatprep.subr.mxu0 %v514
      %3099 = vmatpush2.msra.mxu0 %v513
      %3100 = vmatprep.subr.mxu0 %v512
      %3101 = vmatpush2.msra.mxu0 %v511
      %3102 = vmatprep.subr.mxu0 %v510
      %3103 = vmatpush2.msra.mxu0 %v509
      %3104 = vmatprep.subr.mxu0 %v508
      %3105 = vmatpush2.msra.mxu0 %v507
      %3106 = vmatprep.subr.mxu0 %v506
      %3107 = vmatpush2.msra.mxu0 %v505
      %3108 = vmatprep.subr.mxu0 %v504
      %3109 = vmatpush2.msra.mxu0 %v503
      %3110 = vmatprep.subr.mxu0 %v502
      %3111 = vmatpush2.msra.mxu0 %v501
      %3112 = vmatprep.subr.mxu0 %v500
      %3113 = vmatpush2.msra.mxu0 %v499
      %3114 = vmatprep.subr.mxu0 %v498
      %3115 = vmatpush2.msra.mxu0 %v497
      %3116 = vmatprep.subr.mxu0 %v496
      %3117 = vmatpush2.msra.mxu0 %v495
      %3118 = vmatprep.subr.mxu0 %v494
      %3119 = vmatpush2.msra.mxu0 %v493
      %3120 = vmatprep.subr.mxu0 %v492
      %3121 = vmatpush2.msra.mxu0 %v491
      %3122 = vmatprep.subr.mxu0 %v490
      %3123 = vmatpush2.msra.mxu0 %v489
      %3124 = vmatprep.subr.mxu0 %v488
      %3125 = vmatpush2.msra.mxu0 %v487
      %3126 = vmatprep.subr.mxu0 %v486
      %3127 = vmatpush2.msra.mxu0 %v485
      %3128 = vmatprep.mubr.f32.mxu0 %v3061
      %3129 = vmatmul.mubr.f32.gmra.mxu0 %v3058
      %v3130 = vpop.f32.mrf.mxu0
      %v3131 = vadd.f32 0.0, %v3130
      %v3132 = vpop.f32.mrf.mxu0
      %v3133 = vadd.f32 0.0, %v3132
      %3134 = vdwg.mxu0
      %v3135 = vmul.f32 %v3131, 0.001953125
      %v3136 = vmul.f32 %v3133, 0.001953125
      %v3145 = vsel %vm1581, %v3002, %v2984
      %v3146 = vsel %vm1583, %v3020, %v3145
      %v3147 = vsel %vm1585, %v3038, %v3146
      %v3148 = vsel %vm1581, %v3011, %v2993
      %v3149 = vsel %vm1583, %v3029, %v3148
      %v3150 = vsel %vm1585, %v3047, %v3149
      %3153 = vmatprep.subr.mxu0 %v484
      %3154 = vmatpush1.msra.mxu0 %v483
      %3155 = vmatprep.subr.mxu0 %v482
      %3156 = vmatpush1.msra.mxu0 %v481
      %3157 = vmatprep.subr.mxu0 %v480
      %3158 = vmatpush1.msra.mxu0 %v479
      %3159 = vmatprep.subr.mxu0 %v478
      %3160 = vmatpush1.msra.mxu0 %v477
      %3161 = vmatprep.subr.mxu0 %v476
      %3162 = vmatpush1.msra.mxu0 %v475
      %3163 = vmatprep.subr.mxu0 %v474
      %3164 = vmatpush1.msra.mxu0 %v473
      %3165 = vmatprep.subr.mxu0 %v472
      %3166 = vmatpush1.msra.mxu0 %v471
      %3167 = vmatprep.subr.mxu0 %v470
      %3168 = vmatpush1.msra.mxu0 %v469
      %3169 = vmatprep.subr.mxu0 %v468
      %3170 = vmatpush1.msra.mxu0 %v467
      %3171 = vmatprep.subr.mxu0 %v466
      %3172 = vmatpush1.msra.mxu0 %v465
      %3173 = vmatprep.subr.mxu0 %v464
      %3174 = vmatpush1.msra.mxu0 %v463
      %3175 = vmatprep.subr.mxu0 %v462
      %3176 = vmatpush1.msra.mxu0 %v461
      %3177 = vmatprep.subr.mxu0 %v460
      %3178 = vmatpush1.msra.mxu0 %v459
      %3179 = vmatprep.subr.mxu0 %v458
      %3180 = vmatpush1.msra.mxu0 %v457
      %3181 = vmatprep.subr.mxu0 %v456
      %3182 = vmatpush1.msra.mxu0 %v455
      %3183 = vmatprep.subr.mxu0 %v454
      %3184 = vmatpush1.msra.mxu0 %v453
      %3185 = vmatprep.subr.mxu0 %v516
      %3186 = vmatpush2.msra.mxu0 %v515
      %3187 = vmatprep.subr.mxu0 %v514
      %3188 = vmatpush2.msra.mxu0 %v513
      %3189 = vmatprep.subr.mxu0 %v512
      %3190 = vmatpush2.msra.mxu0 %v511
      %3191 = vmatprep.subr.mxu0 %v510
      %3192 = vmatpush2.msra.mxu0 %v509
      %3193 = vmatprep.subr.mxu0 %v508
      %3194 = vmatpush2.msra.mxu0 %v507
      %3195 = vmatprep.subr.mxu0 %v506
      %3196 = vmatpush2.msra.mxu0 %v505
      %3197 = vmatprep.subr.mxu0 %v504
      %3198 = vmatpush2.msra.mxu0 %v503
      %3199 = vmatprep.subr.mxu0 %v502
      %3200 = vmatpush2.msra.mxu0 %v501
      %3201 = vmatprep.subr.mxu0 %v500
      %3202 = vmatpush2.msra.mxu0 %v499
      %3203 = vmatprep.subr.mxu0 %v498
      %3204 = vmatpush2.msra.mxu0 %v497
      %3205 = vmatprep.subr.mxu0 %v496
      %3206 = vmatpush2.msra.mxu0 %v495
      %3207 = vmatprep.subr.mxu0 %v494
      %3208 = vmatpush2.msra.mxu0 %v493
      %3209 = vmatprep.subr.mxu0 %v492
      %3210 = vmatpush2.msra.mxu0 %v491
      %3211 = vmatprep.subr.mxu0 %v490
      %3212 = vmatpush2.msra.mxu0 %v489
      %3213 = vmatprep.subr.mxu0 %v488
      %3214 = vmatpush2.msra.mxu0 %v487
      %3215 = vmatprep.subr.mxu0 %v486
      %3216 = vmatpush2.msra.mxu0 %v485
      %3217 = vmatprep.mubr.f32.mxu0 %v3150
      %3218 = vmatmul.mubr.f32.gmra.mxu0 %v3147
      %v3219 = vpop.f32.mrf.mxu0
      %v3220 = vadd.f32 0.0, %v3219
      %v3221 = vpop.f32.mrf.mxu0
      %v3222 = vadd.f32 0.0, %v3221
      %3223 = vdwg.mxu0
      %v3224 = vmul.f32 %v3220, 0.001953125
      %v3225 = vmul.f32 %v3222, 0.001953125
      %v3226 = vmul.f32 %v3135, %v3135
      %v3227 = vmul.f32 %v3136, %v3136
      %v3228 = vsub.f32 %v3224, %v3226
      %v3229 = vsub.f32 %v3225, %v3227
      %v3230 = vadd.f32 %v3228, 1e-05
      %v3231 = vadd.f32 %v3229, 1e-05
      %v3232 = vrsqrt.pop %v3230
      %v3233 = vrsqrt.pop %v3231
      %v3236 = vcombine.low %v3135, %v3136
      %v3238 = vunpack.c.l.s4 1966171168
      %v3239 = vunpack.c.0.s8 %v3238
      %v3240 = vlaneseq
      %v3241 = vshrl.u32 %v3240, 7
      %v3242 = vsub.s32 %v3239, %v3241
      %v3243 = vrot.slane %v3236, %v3242
      %v3244 = vcombine.high %v3243, %v3243
      %v3246 = vunpack.c.l.s4 1966171168
      %v3247 = vunpack.c.0.s8 %v3246
      %v3248 = vlaneseq
      %v3249 = vshrl.u32 %v3248, 7
      %v3250 = vsub.s32 %v3247, %v3249
      %v3251 = vrot.slane %v3243, %v3250
      %v3253 = vunpack.c.l.s4 1966171168
      %v3254 = vunpack.c.0.s8 %v3253
      %v3255 = vlaneseq
      %v3256 = vshrl.u32 %v3255, 7
      %v3257 = vsub.s32 %v3254, %v3256
      %v3258 = vrot.slane %v3244, %v3257
      %v3259 = vcombine.high %v3251, %v3251
      %v3260 = vcombine.high %v3258, %v3258
      %v3261 = vlaneseq
      %v3262 = vshrl.u32 %v3261, 7
      %v3263 = vsub.s32 0, %v3262
      %v3264 = vrot.slane %v3251, %v3263
      %v3265 = vlaneseq
      %v3266 = vshrl.u32 %v3265, 7
      %v3267 = vsub.s32 1, %v3266
      %v3268 = vrot.slane %v3251, %v3267
      %v3269 = vlaneseq
      %v3270 = vshrl.u32 %v3269, 7
      %v3271 = vsub.s32 0, %v3270
      %v3272 = vrot.slane %v3258, %v3271
      %v3273 = vlaneseq
      %v3274 = vshrl.u32 %v3273, 7
      %v3275 = vsub.s32 1, %v3274
      %v3276 = vrot.slane %v3258, %v3275
      %v3277 = vlaneseq
      %v3278 = vshrl.u32 %v3277, 7
      %v3279 = vsub.s32 0, %v3278
      %v3280 = vrot.slane %v3259, %v3279
      %v3281 = vlaneseq
      %v3282 = vshrl.u32 %v3281, 7
      %v3283 = vsub.s32 1, %v3282
      %v3284 = vrot.slane %v3259, %v3283
      %v3285 = vlaneseq
      %v3286 = vshrl.u32 %v3285, 7
      %v3287 = vsub.s32 0, %v3286
      %v3288 = vrot.slane %v3260, %v3287
      %v3289 = vlaneseq
      %v3290 = vshrl.u32 %v3289, 7
      %v3291 = vsub.s32 1, %v3290
      %v3292 = vrot.slane %v3260, %v3291
      %v3301 = vsub.f32 %v2840, %v3264
      %v3302 = vsub.f32 %v2841, %v3268
      %v3303 = vsub.f32 %v2842, %v3264
      %v3304 = vsub.f32 %v2843, %v3268
      %v3305 = vsub.f32 %v2844, %v3264
      %v3306 = vsub.f32 %v2845, %v3268
      %v3307 = vsub.f32 %v2846, %v3264
      %v3308 = vsub.f32 %v2847, %v3268
      %v3309 = vsub.f32 %v2848, %v3272
      %v3310 = vsub.f32 %v2849, %v3276
      %v3311 = vsub.f32 %v2850, %v3272
      %v3312 = vsub.f32 %v2851, %v3276
      %v3313 = vsub.f32 %v2852, %v3272
      %v3314 = vsub.f32 %v2853, %v3276
      %v3315 = vsub.f32 %v2854, %v3272
      %v3316 = vsub.f32 %v2855, %v3276
      %v3317 = vsub.f32 %v2856, %v3280
      %v3318 = vsub.f32 %v2857, %v3284
      %v3319 = vsub.f32 %v2858, %v3280
      %v3320 = vsub.f32 %v2859, %v3284
      %v3321 = vsub.f32 %v2860, %v3280
      %v3322 = vsub.f32 %v2861, %v3284
      %v3323 = vsub.f32 %v2862, %v3280
      %v3324 = vsub.f32 %v2863, %v3284
      %v3325 = vsub.f32 %v2864, %v3288
      %v3326 = vsub.f32 %v2865, %v3292
      %v3327 = vsub.f32 %v2866, %v3288
      %v3328 = vsub.f32 %v2867, %v3292
      %v3329 = vsub.f32 %v2868, %v3288
      %v3330 = vsub.f32 %v2869, %v3292
      %v3331 = vsub.f32 %v2870, %v3288
      %v3332 = vsub.f32 %v2871, %v3292
      %v3335 = vcombine.low %v3232, %v3233
      %v3337 = vunpack.c.l.s4 1966171168
      %v3338 = vunpack.c.0.s8 %v3337
      %v3339 = vlaneseq
      %v3340 = vshrl.u32 %v3339, 7
      %v3341 = vsub.s32 %v3338, %v3340
      %v3342 = vrot.slane %v3335, %v3341
      %v3343 = vcombine.high %v3342, %v3342
      %v3345 = vunpack.c.l.s4 1966171168
      %v3346 = vunpack.c.0.s8 %v3345
      %v3347 = vlaneseq
      %v3348 = vshrl.u32 %v3347, 7
      %v3349 = vsub.s32 %v3346, %v3348
      %v3350 = vrot.slane %v3342, %v3349
      %v3352 = vunpack.c.l.s4 1966171168
      %v3353 = vunpack.c.0.s8 %v3352
      %v3354 = vlaneseq
      %v3355 = vshrl.u32 %v3354, 7
      %v3356 = vsub.s32 %v3353, %v3355
      %v3357 = vrot.slane %v3343, %v3356
      %v3358 = vcombine.high %v3350, %v3350
      %v3359 = vcombine.high %v3357, %v3357
      %v3360 = vlaneseq
      %v3361 = vshrl.u32 %v3360, 7
      %v3362 = vsub.s32 0, %v3361
      %v3363 = vrot.slane %v3350, %v3362
      %v3364 = vlaneseq
      %v3365 = vshrl.u32 %v3364, 7
      %v3366 = vsub.s32 1, %v3365
      %v3367 = vrot.slane %v3350, %v3366
      %v3368 = vlaneseq
      %v3369 = vshrl.u32 %v3368, 7
      %v3370 = vsub.s32 0, %v3369
      %v3371 = vrot.slane %v3357, %v3370
      %v3372 = vlaneseq
      %v3373 = vshrl.u32 %v3372, 7
      %v3374 = vsub.s32 1, %v3373
      %v3375 = vrot.slane %v3357, %v3374
      %v3376 = vlaneseq
      %v3377 = vshrl.u32 %v3376, 7
      %v3378 = vsub.s32 0, %v3377
      %v3379 = vrot.slane %v3358, %v3378
      %v3380 = vlaneseq
      %v3381 = vshrl.u32 %v3380, 7
      %v3382 = vsub.s32 1, %v3381
      %v3383 = vrot.slane %v3358, %v3382
      %v3384 = vlaneseq
      %v3385 = vshrl.u32 %v3384, 7
      %v3386 = vsub.s32 0, %v3385
      %v3387 = vrot.slane %v3359, %v3386
      %v3388 = vlaneseq
      %v3389 = vshrl.u32 %v3388, 7
      %v3390 = vsub.s32 1, %v3389
      %v3391 = vrot.slane %v3359, %v3390
      %v3400 = vmul.f32 %v3301, %v3363
      %v3401 = vmul.f32 %v3302, %v3367
      %v3402 = vmul.f32 %v3303, %v3363
      %v3403 = vmul.f32 %v3304, %v3367
      %v3404 = vmul.f32 %v3305, %v3363
      %v3405 = vmul.f32 %v3306, %v3367
      %v3406 = vmul.f32 %v3307, %v3363
      %v3407 = vmul.f32 %v3308, %v3367
      %v3408 = vmul.f32 %v3309, %v3371
      %v3409 = vmul.f32 %v3310, %v3375
      %v3410 = vmul.f32 %v3311, %v3371
      %v3411 = vmul.f32 %v3312, %v3375
      %v3412 = vmul.f32 %v3313, %v3371
      %v3413 = vmul.f32 %v3314, %v3375
      %v3414 = vmul.f32 %v3315, %v3371
      %v3415 = vmul.f32 %v3316, %v3375
      %v3416 = vmul.f32 %v3317, %v3379
      %v3417 = vmul.f32 %v3318, %v3383
      %v3418 = vmul.f32 %v3319, %v3379
      %v3419 = vmul.f32 %v3320, %v3383
      %v3420 = vmul.f32 %v3321, %v3379
      %v3421 = vmul.f32 %v3322, %v3383
      %v3422 = vmul.f32 %v3323, %v3379
      %v3423 = vmul.f32 %v3324, %v3383
      %v3424 = vmul.f32 %v3325, %v3387
      %v3425 = vmul.f32 %v3326, %v3391
      %v3426 = vmul.f32 %v3327, %v3387
      %v3427 = vmul.f32 %v3328, %v3391
      %v3428 = vmul.f32 %v3329, %v3387
      %v3429 = vmul.f32 %v3330, %v3391
      %v3430 = vmul.f32 %v3331, %v3387
      %v3431 = vmul.f32 %v3332, %v3391
      %v3432 = vadd.f32 %v3400, %v3402
      %v3433 = vrot.slane %v3432, 4
      %v3434 = vadd.f32 %v3432, %v3433
      %v3435 = vrot.slane %v3434, 2
      %v3436 = vadd.f32 %v3434, %v3435
      %v3437 = vrot.slane %v3436, 1
      %v3438 = vadd.f32 %v3436, %v3437
      %v3439 = vadd.f32 %v3401, %v3403
      %v3440 = vrot.slane %v3439, 4
      %v3441 = vadd.f32 %v3439, %v3440
      %v3442 = vrot.slane %v3441, 2
      %v3443 = vadd.f32 %v3441, %v3442
      %v3444 = vrot.slane %v3443, 1
      %v3445 = vadd.f32 %v3443, %v3444
      %v3446 = vadd.f32 %v3408, %v3410
      %v3447 = vrot.slane %v3446, 4
      %v3448 = vadd.f32 %v3446, %v3447
      %v3449 = vrot.slane %v3448, 2
      %v3450 = vadd.f32 %v3448, %v3449
      %v3451 = vrot.slane %v3450, 1
      %v3452 = vadd.f32 %v3450, %v3451
      %v3453 = vadd.f32 %v3409, %v3411
      %v3454 = vrot.slane %v3453, 4
      %v3455 = vadd.f32 %v3453, %v3454
      %v3456 = vrot.slane %v3455, 2
      %v3457 = vadd.f32 %v3455, %v3456
      %v3458 = vrot.slane %v3457, 1
      %v3459 = vadd.f32 %v3457, %v3458
      %v3460 = vadd.f32 %v3416, %v3418
      %v3461 = vrot.slane %v3460, 4
      %v3462 = vadd.f32 %v3460, %v3461
      %v3463 = vrot.slane %v3462, 2
      %v3464 = vadd.f32 %v3462, %v3463
      %v3465 = vrot.slane %v3464, 1
      %v3466 = vadd.f32 %v3464, %v3465
      %v3467 = vadd.f32 %v3417, %v3419
      %v3468 = vrot.slane %v3467, 4
      %v3469 = vadd.f32 %v3467, %v3468
      %v3470 = vrot.slane %v3469, 2
      %v3471 = vadd.f32 %v3469, %v3470
      %v3472 = vrot.slane %v3471, 1
      %v3473 = vadd.f32 %v3471, %v3472
      %v3474 = vadd.f32 %v3424, %v3426
      %v3475 = vrot.slane %v3474, 4
      %v3476 = vadd.f32 %v3474, %v3475
      %v3477 = vrot.slane %v3476, 2
      %v3478 = vadd.f32 %v3476, %v3477
      %v3479 = vrot.slane %v3478, 1
      %v3480 = vadd.f32 %v3478, %v3479
      %v3481 = vadd.f32 %v3425, %v3427
      %v3482 = vrot.slane %v3481, 4
      %v3483 = vadd.f32 %v3481, %v3482
      %v3484 = vrot.slane %v3483, 2
      %v3485 = vadd.f32 %v3483, %v3484
      %v3486 = vrot.slane %v3485, 1
      %v3487 = vadd.f32 %v3485, %v3486
      %v3488 = vadd.f32 %v3404, %v3406
      %v3489 = vrot.slane %v3488, 4
      %v3490 = vadd.f32 %v3488, %v3489
      %v3491 = vrot.slane %v3490, 2
      %v3492 = vadd.f32 %v3490, %v3491
      %v3493 = vrot.slane %v3492, 1
      %v3494 = vadd.f32 %v3492, %v3493
      %v3495 = vadd.f32 %v3405, %v3407
      %v3496 = vrot.slane %v3495, 4
      %v3497 = vadd.f32 %v3495, %v3496
      %v3498 = vrot.slane %v3497, 2
      %v3499 = vadd.f32 %v3497, %v3498
      %v3500 = vrot.slane %v3499, 1
      %v3501 = vadd.f32 %v3499, %v3500
      %v3502 = vadd.f32 %v3412, %v3414
      %v3503 = vrot.slane %v3502, 4
      %v3504 = vadd.f32 %v3502, %v3503
      %v3505 = vrot.slane %v3504, 2
      %v3506 = vadd.f32 %v3504, %v3505
      %v3507 = vrot.slane %v3506, 1
      %v3508 = vadd.f32 %v3506, %v3507
      %v3509 = vadd.f32 %v3413, %v3415
      %v3510 = vrot.slane %v3509, 4
      %v3511 = vadd.f32 %v3509, %v3510
      %v3512 = vrot.slane %v3511, 2
      %v3513 = vadd.f32 %v3511, %v3512
      %v3514 = vrot.slane %v3513, 1
      %v3515 = vadd.f32 %v3513, %v3514
      %v3516 = vadd.f32 %v3420, %v3422
      %v3517 = vrot.slane %v3516, 4
      %v3518 = vadd.f32 %v3516, %v3517
      %v3519 = vrot.slane %v3518, 2
      %v3520 = vadd.f32 %v3518, %v3519
      %v3521 = vrot.slane %v3520, 1
      %v3522 = vadd.f32 %v3520, %v3521
      %v3523 = vadd.f32 %v3421, %v3423
      %v3524 = vrot.slane %v3523, 4
      %v3525 = vadd.f32 %v3523, %v3524
      %v3526 = vrot.slane %v3525, 2
      %v3527 = vadd.f32 %v3525, %v3526
      %v3528 = vrot.slane %v3527, 1
      %v3529 = vadd.f32 %v3527, %v3528
      %v3530 = vadd.f32 %v3428, %v3430
      %v3531 = vrot.slane %v3530, 4
      %v3532 = vadd.f32 %v3530, %v3531
      %v3533 = vrot.slane %v3532, 2
      %v3534 = vadd.f32 %v3532, %v3533
      %v3535 = vrot.slane %v3534, 1
      %v3536 = vadd.f32 %v3534, %v3535
      %v3537 = vadd.f32 %v3429, %v3431
      %v3538 = vrot.slane %v3537, 4
      %v3539 = vadd.f32 %v3537, %v3538
      %v3540 = vrot.slane %v3539, 2
      %v3541 = vadd.f32 %v3539, %v3540
      %v3542 = vrot.slane %v3541, 1
      %v3543 = vadd.f32 %v3541, %v3542
      %v3552 = vsel %vm1581, %v3452, %v3438
      %v3553 = vsel %vm1583, %v3466, %v3552
      %v3554 = vsel %vm1585, %v3480, %v3553
      %v3555 = vsel %vm1581, %v3459, %v3445
      %v3556 = vsel %vm1583, %v3473, %v3555
      %v3557 = vsel %vm1585, %v3487, %v3556
      %v3568 = vsel %vm1581, %v3508, %v3494
      %v3569 = vsel %vm1583, %v3522, %v3568
      %v3570 = vsel %vm1585, %v3536, %v3569
      %v3571 = vsel %vm1581, %v3515, %v3501
      %v3572 = vsel %vm1583, %v3529, %v3571
      %v3573 = vsel %vm1585, %v3543, %v3572
      %v3576 = vld [vmem:[%s5] sm:$0xff]
      %v3577 = vld [vmem:[%s5 + $0x8] sm:$0xff]
      %v3578 = vld [vmem:[%s5 + $0x10] sm:$0xff]
      %v3579 = vld [vmem:[%s5 + $0x18] sm:$0xff]
      %v3580 = vld [vmem:[%s5 + $0x20] sm:$0xff]
      %v3581 = vld [vmem:[%s5 + $0x28] sm:$0xff]
      %v3582 = vld [vmem:[%s5 + $0x30] sm:$0xff]
      %v3583 = vld [vmem:[%s5 + $0x38] sm:$0xff]
      %v3584 = vld [vmem:[%s5 + $0x40] sm:$0xff]
      %v3585 = vld [vmem:[%s5 + $0x48] sm:$0xff]
      %v3586 = vld [vmem:[%s5 + $0x50] sm:$0xff]
      %v3587 = vld [vmem:[%s5 + $0x58] sm:$0xff]
      %v3588 = vld [vmem:[%s5 + $0x60] sm:$0xff]
      %v3589 = vld [vmem:[%s5 + $0x68] sm:$0xff]
      %v3590 = vld [vmem:[%s5 + $0x70] sm:$0xff]
      %v3591 = vld [vmem:[%s5 + $0x78] sm:$0xff]
      %v3592 = vld [vmem:[%s5 + $0x80] sm:$0xff]
      %v3593 = vld [vmem:[%s5 + $0x88] sm:$0xff]
      %v3594 = vld [vmem:[%s5 + $0x90] sm:$0xff]
      %v3595 = vld [vmem:[%s5 + $0x98] sm:$0xff]
      %v3596 = vld [vmem:[%s5 + $0xa0] sm:$0xff]
      %v3597 = vld [vmem:[%s5 + $0xa8] sm:$0xff]
      %v3598 = vld [vmem:[%s5 + $0xb0] sm:$0xff]
      %v3599 = vld [vmem:[%s5 + $0xb8] sm:$0xff]
      %v3600 = vld [vmem:[%s5 + $0xc0] sm:$0xff]
      %v3601 = vld [vmem:[%s5 + $0xc8] sm:$0xff]
      %v3602 = vld [vmem:[%s5 + $0xd0] sm:$0xff]
      %v3603 = vld [vmem:[%s5 + $0xd8] sm:$0xff]
      %v3604 = vld [vmem:[%s5 + $0xe0] sm:$0xff]
      %v3605 = vld [vmem:[%s5 + $0xe8] sm:$0xff]
      %v3606 = vld [vmem:[%s5 + $0xf0] sm:$0xff]
      %v3607 = vld [vmem:[%s5 + $0xf8] sm:$0xff]
      %v3608 = vld [vmem:[%s5 + $0x100] sm:$0xff]
      %v3609 = vld [vmem:[%s5 + $0x108] sm:$0xff]
      %v3610 = vld [vmem:[%s5 + $0x110] sm:$0xff]
      %v3611 = vld [vmem:[%s5 + $0x118] sm:$0xff]
      %v3612 = vld [vmem:[%s5 + $0x120] sm:$0xff]
      %v3613 = vld [vmem:[%s5 + $0x128] sm:$0xff]
      %v3614 = vld [vmem:[%s5 + $0x130] sm:$0xff]
      %v3615 = vld [vmem:[%s5 + $0x138] sm:$0xff]
      %v3616 = vld [vmem:[%s5 + $0x140] sm:$0xff]
      %v3617 = vld [vmem:[%s5 + $0x148] sm:$0xff]
      %v3618 = vld [vmem:[%s5 + $0x150] sm:$0xff]
      %v3619 = vld [vmem:[%s5 + $0x158] sm:$0xff]
      %v3620 = vld [vmem:[%s5 + $0x160] sm:$0xff]
      %v3621 = vld [vmem:[%s5 + $0x168] sm:$0xff]
      %v3622 = vld [vmem:[%s5 + $0x170] sm:$0xff]
      %v3623 = vld [vmem:[%s5 + $0x178] sm:$0xff]
      %v3624 = vld [vmem:[%s5 + $0x180] sm:$0xff]
      %v3625 = vld [vmem:[%s5 + $0x188] sm:$0xff]
      %v3626 = vld [vmem:[%s5 + $0x190] sm:$0xff]
      %v3627 = vld [vmem:[%s5 + $0x198] sm:$0xff]
      %v3628 = vld [vmem:[%s5 + $0x1a0] sm:$0xff]
      %v3629 = vld [vmem:[%s5 + $0x1a8] sm:$0xff]
      %v3630 = vld [vmem:[%s5 + $0x1b0] sm:$0xff]
      %v3631 = vld [vmem:[%s5 + $0x1b8] sm:$0xff]
      %v3632 = vld [vmem:[%s5 + $0x1c0] sm:$0xff]
      %v3633 = vld [vmem:[%s5 + $0x1c8] sm:$0xff]
      %v3634 = vld [vmem:[%s5 + $0x1d0] sm:$0xff]
      %v3635 = vld [vmem:[%s5 + $0x1d8] sm:$0xff]
      %v3636 = vld [vmem:[%s5 + $0x1e0] sm:$0xff]
      %v3637 = vld [vmem:[%s5 + $0x1e8] sm:$0xff]
      %v3638 = vld [vmem:[%s5 + $0x1f0] sm:$0xff]
      %v3639 = vld [vmem:[%s5 + $0x1f8] sm:$0xff]
      %3640 = vmatprep.subr.mxu0 0.0
      %3641 = vmatpush1.msra.mxu0 %v3591
      %3642 = vmatprep.subr.mxu0 0.0
      %3643 = vmatpush1.msra.mxu0 %v3590
      %3644 = vmatprep.subr.mxu0 0.0
      %3645 = vmatpush1.msra.mxu0 %v3589
      %3646 = vmatprep.subr.mxu0 0.0
      %3647 = vmatpush1.msra.mxu0 %v3588
      %3648 = vmatprep.subr.mxu0 0.0
      %3649 = vmatpush1.msra.mxu0 %v3587
      %3650 = vmatprep.subr.mxu0 0.0
      %3651 = vmatpush1.msra.mxu0 %v3586
      %3652 = vmatprep.subr.mxu0 0.0
      %3653 = vmatpush1.msra.mxu0 %v3585
      %3654 = vmatprep.subr.mxu0 0.0
      %3655 = vmatpush1.msra.mxu0 %v3584
      %3656 = vmatprep.subr.mxu0 0.0
      %3657 = vmatpush1.msra.mxu0 %v3583
      %3658 = vmatprep.subr.mxu0 0.0
      %3659 = vmatpush1.msra.mxu0 %v3582
      %3660 = vmatprep.subr.mxu0 0.0
      %3661 = vmatpush1.msra.mxu0 %v3581
      %3662 = vmatprep.subr.mxu0 0.0
      %3663 = vmatpush1.msra.mxu0 %v3580
      %3664 = vmatprep.subr.mxu0 0.0
      %3665 = vmatpush1.msra.mxu0 %v3579
      %3666 = vmatprep.subr.mxu0 0.0
      %3667 = vmatpush1.msra.mxu0 %v3578
      %3668 = vmatprep.subr.mxu0 0.0
      %3669 = vmatpush1.msra.mxu0 %v3577
      %3670 = vmatprep.subr.mxu0 0.0
      %3671 = vmatpush1.msra.mxu0 %v3576
      %3672 = vmatprep.subr.mxu0 0.0
      %3673 = vmatpush2.msra.mxu0 %v3607
      %3674 = vmatprep.subr.mxu0 0.0
      %3675 = vmatpush2.msra.mxu0 %v3606
      %3676 = vmatprep.subr.mxu0 0.0
      %3677 = vmatpush2.msra.mxu0 %v3605
      %3678 = vmatprep.subr.mxu0 0.0
      %3679 = vmatpush2.msra.mxu0 %v3604
      %3680 = vmatprep.subr.mxu0 0.0
      %3681 = vmatpush2.msra.mxu0 %v3603
      %3682 = vmatprep.subr.mxu0 0.0
      %3683 = vmatpush2.msra.mxu0 %v3602
      %3684 = vmatprep.subr.mxu0 0.0
      %3685 = vmatpush2.msra.mxu0 %v3601
      %3686 = vmatprep.subr.mxu0 0.0
      %3687 = vmatpush2.msra.mxu0 %v3600
      %3688 = vmatprep.subr.mxu0 0.0
      %3689 = vmatpush2.msra.mxu0 %v3599
      %3690 = vmatprep.subr.mxu0 0.0
      %3691 = vmatpush2.msra.mxu0 %v3598
      %3692 = vmatprep.subr.mxu0 0.0
      %3693 = vmatpush2.msra.mxu0 %v3597
      %3694 = vmatprep.subr.mxu0 0.0
      %3695 = vmatpush2.msra.mxu0 %v3596
      %3696 = vmatprep.subr.mxu0 0.0
      %3697 = vmatpush2.msra.mxu0 %v3595
      %3698 = vmatprep.subr.mxu0 0.0
      %3699 = vmatpush2.msra.mxu0 %v3594
      %3700 = vmatprep.subr.mxu0 0.0
      %3701 = vmatpush2.msra.mxu0 %v3593
      %3702 = vmatprep.subr.mxu0 0.0
      %3703 = vmatpush2.msra.mxu0 %v3592
      %3704 = vmatprep.mubr.f32.mxu0 %v3557
      %3705 = vmatmul.mubr.f32.gmra.mxu0 %v3554
      %v3706 = vpop.f32.mrf.mxu0
      %v3707 = vadd.f32 0.0, %v3706
      %v3708 = vpop.f32.mrf.mxu0
      %3709 = vdwg.mxu0
      %3710 = vmatprep.subr.mxu0 0.0
      %3711 = vmatpush1.msra.mxu0 %v3623
      %3712 = vmatprep.subr.mxu0 0.0
      %3713 = vmatpush1.msra.mxu0 %v3622
      %3714 = vmatprep.subr.mxu0 0.0
      %3715 = vmatpush1.msra.mxu0 %v3621
      %3716 = vmatprep.subr.mxu0 0.0
      %3717 = vmatpush1.msra.mxu0 %v3620
      %3718 = vmatprep.subr.mxu0 0.0
      %3719 = vmatpush1.msra.mxu0 %v3619
      %3720 = vmatprep.subr.mxu0 0.0
      %3721 = vmatpush1.msra.mxu0 %v3618
      %3722 = vmatprep.subr.mxu0 0.0
      %3723 = vmatpush1.msra.mxu0 %v3617
      %3724 = vmatprep.subr.mxu0 0.0
      %3725 = vmatpush1.msra.mxu0 %v3616
      %3726 = vmatprep.subr.mxu0 0.0
      %3727 = vmatpush1.msra.mxu0 %v3615
      %3728 = vmatprep.subr.mxu0 0.0
      %3729 = vmatpush1.msra.mxu0 %v3614
      %3730 = vmatprep.subr.mxu0 0.0
      %3731 = vmatpush1.msra.mxu0 %v3613
      %3732 = vmatprep.subr.mxu0 0.0
      %3733 = vmatpush1.msra.mxu0 %v3612
      %3734 = vmatprep.subr.mxu0 0.0
      %3735 = vmatpush1.msra.mxu0 %v3611
      %3736 = vmatprep.subr.mxu0 0.0
      %3737 = vmatpush1.msra.mxu0 %v3610
      %3738 = vmatprep.subr.mxu0 0.0
      %3739 = vmatpush1.msra.mxu0 %v3609
      %3740 = vmatprep.subr.mxu0 0.0
      %3741 = vmatpush1.msra.mxu0 %v3608
      %3742 = vmatprep.subr.mxu0 0.0
      %3743 = vmatpush2.msra.mxu0 %v3639
      %3744 = vmatprep.subr.mxu0 0.0
      %3745 = vmatpush2.msra.mxu0 %v3638
      %3746 = vmatprep.subr.mxu0 0.0
      %3747 = vmatpush2.msra.mxu0 %v3637
      %3748 = vmatprep.subr.mxu0 0.0
      %3749 = vmatpush2.msra.mxu0 %v3636
      %3750 = vmatprep.subr.mxu0 0.0
      %3751 = vmatpush2.msra.mxu0 %v3635
      %3752 = vmatprep.subr.mxu0 0.0
      %3753 = vmatpush2.msra.mxu0 %v3634
      %3754 = vmatprep.subr.mxu0 0.0
      %3755 = vmatpush2.msra.mxu0 %v3633
      %3756 = vmatprep.subr.mxu0 0.0
      %3757 = vmatpush2.msra.mxu0 %v3632
      %3758 = vmatprep.subr.mxu0 0.0
      %3759 = vmatpush2.msra.mxu0 %v3631
      %3760 = vmatprep.subr.mxu0 0.0
      %3761 = vmatpush2.msra.mxu0 %v3630
      %3762 = vmatprep.subr.mxu0 0.0
      %3763 = vmatpush2.msra.mxu0 %v3629
      %3764 = vmatprep.subr.mxu0 0.0
      %3765 = vmatpush2.msra.mxu0 %v3628
      %3766 = vmatprep.subr.mxu0 0.0
      %3767 = vmatpush2.msra.mxu0 %v3627
      %3768 = vmatprep.subr.mxu0 0.0
      %3769 = vmatpush2.msra.mxu0 %v3626
      %3770 = vmatprep.subr.mxu0 0.0
      %3771 = vmatpush2.msra.mxu0 %v3625
      %3772 = vmatprep.subr.mxu0 0.0
      %3773 = vmatpush2.msra.mxu0 %v3624
      %3774 = vmatprep.mubr.f32.mxu0 %v3573
      %3775 = vmatmul.mubr.f32.gmra.mxu0 %v3570
      %v3776 = vpop.f32.mrf.mxu0
      %v3777 = vadd.f32 %v3707, %v3776
      %v3778 = vpop.f32.mrf.mxu0
      %3779 = vdwg.mxu0
      %v3780 = vmax.f32 %v3777, 0.0
      %v3781 = vld [vmem:[%s6] sm:$0xff]
      %v3782 = vld [vmem:[%s6 + $0x8] sm:$0xff]
      %v3785 = vcombine.high %v3781, %v3781
      %v3786 = vcombine.high %v3782, %v3782
      %vm3787 = vcmask 31744
      %v3789 = vsel %vm3787, %v3780, 0
      %vm3791 = vcmask 1043456
      %v3792 = vsel %vm3791, %v3781, 0
      %v3794 = vsel %vm3791, %v3785, 0
      %v3796 = vsel %vm3791, %v3782, 0
      %v3798 = vsel %vm3791, %v3786, 0
      %3800 = vmatprep.subr.mxu0 0.0
      %3801 = vmatpush1.msra.mxu0 0.0
      %3802 = vmatprep.subr.mxu0 0.0
      %3803 = vmatpush1.msra.mxu0 0.0
      %3804 = vmatprep.subr.mxu0 0.0
      %3805 = vmatpush1.msra.mxu0 0.0
      %3806 = vmatprep.subr.mxu0 0.0
      %3807 = vmatpush1.msra.mxu0 0.0
      %3808 = vmatprep.subr.mxu0 0.0
      %3809 = vmatpush1.msra.mxu0 0.0
      %3810 = vmatprep.subr.mxu0 0.0
      %3811 = vmatpush1.msra.mxu0 0.0
      %3812 = vmatprep.subr.mxu0 0.0
      %3813 = vmatpush1.msra.mxu0 0.0
      %3814 = vmatprep.subr.mxu0 0.0
      %3815 = vmatpush1.msra.mxu0 0.0
      %3816 = vmatprep.subr.mxu0 0.0
      %3817 = vmatpush1.msra.mxu0 0.0
      %3818 = vmatprep.subr.mxu0 0.0
      %3819 = vmatpush1.msra.mxu0 0.0
      %3820 = vmatprep.subr.mxu0 0.0
      %3821 = vmatpush1.msra.mxu0 0.0
      %3822 = vmatprep.subr.mxu0 0.0
      %3823 = vmatpush1.msra.mxu0 0.0
      %3824 = vmatprep.subr.mxu0 0.0
      %3825 = vmatpush1.msra.mxu0 0.0
      %3826 = vmatprep.subr.mxu0 0.0
      %3827 = vmatpush1.msra.mxu0 0.0
      %3828 = vmatprep.subr.mxu0 0.0
      %3829 = vmatpush1.msra.mxu0 0.0
      %3830 = vmatprep.subr.mxu0 %v3794
      %3831 = vmatpush1.msra.mxu0 %v3792
      %3832 = vmatprep.subr.mxu0 0.0
      %3833 = vmatpush2.msra.mxu0 0.0
      %3834 = vmatprep.subr.mxu0 0.0
      %3835 = vmatpush2.msra.mxu0 0.0
      %3836 = vmatprep.subr.mxu0 0.0
      %3837 = vmatpush2.msra.mxu0 0.0
      %3838 = vmatprep.subr.mxu0 0.0
      %3839 = vmatpush2.msra.mxu0 0.0
      %3840 = vmatprep.subr.mxu0 0.0
      %3841 = vmatpush2.msra.mxu0 0.0
      %3842 = vmatprep.subr.mxu0 0.0
      %3843 = vmatpush2.msra.mxu0 0.0
      %3844 = vmatprep.subr.mxu0 0.0
      %3845 = vmatpush2.msra.mxu0 0.0
      %3846 = vmatprep.subr.mxu0 0.0
      %3847 = vmatpush2.msra.mxu0 0.0
      %3848 = vmatprep.subr.mxu0 0.0
      %3849 = vmatpush2.msra.mxu0 0.0
      %3850 = vmatprep.subr.mxu0 0.0
      %3851 = vmatpush2.msra.mxu0 0.0
      %3852 = vmatprep.subr.mxu0 0.0
      %3853 = vmatpush2.msra.mxu0 0.0
      %3854 = vmatprep.subr.mxu0 0.0
      %3855 = vmatpush2.msra.mxu0 0.0
      %3856 = vmatprep.subr.mxu0 0.0
      %3857 = vmatpush2.msra.mxu0 0.0
      %3858 = vmatprep.subr.mxu0 0.0
      %3859 = vmatpush2.msra.mxu0 0.0
      %3860 = vmatprep.subr.mxu0 0.0
      %3861 = vmatpush2.msra.mxu0 0.0
      %3862 = vmatprep.subr.mxu0 0.0
      %3863 = vmatpush2.msra.mxu0 0.0
      %3864 = vmatprep.mubr.f32.mxu0 0.0
      %3865 = vmatmul.mubr.f32.gmra.mxu0 %v3789
      %v3866 = vpop.f32.mrf.mxu0
      %v3867 = vadd.f32 0.0, %v3866
      %v3868 = vpop.f32.mrf.mxu0
      %v3869 = vadd.f32 0.0, %v3868
      %3870 = vdwg.mxu0
      %3871 = vmatprep.subr.mxu0 0.0
      %3872 = vmatpush1.msra.mxu0 0.0
      %3873 = vmatprep.subr.mxu0 0.0
      %3874 = vmatpush1.msra.mxu0 0.0
      %3875 = vmatprep.subr.mxu0 0.0
      %3876 = vmatpush1.msra.mxu0 0.0
      %3877 = vmatprep.subr.mxu0 0.0
      %3878 = vmatpush1.msra.mxu0 0.0
      %3879 = vmatprep.subr.mxu0 0.0
      %3880 = vmatpush1.msra.mxu0 0.0
      %3881 = vmatprep.subr.mxu0 0.0
      %3882 = vmatpush1.msra.mxu0 0.0
      %3883 = vmatprep.subr.mxu0 0.0
      %3884 = vmatpush1.msra.mxu0 0.0
      %3885 = vmatprep.subr.mxu0 0.0
      %3886 = vmatpush1.msra.mxu0 0.0
      %3887 = vmatprep.subr.mxu0 0.0
      %3888 = vmatpush1.msra.mxu0 0.0
      %3889 = vmatprep.subr.mxu0 0.0
      %3890 = vmatpush1.msra.mxu0 0.0
      %3891 = vmatprep.subr.mxu0 0.0
      %3892 = vmatpush1.msra.mxu0 0.0
      %3893 = vmatprep.subr.mxu0 0.0
      %3894 = vmatpush1.msra.mxu0 0.0
      %3895 = vmatprep.subr.mxu0 0.0
      %3896 = vmatpush1.msra.mxu0 0.0
      %3897 = vmatprep.subr.mxu0 0.0
      %3898 = vmatpush1.msra.mxu0 0.0
      %3899 = vmatprep.subr.mxu0 0.0
      %3900 = vmatpush1.msra.mxu0 0.0
      %3901 = vmatprep.subr.mxu0 %v3798
      %3902 = vmatpush1.msra.mxu0 %v3796
      %3903 = vmatprep.subr.mxu0 0.0
      %3904 = vmatpush2.msra.mxu0 0.0
      %3905 = vmatprep.subr.mxu0 0.0
      %3906 = vmatpush2.msra.mxu0 0.0
      %3907 = vmatprep.subr.mxu0 0.0
      %3908 = vmatpush2.msra.mxu0 0.0
      %3909 = vmatprep.subr.mxu0 0.0
      %3910 = vmatpush2.msra.mxu0 0.0
      %3911 = vmatprep.subr.mxu0 0.0
      %3912 = vmatpush2.msra.mxu0 0.0
      %3913 = vmatprep.subr.mxu0 0.0
      %3914 = vmatpush2.msra.mxu0 0.0
      %3915 = vmatprep.subr.mxu0 0.0
      %3916 = vmatpush2.msra.mxu0 0.0
      %3917 = vmatprep.subr.mxu0 0.0
      %3918 = vmatpush2.msra.mxu0 0.0
      %3919 = vmatprep.subr.mxu0 0.0
      %3920 = vmatpush2.msra.mxu0 0.0
      %3921 = vmatprep.subr.mxu0 0.0
      %3922 = vmatpush2.msra.mxu0 0.0
      %3923 = vmatprep.subr.mxu0 0.0
      %3924 = vmatpush2.msra.mxu0 0.0
      %3925 = vmatprep.subr.mxu0 0.0
      %3926 = vmatpush2.msra.mxu0 0.0
      %3927 = vmatprep.subr.mxu0 0.0
      %3928 = vmatpush2.msra.mxu0 0.0
      %3929 = vmatprep.subr.mxu0 0.0
      %3930 = vmatpush2.msra.mxu0 0.0
      %3931 = vmatprep.subr.mxu0 0.0
      %3932 = vmatpush2.msra.mxu0 0.0
      %3933 = vmatprep.subr.mxu0 0.0
      %3934 = vmatpush2.msra.mxu0 0.0
      %3935 = vmatprep.mubr.f32.mxu0 0.0
      %3936 = vmatmul.mubr.f32.gmra.mxu0 %v3789
      %v3937 = vpop.f32.mrf.mxu0
      %v3938 = vadd.f32 0.0, %v3937
      %v3939 = vpop.f32.mrf.mxu0
      %v3940 = vadd.f32 0.0, %v3939
      %3941 = vdwg.mxu0
      %v3942 = vxor.u32 %v3867, 2147483648
      %v3943 = vxor.u32 %v3869, 2147483648
      %v3944 = vxor.u32 %v3938, 2147483648
      %v3945 = vxor.u32 %v3940, 2147483648
      %v3946 = vmul.f32 %v3942, 1.442695
      %v3947 = vpow.pop %v3946
      %v3948 = vmul.f32 %v3943, 1.442695
      %v3949 = vpow.pop %v3948
      %v3950 = vmul.f32 %v3944, 1.442695
      %v3951 = vpow.pop %v3950
      %v3952 = vmul.f32 %v3945, 1.442695
      %v3953 = vpow.pop %v3952
      %v3954 = vadd.f32 %v3947, 1.0
      %v3955 = vadd.f32 %v3949, 1.0
      %v3956 = vadd.f32 %v3951, 1.0
      %v3957 = vadd.f32 %v3953, 1.0
      %v3958 = vrcp.pop %v3954
      %v3959 = vmul.f32 1.0, %v3958
      %v3960 = vrcp.pop %v3955
      %v3961 = vmul.f32 1.0, %v3960
      %v3962 = vrcp.pop %v3956
      %v3963 = vmul.f32 1.0, %v3962
      %v3964 = vrcp.pop %v3957
      %v3965 = vmul.f32 1.0, %v3964
      %v3966 = vlaneseq
      %v3967 = vshrl.u32 %v3966, 7
      %v3968 = vadd.s32 %v3967, 8
      %v3969 = vadd.s32 %v3967, 16
      %v3970 = vadd.s32 %v3967, 24
      %vm3971 = vcmp.lt.s32.totalorder %v3967, 16
      %vm3972 = vcmp.lt.s32.totalorder %v3968, 16
      %vm3973 = vcmp.lt.s32.totalorder %v3969, 16
      %vm3974 = vcmp.lt.s32.totalorder %v3970, 16
      %v3977 = vcombine.low %v3959, %v3961
      %v3979 = vunpack.c.l.s4 1966171168
      %v3980 = vunpack.c.0.s8 %v3979
      %v3981 = vlaneseq
      %v3982 = vshrl.u32 %v3981, 7
      %v3983 = vsub.s32 %v3980, %v3982
      %v3984 = vrot.slane %v3977, %v3983
      %v3985 = vcombine.high %v3984, %v3984
      %v3987 = vunpack.c.l.s4 1966171168
      %v3988 = vunpack.c.0.s8 %v3987
      %v3989 = vlaneseq
      %v3990 = vshrl.u32 %v3989, 7
      %v3991 = vsub.s32 %v3988, %v3990
      %v3992 = vrot.slane %v3984, %v3991
      %v3994 = vunpack.c.l.s4 1966171168
      %v3995 = vunpack.c.0.s8 %v3994
      %v3996 = vlaneseq
      %v3997 = vshrl.u32 %v3996, 7
      %v3998 = vsub.s32 %v3995, %v3997
      %v3999 = vrot.slane %v3985, %v3998
      %v4000 = vcombine.high %v3992, %v3992
      %v4001 = vcombine.high %v3999, %v3999
      %v4004 = vcombine.low %v3963, %v3965
      %v4006 = vunpack.c.l.s4 1966171168
      %v4007 = vunpack.c.0.s8 %v4006
      %v4008 = vlaneseq
      %v4009 = vshrl.u32 %v4008, 7
      %v4010 = vsub.s32 %v4007, %v4009
      %v4011 = vrot.slane %v4004, %v4010
      %v4012 = vcombine.high %v4011, %v4011
      %v4014 = vunpack.c.l.s4 1966171168
      %v4015 = vunpack.c.0.s8 %v4014
      %v4016 = vlaneseq
      %v4017 = vshrl.u32 %v4016, 7
      %v4018 = vsub.s32 %v4015, %v4017
      %v4019 = vrot.slane %v4011, %v4018
      %v4021 = vunpack.c.l.s4 1966171168
      %v4022 = vunpack.c.0.s8 %v4021
      %v4023 = vlaneseq
      %v4024 = vshrl.u32 %v4023, 7
      %v4025 = vsub.s32 %v4022, %v4024
      %v4026 = vrot.slane %v4012, %v4025
      %v4027 = vcombine.high %v4019, %v4019
      %v4028 = vcombine.high %v4026, %v4026
      %v4029 = vsel %vm3971, 1, 0
      %v4030 = vsel %vm3972, 1, 0
      %v4031 = vsel %vm3973, 1, 0
      %v4032 = vsel %vm3974, 1, 0
      %vm4033 = vcmp.eq.s32.totalorder %v4029, 1
      %vm4034 = vcmp.eq.s32.totalorder %v4030, 1
      %vm4035 = vcmp.eq.s32.totalorder %v4031, 1
      %vm4036 = vcmp.eq.s32.totalorder %v4032, 1
      %v4037 = vlaneseq
      %v4038 = vshrl.u32 %v4037, 7
      %v4039 = vsub.s32 0, %v4038
      %v4040 = vrot.slane %v3992, %v4039
      %v4041 = vlaneseq
      %v4042 = vshrl.u32 %v4041, 7
      %v4043 = vsub.s32 1, %v4042
      %v4044 = vrot.slane %v3992, %v4043
      %v4045 = vlaneseq
      %v4046 = vshrl.u32 %v4045, 7
      %v4047 = vsub.s32 0, %v4046
      %v4048 = vrot.slane %v3999, %v4047
      %v4049 = vlaneseq
      %v4050 = vshrl.u32 %v4049, 7
      %v4051 = vsub.s32 1, %v4050
      %v4052 = vrot.slane %v3999, %v4051
      %v4053 = vlaneseq
      %v4054 = vshrl.u32 %v4053, 7
      %v4055 = vsub.s32 0, %v4054
      %v4056 = vrot.slane %v4000, %v4055
      %v4057 = vlaneseq
      %v4058 = vshrl.u32 %v4057, 7
      %v4059 = vsub.s32 1, %v4058
      %v4060 = vrot.slane %v4000, %v4059
      %v4061 = vlaneseq
      %v4062 = vshrl.u32 %v4061, 7
      %v4063 = vsub.s32 0, %v4062
      %v4064 = vrot.slane %v4001, %v4063
      %v4065 = vlaneseq
      %v4066 = vshrl.u32 %v4065, 7
      %v4067 = vsub.s32 1, %v4066
      %v4068 = vrot.slane %v4001, %v4067
      %v4077 = vlaneseq
      %v4078 = vshrl.u32 %v4077, 7
      %v4079 = vsub.s32 0, %v4078
      %v4080 = vrot.slane %v4019, %v4079
      %v4081 = vlaneseq
      %v4082 = vshrl.u32 %v4081, 7
      %v4083 = vsub.s32 1, %v4082
      %v4084 = vrot.slane %v4019, %v4083
      %v4085 = vlaneseq
      %v4086 = vshrl.u32 %v4085, 7
      %v4087 = vsub.s32 0, %v4086
      %v4088 = vrot.slane %v4026, %v4087
      %v4089 = vlaneseq
      %v4090 = vshrl.u32 %v4089, 7
      %v4091 = vsub.s32 1, %v4090
      %v4092 = vrot.slane %v4026, %v4091
      %v4093 = vlaneseq
      %v4094 = vshrl.u32 %v4093, 7
      %v4095 = vsub.s32 0, %v4094
      %v4096 = vrot.slane %v4027, %v4095
      %v4097 = vlaneseq
      %v4098 = vshrl.u32 %v4097, 7
      %v4099 = vsub.s32 1, %v4098
      %v4100 = vrot.slane %v4027, %v4099
      %v4101 = vlaneseq
      %v4102 = vshrl.u32 %v4101, 7
      %v4103 = vsub.s32 0, %v4102
      %v4104 = vrot.slane %v4028, %v4103
      %v4105 = vlaneseq
      %v4106 = vshrl.u32 %v4105, 7
      %v4107 = vsub.s32 1, %v4106
      %v4108 = vrot.slane %v4028, %v4107
      %v4117 = vsel %vm4033, %v4040, %v4080
      %v4118 = vsel %vm4033, %v4044, %v4084
      %v4119 = vsel %vm4034, %v4040, %v4080
      %v4120 = vsel %vm4034, %v4044, %v4084
      %v4121 = vsel %vm4035, %v4040, %v4080
      %v4122 = vsel %vm4035, %v4044, %v4084
      %v4123 = vsel %vm4036, %v4040, %v4080
      %v4124 = vsel %vm4036, %v4044, %v4084
      %v4125 = vsel %vm4033, %v4048, %v4088
      %v4126 = vsel %vm4033, %v4052, %v4092
      %v4127 = vsel %vm4034, %v4048, %v4088
      %v4128 = vsel %vm4034, %v4052, %v4092
      %v4129 = vsel %vm4035, %v4048, %v4088
      %v4130 = vsel %vm4035, %v4052, %v4092
      %v4131 = vsel %vm4036, %v4048, %v4088
      %v4132 = vsel %vm4036, %v4052, %v4092
      %v4133 = vsel %vm4033, %v4056, %v4096
      %v4134 = vsel %vm4033, %v4060, %v4100
      %v4135 = vsel %vm4034, %v4056, %v4096
      %v4136 = vsel %vm4034, %v4060, %v4100
      %v4137 = vsel %vm4035, %v4056, %v4096
      %v4138 = vsel %vm4035, %v4060, %v4100
      %v4139 = vsel %vm4036, %v4056, %v4096
      %v4140 = vsel %vm4036, %v4060, %v4100
      %v4141 = vsel %vm4033, %v4064, %v4104
      %v4142 = vsel %vm4033, %v4068, %v4108
      %v4143 = vsel %vm4034, %v4064, %v4104
      %v4144 = vsel %vm4034, %v4068, %v4108
      %v4145 = vsel %vm4035, %v4064, %v4104
      %v4146 = vsel %vm4035, %v4068, %v4108
      %v4147 = vsel %vm4036, %v4064, %v4104
      %v4148 = vsel %vm4036, %v4068, %v4108
      %v4149 = vmul.f32 %v3400, %v4117
      %v4150 = vmul.f32 %v3401, %v4118
      %v4151 = vmul.f32 %v3402, %v4119
      %v4152 = vmul.f32 %v3403, %v4120
      %v4153 = vmul.f32 %v3404, %v4121
      %v4154 = vmul.f32 %v3405, %v4122
      %v4155 = vmul.f32 %v3406, %v4123
      %v4156 = vmul.f32 %v3407, %v4124
      %v4157 = vmul.f32 %v3408, %v4125
      %v4158 = vmul.f32 %v3409, %v4126
      %v4159 = vmul.f32 %v3410, %v4127
      %v4160 = vmul.f32 %v3411, %v4128
      %v4161 = vmul.f32 %v3412, %v4129
      %v4162 = vmul.f32 %v3413, %v4130
      %v4163 = vmul.f32 %v3414, %v4131
      %v4164 = vmul.f32 %v3415, %v4132
      %v4165 = vmul.f32 %v3416, %v4133
      %v4166 = vmul.f32 %v3417, %v4134
      %v4167 = vmul.f32 %v3418, %v4135
      %v4168 = vmul.f32 %v3419, %v4136
      %v4169 = vmul.f32 %v3420, %v4137
      %v4170 = vmul.f32 %v3421, %v4138
      %v4171 = vmul.f32 %v3422, %v4139
      %v4172 = vmul.f32 %v3423, %v4140
      %v4173 = vmul.f32 %v3424, %v4141
      %v4174 = vmul.f32 %v3425, %v4142
      %v4175 = vmul.f32 %v3426, %v4143
      %v4176 = vmul.f32 %v3427, %v4144
      %v4177 = vmul.f32 %v3428, %v4145
      %v4178 = vmul.f32 %v3429, %v4146
      %v4179 = vmul.f32 %v3430, %v4147
      %v4180 = vmul.f32 %v3431, %v4148
      %v4181 = vadd.f32 %v4149, %v4151
      %v4182 = vadd.f32 %v4181, %v4153
      %v4183 = vadd.f32 %v4182, %v4155
      %v4184 = vrot.slane %v4183, 4
      %v4185 = vadd.f32 %v4183, %v4184
      %v4186 = vrot.slane %v4185, 2
      %v4187 = vadd.f32 %v4185, %v4186
      %v4188 = vrot.slane %v4187, 1
      %v4189 = vadd.f32 %v4187, %v4188
      %v4190 = vadd.f32 %v4150, %v4152
      %v4191 = vadd.f32 %v4190, %v4154
      %v4192 = vadd.f32 %v4191, %v4156
      %v4193 = vrot.slane %v4192, 4
      %v4194 = vadd.f32 %v4192, %v4193
      %v4195 = vrot.slane %v4194, 2
      %v4196 = vadd.f32 %v4194, %v4195
      %v4197 = vrot.slane %v4196, 1
      %v4198 = vadd.f32 %v4196, %v4197
      %v4199 = vadd.f32 %v4157, %v4159
      %v4200 = vadd.f32 %v4199, %v4161
      %v4201 = vadd.f32 %v4200, %v4163
      %v4202 = vrot.slane %v4201, 4
      %v4203 = vadd.f32 %v4201, %v4202
      %v4204 = vrot.slane %v4203, 2
      %v4205 = vadd.f32 %v4203, %v4204
      %v4206 = vrot.slane %v4205, 1
      %v4207 = vadd.f32 %v4205, %v4206
      %v4208 = vadd.f32 %v4158, %v4160
      %v4209 = vadd.f32 %v4208, %v4162
      %v4210 = vadd.f32 %v4209, %v4164
      %v4211 = vrot.slane %v4210, 4
      %v4212 = vadd.f32 %v4210, %v4211
      %v4213 = vrot.slane %v4212, 2
      %v4214 = vadd.f32 %v4212, %v4213
      %v4215 = vrot.slane %v4214, 1
      %v4216 = vadd.f32 %v4214, %v4215
      %v4217 = vadd.f32 %v4165, %v4167
      %v4218 = vadd.f32 %v4217, %v4169
      %v4219 = vadd.f32 %v4218, %v4171
      %v4220 = vrot.slane %v4219, 4
      %v4221 = vadd.f32 %v4219, %v4220
      %v4222 = vrot.slane %v4221, 2
      %v4223 = vadd.f32 %v4221, %v4222
      %v4224 = vrot.slane %v4223, 1
      %v4225 = vadd.f32 %v4223, %v4224
      %v4226 = vadd.f32 %v4166, %v4168
      %v4227 = vadd.f32 %v4226, %v4170
      %v4228 = vadd.f32 %v4227, %v4172
      %v4229 = vrot.slane %v4228, 4
      %v4230 = vadd.f32 %v4228, %v4229
      %v4231 = vrot.slane %v4230, 2
      %v4232 = vadd.f32 %v4230, %v4231
      %v4233 = vrot.slane %v4232, 1
      %v4234 = vadd.f32 %v4232, %v4233
      %v4235 = vadd.f32 %v4173, %v4175
      %v4236 = vadd.f32 %v4235, %v4177
      %v4237 = vadd.f32 %v4236, %v4179
      %v4238 = vrot.slane %v4237, 4
      %v4239 = vadd.f32 %v4237, %v4238
      %v4240 = vrot.slane %v4239, 2
      %v4241 = vadd.f32 %v4239, %v4240
      %v4242 = vrot.slane %v4241, 1
      %v4243 = vadd.f32 %v4241, %v4242
      %v4244 = vadd.f32 %v4174, %v4176
      %v4245 = vadd.f32 %v4244, %v4178
      %v4246 = vadd.f32 %v4245, %v4180
      %v4247 = vrot.slane %v4246, 4
      %v4248 = vadd.f32 %v4246, %v4247
      %v4249 = vrot.slane %v4248, 2
      %v4250 = vadd.f32 %v4248, %v4249
      %v4251 = vrot.slane %v4250, 1
      %v4252 = vadd.f32 %v4250, %v4251
      %v4253 = vmul.f32 %v4149, %v4149
      %v4254 = vmul.f32 %v4150, %v4150
      %v4255 = vmul.f32 %v4151, %v4151
      %v4256 = vmul.f32 %v4152, %v4152
      %v4257 = vmul.f32 %v4153, %v4153
      %v4258 = vmul.f32 %v4154, %v4154
      %v4259 = vmul.f32 %v4155, %v4155
      %v4260 = vmul.f32 %v4156, %v4156
      %v4261 = vmul.f32 %v4157, %v4157
      %v4262 = vmul.f32 %v4158, %v4158
      %v4263 = vmul.f32 %v4159, %v4159
      %v4264 = vmul.f32 %v4160, %v4160
      %v4265 = vmul.f32 %v4161, %v4161
      %v4266 = vmul.f32 %v4162, %v4162
      %v4267 = vmul.f32 %v4163, %v4163
      %v4268 = vmul.f32 %v4164, %v4164
      %v4269 = vmul.f32 %v4165, %v4165
      %v4270 = vmul.f32 %v4166, %v4166
      %v4271 = vmul.f32 %v4167, %v4167
      %v4272 = vmul.f32 %v4168, %v4168
      %v4273 = vmul.f32 %v4169, %v4169
      %v4274 = vmul.f32 %v4170, %v4170
      %v4275 = vmul.f32 %v4171, %v4171
      %v4276 = vmul.f32 %v4172, %v4172
      %v4277 = vmul.f32 %v4173, %v4173
      %v4278 = vmul.f32 %v4174, %v4174
      %v4279 = vmul.f32 %v4175, %v4175
      %v4280 = vmul.f32 %v4176, %v4176
      %v4281 = vmul.f32 %v4177, %v4177
      %v4282 = vmul.f32 %v4178, %v4178
      %v4283 = vmul.f32 %v4179, %v4179
      %v4284 = vmul.f32 %v4180, %v4180
      %v4285 = vadd.f32 %v4253, %v4255
      %v4286 = vadd.f32 %v4285, %v4257
      %v4287 = vadd.f32 %v4286, %v4259
      %v4288 = vrot.slane %v4287, 4
      %v4289 = vadd.f32 %v4287, %v4288
      %v4290 = vrot.slane %v4289, 2
      %v4291 = vadd.f32 %v4289, %v4290
      %v4292 = vrot.slane %v4291, 1
      %v4293 = vadd.f32 %v4291, %v4292
      %v4294 = vadd.f32 %v4254, %v4256
      %v4295 = vadd.f32 %v4294, %v4258
      %v4296 = vadd.f32 %v4295, %v4260
      %v4297 = vrot.slane %v4296, 4
      %v4298 = vadd.f32 %v4296, %v4297
      %v4299 = vrot.slane %v4298, 2
      %v4300 = vadd.f32 %v4298, %v4299
      %v4301 = vrot.slane %v4300, 1
      %v4302 = vadd.f32 %v4300, %v4301
      %v4303 = vadd.f32 %v4261, %v4263
      %v4304 = vadd.f32 %v4303, %v4265
      %v4305 = vadd.f32 %v4304, %v4267
      %v4306 = vrot.slane %v4305, 4
      %v4307 = vadd.f32 %v4305, %v4306
      %v4308 = vrot.slane %v4307, 2
      %v4309 = vadd.f32 %v4307, %v4308
      %v4310 = vrot.slane %v4309, 1
      %v4311 = vadd.f32 %v4309, %v4310
      %v4312 = vadd.f32 %v4262, %v4264
      %v4313 = vadd.f32 %v4312, %v4266
      %v4314 = vadd.f32 %v4313, %v4268
      %v4315 = vrot.slane %v4314, 4
      %v4316 = vadd.f32 %v4314, %v4315
      %v4317 = vrot.slane %v4316, 2
      %v4318 = vadd.f32 %v4316, %v4317
      %v4319 = vrot.slane %v4318, 1
      %v4320 = vadd.f32 %v4318, %v4319
      %v4321 = vadd.f32 %v4269, %v4271
      %v4322 = vadd.f32 %v4321, %v4273
      %v4323 = vadd.f32 %v4322, %v4275
      %v4324 = vrot.slane %v4323, 4
      %v4325 = vadd.f32 %v4323, %v4324
      %v4326 = vrot.slane %v4325, 2
      %v4327 = vadd.f32 %v4325, %v4326
      %v4328 = vrot.slane %v4327, 1
      %v4329 = vadd.f32 %v4327, %v4328
      %v4330 = vadd.f32 %v4270, %v4272
      %v4331 = vadd.f32 %v4330, %v4274
      %v4332 = vadd.f32 %v4331, %v4276
      %v4333 = vrot.slane %v4332, 4
      %v4334 = vadd.f32 %v4332, %v4333
      %v4335 = vrot.slane %v4334, 2
      %v4336 = vadd.f32 %v4334, %v4335
      %v4337 = vrot.slane %v4336, 1
      %v4338 = vadd.f32 %v4336, %v4337
      %v4339 = vadd.f32 %v4277, %v4279
      %v4340 = vadd.f32 %v4339, %v4281
      %v4341 = vadd.f32 %v4340, %v4283
      %v4342 = vrot.slane %v4341, 4
      %v4343 = vadd.f32 %v4341, %v4342
      %v4344 = vrot.slane %v4343, 2
      %v4345 = vadd.f32 %v4343, %v4344
      %v4346 = vrot.slane %v4345, 1
      %v4347 = vadd.f32 %v4345, %v4346
      %v4348 = vadd.f32 %v4278, %v4280
      %v4349 = vadd.f32 %v4348, %v4282
      %v4350 = vadd.f32 %v4349, %v4284
      %v4351 = vrot.slane %v4350, 4
      %v4352 = vadd.f32 %v4350, %v4351
      %v4353 = vrot.slane %v4352, 2
      %v4354 = vadd.f32 %v4352, %v4353
      %v4355 = vrot.slane %v4354, 1
      %v4356 = vadd.f32 %v4354, %v4355
      %v4365 = vsel %vm1581, %v4207, %v4189
      %v4366 = vsel %vm1583, %v4225, %v4365
      %v4367 = vsel %vm1585, %v4243, %v4366
      %v4368 = vsel %vm1581, %v4216, %v4198
      %v4369 = vsel %vm1583, %v4234, %v4368
      %v4370 = vsel %vm1585, %v4252, %v4369
      %4373 = vmatprep.subr.mxu0 %v484
      %4374 = vmatpush1.msra.mxu0 %v483
      %4375 = vmatprep.subr.mxu0 %v482
      %4376 = vmatpush1.msra.mxu0 %v481
      %4377 = vmatprep.subr.mxu0 %v480
      %4378 = vmatpush1.msra.mxu0 %v479
      %4379 = vmatprep.subr.mxu0 %v478
      %4380 = vmatpush1.msra.mxu0 %v477
      %4381 = vmatprep.subr.mxu0 %v476
      %4382 = vmatpush1.msra.mxu0 %v475
      %4383 = vmatprep.subr.mxu0 %v474
      %4384 = vmatpush1.msra.mxu0 %v473
      %4385 = vmatprep.subr.mxu0 %v472
      %4386 = vmatpush1.msra.mxu0 %v471
      %4387 = vmatprep.subr.mxu0 %v470
      %4388 = vmatpush1.msra.mxu0 %v469
      %4389 = vmatprep.subr.mxu0 %v468
      %4390 = vmatpush1.msra.mxu0 %v467
      %4391 = vmatprep.subr.mxu0 %v466
      %4392 = vmatpush1.msra.mxu0 %v465
      %4393 = vmatprep.subr.mxu0 %v464
      %4394 = vmatpush1.msra.mxu0 %v463
      %4395 = vmatprep.subr.mxu0 %v462
      %4396 = vmatpush1.msra.mxu0 %v461
      %4397 = vmatprep.subr.mxu0 %v460
      %4398 = vmatpush1.msra.mxu0 %v459
      %4399 = vmatprep.subr.mxu0 %v458
      %4400 = vmatpush1.msra.mxu0 %v457
      %4401 = vmatprep.subr.mxu0 %v456
      %4402 = vmatpush1.msra.mxu0 %v455
      %4403 = vmatprep.subr.mxu0 %v454
      %4404 = vmatpush1.msra.mxu0 %v453
      %4405 = vmatprep.subr.mxu0 %v516
      %4406 = vmatpush2.msra.mxu0 %v515
      %4407 = vmatprep.subr.mxu0 %v514
      %4408 = vmatpush2.msra.mxu0 %v513
      %4409 = vmatprep.subr.mxu0 %v512
      %4410 = vmatpush2.msra.mxu0 %v511
      %4411 = vmatprep.subr.mxu0 %v510
      %4412 = vmatpush2.msra.mxu0 %v509
      %4413 = vmatprep.subr.mxu0 %v508
      %4414 = vmatpush2.msra.mxu0 %v507
      %4415 = vmatprep.subr.mxu0 %v506
      %4416 = vmatpush2.msra.mxu0 %v505
      %4417 = vmatprep.subr.mxu0 %v504
      %4418 = vmatpush2.msra.mxu0 %v503
      %4419 = vmatprep.subr.mxu0 %v502
      %4420 = vmatpush2.msra.mxu0 %v501
      %4421 = vmatprep.subr.mxu0 %v500
      %4422 = vmatpush2.msra.mxu0 %v499
      %4423 = vmatprep.subr.mxu0 %v498
      %4424 = vmatpush2.msra.mxu0 %v497
      %4425 = vmatprep.subr.mxu0 %v496
      %4426 = vmatpush2.msra.mxu0 %v495
      %4427 = vmatprep.subr.mxu0 %v494
      %4428 = vmatpush2.msra.mxu0 %v493
      %4429 = vmatprep.subr.mxu0 %v492
      %4430 = vmatpush2.msra.mxu0 %v491
      %4431 = vmatprep.subr.mxu0 %v490
      %4432 = vmatpush2.msra.mxu0 %v489
      %4433 = vmatprep.subr.mxu0 %v488
      %4434 = vmatpush2.msra.mxu0 %v487
      %4435 = vmatprep.subr.mxu0 %v486
      %4436 = vmatpush2.msra.mxu0 %v485
      %4437 = vmatprep.mubr.f32.mxu0 %v4370
      %4438 = vmatmul.mubr.f32.gmra.mxu0 %v4367
      %v4439 = vpop.f32.mrf.mxu0
      %v4440 = vadd.f32 0.0, %v4439
      %v4441 = vpop.f32.mrf.mxu0
      %v4442 = vadd.f32 0.0, %v4441
      %4443 = vdwg.mxu0
      %v4444 = vmul.f32 %v4440, 0.001953125
      %v4445 = vmul.f32 %v4442, 0.001953125
      %v4454 = vsel %vm1581, %v4311, %v4293
      %v4455 = vsel %vm1583, %v4329, %v4454
      %v4456 = vsel %vm1585, %v4347, %v4455
      %v4457 = vsel %vm1581, %v4320, %v4302
      %v4458 = vsel %vm1583, %v4338, %v4457
      %v4459 = vsel %vm1585, %v4356, %v4458
      %4462 = vmatprep.subr.mxu0 %v484
      %4463 = vmatpush1.msra.mxu0 %v483
      %4464 = vmatprep.subr.mxu0 %v482
      %4465 = vmatpush1.msra.mxu0 %v481
      %4466 = vmatprep.subr.mxu0 %v480
      %4467 = vmatpush1.msra.mxu0 %v479
      %4468 = vmatprep.subr.mxu0 %v478
      %4469 = vmatpush1.msra.mxu0 %v477
      %4470 = vmatprep.subr.mxu0 %v476
      %4471 = vmatpush1.msra.mxu0 %v475
      %4472 = vmatprep.subr.mxu0 %v474
      %4473 = vmatpush1.msra.mxu0 %v473
      %4474 = vmatprep.subr.mxu0 %v472
      %4475 = vmatpush1.msra.mxu0 %v471
      %4476 = vmatprep.subr.mxu0 %v470
      %4477 = vmatpush1.msra.mxu0 %v469
      %4478 = vmatprep.subr.mxu0 %v468
      %4479 = vmatpush1.msra.mxu0 %v467
      %4480 = vmatprep.subr.mxu0 %v466
      %4481 = vmatpush1.msra.mxu0 %v465
      %4482 = vmatprep.subr.mxu0 %v464
      %4483 = vmatpush1.msra.mxu0 %v463
      %4484 = vmatprep.subr.mxu0 %v462
      %4485 = vmatpush1.msra.mxu0 %v461
      %4486 = vmatprep.subr.mxu0 %v460
      %4487 = vmatpush1.msra.mxu0 %v459
      %4488 = vmatprep.subr.mxu0 %v458
      %4489 = vmatpush1.msra.mxu0 %v457
      %4490 = vmatprep.subr.mxu0 %v456
      %4491 = vmatpush1.msra.mxu0 %v455
      %4492 = vmatprep.subr.mxu0 %v454
      %4493 = vmatpush1.msra.mxu0 %v453
      %4494 = vmatprep.subr.mxu0 %v516
      %4495 = vmatpush2.msra.mxu0 %v515
      %4496 = vmatprep.subr.mxu0 %v514
      %4497 = vmatpush2.msra.mxu0 %v513
      %4498 = vmatprep.subr.mxu0 %v512
      %4499 = vmatpush2.msra.mxu0 %v511
      %4500 = vmatprep.subr.mxu0 %v510
      %4501 = vmatpush2.msra.mxu0 %v509
      %4502 = vmatprep.subr.mxu0 %v508
      %4503 = vmatpush2.msra.mxu0 %v507
      %4504 = vmatprep.subr.mxu0 %v506
      %4505 = vmatpush2.msra.mxu0 %v505
      %4506 = vmatprep.subr.mxu0 %v504
      %4507 = vmatpush2.msra.mxu0 %v503
      %4508 = vmatprep.subr.mxu0 %v502
      %4509 = vmatpush2.msra.mxu0 %v501
      %4510 = vmatprep.subr.mxu0 %v500
      %4511 = vmatpush2.msra.mxu0 %v499
      %4512 = vmatprep.subr.mxu0 %v498
      %4513 = vmatpush2.msra.mxu0 %v497
      %4514 = vmatprep.subr.mxu0 %v496
      %4515 = vmatpush2.msra.mxu0 %v495
      %4516 = vmatprep.subr.mxu0 %v494
      %4517 = vmatpush2.msra.mxu0 %v493
      %4518 = vmatprep.subr.mxu0 %v492
      %4519 = vmatpush2.msra.mxu0 %v491
      %4520 = vmatprep.subr.mxu0 %v490
      %4521 = vmatpush2.msra.mxu0 %v489
      %4522 = vmatprep.subr.mxu0 %v488
      %4523 = vmatpush2.msra.mxu0 %v487
      %4524 = vmatprep.subr.mxu0 %v486
      %4525 = vmatpush2.msra.mxu0 %v485
      %4526 = vmatprep.mubr.f32.mxu0 %v4459
      %4527 = vmatmul.mubr.f32.gmra.mxu0 %v4456
      %v4528 = vpop.f32.mrf.mxu0
      %v4529 = vadd.f32 0.0, %v4528
      %v4530 = vpop.f32.mrf.mxu0
      %v4531 = vadd.f32 0.0, %v4530
      %4532 = vdwg.mxu0
      %v4533 = vmul.f32 %v4529, 0.001953125
      %v4534 = vmul.f32 %v4531, 0.001953125
      %v4535 = vmul.f32 %v4444, %v4444
      %v4536 = vmul.f32 %v4445, %v4445
      %v4537 = vsub.f32 %v4533, %v4535
      %v4538 = vsub.f32 %v4534, %v4536
      %v4539 = vadd.f32 %v4537, 1e-05
      %v4540 = vadd.f32 %v4538, 1e-05
      %v4541 = vrsqrt.pop %v4539
      %v4542 = vrsqrt.pop %v4540
      %v4545 = vcombine.low %v4444, %v4445
      %v4547 = vunpack.c.l.s4 1966171168
      %v4548 = vunpack.c.0.s8 %v4547
      %v4549 = vlaneseq
      %v4550 = vshrl.u32 %v4549, 7
      %v4551 = vsub.s32 %v4548, %v4550
      %v4552 = vrot.slane %v4545, %v4551
      %v4553 = vcombine.high %v4552, %v4552
      %v4555 = vunpack.c.l.s4 1966171168
      %v4556 = vunpack.c.0.s8 %v4555
      %v4557 = vlaneseq
      %v4558 = vshrl.u32 %v4557, 7
      %v4559 = vsub.s32 %v4556, %v4558
      %v4560 = vrot.slane %v4552, %v4559
      %v4562 = vunpack.c.l.s4 1966171168
      %v4563 = vunpack.c.0.s8 %v4562
      %v4564 = vlaneseq
      %v4565 = vshrl.u32 %v4564, 7
      %v4566 = vsub.s32 %v4563, %v4565
      %v4567 = vrot.slane %v4553, %v4566
      %v4568 = vcombine.high %v4560, %v4560
      %v4569 = vcombine.high %v4567, %v4567
      %v4570 = vlaneseq
      %v4571 = vshrl.u32 %v4570, 7
      %v4572 = vsub.s32 0, %v4571
      %v4573 = vrot.slane %v4560, %v4572
      %v4574 = vlaneseq
      %v4575 = vshrl.u32 %v4574, 7
      %v4576 = vsub.s32 1, %v4575
      %v4577 = vrot.slane %v4560, %v4576
      %v4578 = vlaneseq
      %v4579 = vshrl.u32 %v4578, 7
      %v4580 = vsub.s32 0, %v4579
      %v4581 = vrot.slane %v4567, %v4580
      %v4582 = vlaneseq
      %v4583 = vshrl.u32 %v4582, 7
      %v4584 = vsub.s32 1, %v4583
      %v4585 = vrot.slane %v4567, %v4584
      %v4586 = vlaneseq
      %v4587 = vshrl.u32 %v4586, 7
      %v4588 = vsub.s32 0, %v4587
      %v4589 = vrot.slane %v4568, %v4588
      %v4590 = vlaneseq
      %v4591 = vshrl.u32 %v4590, 7
      %v4592 = vsub.s32 1, %v4591
      %v4593 = vrot.slane %v4568, %v4592
      %v4594 = vlaneseq
      %v4595 = vshrl.u32 %v4594, 7
      %v4596 = vsub.s32 0, %v4595
      %v4597 = vrot.slane %v4569, %v4596
      %v4598 = vlaneseq
      %v4599 = vshrl.u32 %v4598, 7
      %v4600 = vsub.s32 1, %v4599
      %v4601 = vrot.slane %v4569, %v4600
      %v4610 = vsub.f32 %v4149, %v4573
      %v4611 = vsub.f32 %v4150, %v4577
      %v4612 = vsub.f32 %v4151, %v4573
      %v4613 = vsub.f32 %v4152, %v4577
      %v4614 = vsub.f32 %v4153, %v4573
      %v4615 = vsub.f32 %v4154, %v4577
      %v4616 = vsub.f32 %v4155, %v4573
      %v4617 = vsub.f32 %v4156, %v4577
      %v4618 = vsub.f32 %v4157, %v4581
      %v4619 = vsub.f32 %v4158, %v4585
      %v4620 = vsub.f32 %v4159, %v4581
      %v4621 = vsub.f32 %v4160, %v4585
      %v4622 = vsub.f32 %v4161, %v4581
      %v4623 = vsub.f32 %v4162, %v4585
      %v4624 = vsub.f32 %v4163, %v4581
      %v4625 = vsub.f32 %v4164, %v4585
      %v4626 = vsub.f32 %v4165, %v4589
      %v4627 = vsub.f32 %v4166, %v4593
      %v4628 = vsub.f32 %v4167, %v4589
      %v4629 = vsub.f32 %v4168, %v4593
      %v4630 = vsub.f32 %v4169, %v4589
      %v4631 = vsub.f32 %v4170, %v4593
      %v4632 = vsub.f32 %v4171, %v4589
      %v4633 = vsub.f32 %v4172, %v4593
      %v4634 = vsub.f32 %v4173, %v4597
      %v4635 = vsub.f32 %v4174, %v4601
      %v4636 = vsub.f32 %v4175, %v4597
      %v4637 = vsub.f32 %v4176, %v4601
      %v4638 = vsub.f32 %v4177, %v4597
      %v4639 = vsub.f32 %v4178, %v4601
      %v4640 = vsub.f32 %v4179, %v4597
      %v4641 = vsub.f32 %v4180, %v4601
      %v4644 = vcombine.low %v4541, %v4542
      %v4646 = vunpack.c.l.s4 1966171168
      %v4647 = vunpack.c.0.s8 %v4646
      %v4648 = vlaneseq
      %v4649 = vshrl.u32 %v4648, 7
      %v4650 = vsub.s32 %v4647, %v4649
      %v4651 = vrot.slane %v4644, %v4650
      %v4652 = vcombine.high %v4651, %v4651
      %v4654 = vunpack.c.l.s4 1966171168
      %v4655 = vunpack.c.0.s8 %v4654
      %v4656 = vlaneseq
      %v4657 = vshrl.u32 %v4656, 7
      %v4658 = vsub.s32 %v4655, %v4657
      %v4659 = vrot.slane %v4651, %v4658
      %v4661 = vunpack.c.l.s4 1966171168
      %v4662 = vunpack.c.0.s8 %v4661
      %v4663 = vlaneseq
      %v4664 = vshrl.u32 %v4663, 7
      %v4665 = vsub.s32 %v4662, %v4664
      %v4666 = vrot.slane %v4652, %v4665
      %v4667 = vcombine.high %v4659, %v4659
      %v4668 = vcombine.high %v4666, %v4666
      %v4669 = vlaneseq
      %v4670 = vshrl.u32 %v4669, 7
      %v4671 = vsub.s32 0, %v4670
      %v4672 = vrot.slane %v4659, %v4671
      %v4673 = vlaneseq
      %v4674 = vshrl.u32 %v4673, 7
      %v4675 = vsub.s32 1, %v4674
      %v4676 = vrot.slane %v4659, %v4675
      %v4677 = vlaneseq
      %v4678 = vshrl.u32 %v4677, 7
      %v4679 = vsub.s32 0, %v4678
      %v4680 = vrot.slane %v4666, %v4679
      %v4681 = vlaneseq
      %v4682 = vshrl.u32 %v4681, 7
      %v4683 = vsub.s32 1, %v4682
      %v4684 = vrot.slane %v4666, %v4683
      %v4685 = vlaneseq
      %v4686 = vshrl.u32 %v4685, 7
      %v4687 = vsub.s32 0, %v4686
      %v4688 = vrot.slane %v4667, %v4687
      %v4689 = vlaneseq
      %v4690 = vshrl.u32 %v4689, 7
      %v4691 = vsub.s32 1, %v4690
      %v4692 = vrot.slane %v4667, %v4691
      %v4693 = vlaneseq
      %v4694 = vshrl.u32 %v4693, 7
      %v4695 = vsub.s32 0, %v4694
      %v4696 = vrot.slane %v4668, %v4695
      %v4697 = vlaneseq
      %v4698 = vshrl.u32 %v4697, 7
      %v4699 = vsub.s32 1, %v4698
      %v4700 = vrot.slane %v4668, %v4699
      %v4709 = vmul.f32 %v4610, %v4672
      %v4710 = vmul.f32 %v4611, %v4676
      %v4711 = vmul.f32 %v4612, %v4672
      %v4712 = vmul.f32 %v4613, %v4676
      %v4713 = vmul.f32 %v4614, %v4672
      %v4714 = vmul.f32 %v4615, %v4676
      %v4715 = vmul.f32 %v4616, %v4672
      %v4716 = vmul.f32 %v4617, %v4676
      %v4717 = vmul.f32 %v4618, %v4680
      %v4718 = vmul.f32 %v4619, %v4684
      %v4719 = vmul.f32 %v4620, %v4680
      %v4720 = vmul.f32 %v4621, %v4684
      %v4721 = vmul.f32 %v4622, %v4680
      %v4722 = vmul.f32 %v4623, %v4684
      %v4723 = vmul.f32 %v4624, %v4680
      %v4724 = vmul.f32 %v4625, %v4684
      %v4725 = vmul.f32 %v4626, %v4688
      %v4726 = vmul.f32 %v4627, %v4692
      %v4727 = vmul.f32 %v4628, %v4688
      %v4728 = vmul.f32 %v4629, %v4692
      %v4729 = vmul.f32 %v4630, %v4688
      %v4730 = vmul.f32 %v4631, %v4692
      %v4731 = vmul.f32 %v4632, %v4688
      %v4732 = vmul.f32 %v4633, %v4692
      %v4733 = vmul.f32 %v4634, %v4696
      %v4734 = vmul.f32 %v4635, %v4700
      %v4735 = vmul.f32 %v4636, %v4696
      %v4736 = vmul.f32 %v4637, %v4700
      %v4737 = vmul.f32 %v4638, %v4696
      %v4738 = vmul.f32 %v4639, %v4700
      %v4739 = vmul.f32 %v4640, %v4696
      %v4740 = vmul.f32 %v4641, %v4700
      %v4741 = vadd.f32 %v4709, %v341
      %v4742 = vadd.f32 %v4710, %v342
      %v4743 = vadd.f32 %v4711, %v343
      %v4744 = vadd.f32 %v4712, %v344
      %v4745 = vadd.f32 %v4713, %v345
      %v4746 = vadd.f32 %v4714, %v346
      %v4747 = vadd.f32 %v4715, %v347
      %v4748 = vadd.f32 %v4716, %v348
      %v4749 = vadd.f32 %v4717, %v349
      %v4750 = vadd.f32 %v4718, %v350
      %v4751 = vadd.f32 %v4719, %v351
      %v4752 = vadd.f32 %v4720, %v352
      %v4753 = vadd.f32 %v4721, %v353
      %v4754 = vadd.f32 %v4722, %v354
      %v4755 = vadd.f32 %v4723, %v355
      %v4756 = vadd.f32 %v4724, %v356
      %v4757 = vadd.f32 %v4725, %v357
      %v4758 = vadd.f32 %v4726, %v358
      %v4759 = vadd.f32 %v4727, %v359
      %v4760 = vadd.f32 %v4728, %v360
      %v4761 = vadd.f32 %v4729, %v361
      %v4762 = vadd.f32 %v4730, %v362
      %v4763 = vadd.f32 %v4731, %v363
      %v4764 = vadd.f32 %v4732, %v364
      %v4765 = vadd.f32 %v4733, %v365
      %v4766 = vadd.f32 %v4734, %v366
      %v4767 = vadd.f32 %v4735, %v367
      %v4768 = vadd.f32 %v4736, %v368
      %v4769 = vadd.f32 %v4737, %v369
      %v4770 = vadd.f32 %v4738, %v370
      %v4771 = vadd.f32 %v4739, %v371
      %v4772 = vadd.f32 %v4740, %v372
      %v4773 = vmax.f32 %v4741, 0.0
      %v4774 = vmax.f32 %v4742, 0.0
      %v4775 = vmax.f32 %v4743, 0.0
      %v4776 = vmax.f32 %v4744, 0.0
      %v4777 = vmax.f32 %v4745, 0.0
      %v4778 = vmax.f32 %v4746, 0.0
      %v4779 = vmax.f32 %v4747, 0.0
      %v4780 = vmax.f32 %v4748, 0.0
      %v4781 = vmax.f32 %v4749, 0.0
      %v4782 = vmax.f32 %v4750, 0.0
      %v4783 = vmax.f32 %v4751, 0.0
      %v4784 = vmax.f32 %v4752, 0.0
      %v4785 = vmax.f32 %v4753, 0.0
      %v4786 = vmax.f32 %v4754, 0.0
      %v4787 = vmax.f32 %v4755, 0.0
      %v4788 = vmax.f32 %v4756, 0.0
      %v4789 = vmax.f32 %v4757, 0.0
      %v4790 = vmax.f32 %v4758, 0.0
      %v4791 = vmax.f32 %v4759, 0.0
      %v4792 = vmax.f32 %v4760, 0.0
      %v4793 = vmax.f32 %v4761, 0.0
      %v4794 = vmax.f32 %v4762, 0.0
      %v4795 = vmax.f32 %v4763, 0.0
      %v4796 = vmax.f32 %v4764, 0.0
      %v4797 = vmax.f32 %v4765, 0.0
      %v4798 = vmax.f32 %v4766, 0.0
      %v4799 = vmax.f32 %v4767, 0.0
      %v4800 = vmax.f32 %v4768, 0.0
      %v4801 = vmax.f32 %v4769, 0.0
      %v4802 = vmax.f32 %v4770, 0.0
      %v4803 = vmax.f32 %v4771, 0.0
      %v4804 = vmax.f32 %v4772, 0.0
      %4805 = vst [vmem:[%s339] sm:$0xff] %v4773
      %4806 = vst [vmem:[%s339 + $0x8] sm:$0xff] %v4774
      %4807 = vst [vmem:[%s339 + $0x10] sm:$0xff] %v4775
      %4808 = vst [vmem:[%s339 + $0x18] sm:$0xff] %v4776
      %4809 = vst [vmem:[%s339 + $0x20] sm:$0xff] %v4777
      %4810 = vst [vmem:[%s339 + $0x28] sm:$0xff] %v4778
      %4811 = vst [vmem:[%s339 + $0x30] sm:$0xff] %v4779
      %4812 = vst [vmem:[%s339 + $0x38] sm:$0xff] %v4780
      %4813 = vst [vmem:[%s339 + $0x40] sm:$0xff] %v4781
      %4814 = vst [vmem:[%s339 + $0x48] sm:$0xff] %v4782
      %4815 = vst [vmem:[%s339 + $0x50] sm:$0xff] %v4783
      %4816 = vst [vmem:[%s339 + $0x58] sm:$0xff] %v4784
      %4817 = vst [vmem:[%s339 + $0x60] sm:$0xff] %v4785
      %4818 = vst [vmem:[%s339 + $0x68] sm:$0xff] %v4786
      %4819 = vst [vmem:[%s339 + $0x70] sm:$0xff] %v4787
      %4820 = vst [vmem:[%s339 + $0x78] sm:$0xff] %v4788
      %4821 = vst [vmem:[%s339 + $0x80] sm:$0xff] %v4789
      %4822 = vst [vmem:[%s339 + $0x88] sm:$0xff] %v4790
      %4823 = vst [vmem:[%s339 + $0x90] sm:$0xff] %v4791
      %4824 = vst [vmem:[%s339 + $0x98] sm:$0xff] %v4792
      %4825 = vst [vmem:[%s339 + $0xa0] sm:$0xff] %v4793
      %4826 = vst [vmem:[%s339 + $0xa8] sm:$0xff] %v4794
      %4827 = vst [vmem:[%s339 + $0xb0] sm:$0xff] %v4795
      %4828 = vst [vmem:[%s339 + $0xb8] sm:$0xff] %v4796
      %4829 = vst [vmem:[%s339 + $0xc0] sm:$0xff] %v4797
      %4830 = vst [vmem:[%s339 + $0xc8] sm:$0xff] %v4798
      %4831 = vst [vmem:[%s339 + $0xd0] sm:$0xff] %v4799
      %4832 = vst [vmem:[%s339 + $0xd8] sm:$0xff] %v4800
      %4833 = vst [vmem:[%s339 + $0xe0] sm:$0xff] %v4801
      %4834 = vst [vmem:[%s339 + $0xe8] sm:$0xff] %v4802
      %4835 = vst [vmem:[%s339 + $0xf0] sm:$0xff] %v4803
      %4836 = vst [vmem:[%s339 + $0xf8] sm:$0xff] %v4804
      %s4837 = smul.u32 4, %s20
      %p4838 = scmp.lt.s32.totalorder %s4837, 7
      %s4839 = scalar_select %p4838, %s4837, 7
      %s4840 = smul.addr %s4839, 8
      %s4841 = smul.addr %s4840, 8
      %s4842 = scalar_lea.vmem %s9, %s4841
      // Predicated region
      $region57: #{se_basic_block.1} parent=55 // pred_check
        %p4843 = pneg %p232
      $region58: #{se_basic_block.1} parent=55 // pred_check_branch
        %4845 = sbr.rel (%p4843) target = $region60
      $region59: #{se_basic_block.1} parent=55 // pred_region
        %s4846 = smul.u32 4, %s20
      $region60: #{se_basic_block.1} parent=55 // pred_fallthru
        _
    $region56: #{se_basic_block.1} parent=5 // pred_fallthru
      _
    %p4847 = scmp.le.s32.totalorder 2, %s15
    // Predicated region
    $region61: #{se_basic_block.1} parent=5 // pred_check
      %p4848 = pneg %p4847
    $region62: #{se_basic_block.1} parent=5 // pred_check_branch
      %4850 = sbr.rel (%p4848) target = $region64
    $region63: #{se_basic_block.1} parent=5 // pred_region
      %s4851 = ssub.s32 %s15, 2
      // Predicated region
      $region65: #{se_basic_block.1} parent=63 // pred_check
        %p4852 = pneg %p238
      $region66: #{se_basic_block.1} parent=63 // pred_check_branch
        %4854 = sbr.rel (%p4852) target = $region68
      $region67: #{se_basic_block.1} parent=63 // pred_region
        %s4855 = smul.u32 4, %s21
        %p4856 = scmp.lt.s32.totalorder %s4855, 7
        %s4857 = scalar_select %p4856, %s4855, 7
        %s4858 = smul.addr %s4857, 8
        %s4859 = smul.addr %s4858, 8
        %s4860 = scalar_lea.vmem %s9, %s4859
      $region68: #{se_basic_block.1} parent=63 // pred_fallthru
        _
    $region64: #{se_basic_block.1} parent=5 // pred_fallthru
      _
  $region6: #{se_basic_block.1} parent=0 // loop_footer
    %s19 = sadd.s32 1, %s15
  $region7: #{se_basic_block.1} parent=0 // loop_footer_branch
    %14 = sbr.rel target = $region3
  $region8: #{se_basic_block.1} parent=0 // loop_exit
    _

</llo_original>
